<compile_context>
chip_gen: v5e
topology: v5e:2x2
jax: 0.10.0
libtpu: 0.0.40
codegen_flags: <defaults>
</compile_context>

<pallas_src>
import jax
import jax.numpy as jnp
from jax.experimental import pallas as pl
from jax.experimental.pallas import tpu as pltpu

KSIZE = 7
PAD = (KSIZE - 1) // 2   # 3
_MAX_UNROLL_C = 64       # channels handled by the fully-unrolled, batch-vectorized path


def spatial_gate_kernel(w_ref, shift_ref, x_ref, out_ref, scale_ref, pad_ref):
    """One (Nb, C, H, W) block per grid step.

    w_ref    : SMEM (98,) f32  -- conv weights, BN scale folded in; mean taps also * 1/C
                                  layout: [49 max-plane taps | 49 sum-plane taps]
    shift_ref: SMEM (1,)  f32  -- folded BN shift
    x_ref    : VMEM (Nb, C, H, W)       -- unpadded input block
    out_ref  : VMEM (Nb, C, H, W)
    scale_ref: VMEM (Nb, 1, H, W)
    pad_ref  : VMEM (2, Nb, H+6, W+6) f32 -- scratch: zero-padded [max | sum] pooled planes
    """
    Nb, C, H, W = out_ref.shape
    shift = shift_ref[0]

    # Zero the tiny padded scratch every grid step (scratch persists across steps / cores);
    # the border stays zero, the interior is fully rewritten below.
    pad_ref[...] = jnp.zeros(pad_ref.shape, pad_ref.dtype)

    unrolled = C <= _MAX_UNROLL_C

    # ---- ChannelPool: running max / sum over channels, batch-vectorized ----
    if unrolled:
        x0 = x_ref[:, 0].astype(jnp.float32)          # (Nb, H, W)
        mx, sm = x0, x0
        for c in range(1, C):
            xc = x_ref[:, c].astype(jnp.float32)
            mx = jnp.maximum(mx, xc)
            sm = sm + xc
        pad_ref[0, :, PAD:PAD + H, PAD:PAD + W] = mx
        pad_ref[1, :, PAD:PAD + H, PAD:PAD + W] = sm
    else:
        # Streamed fallback for large C: only two (H, W) planes live at a time.
        for nb in range(Nb):
            x0 = x_ref[nb, 0].astype(jnp.float32)

            def chan_body(c, carry, nb=nb):
                m, s_ = carry
                xc = x_ref[nb, c].astype(jnp.float32)
                return jnp.maximum(m, xc), s_ + xc

            mx, sm = jax.lax.fori_loop(1, C, chan_body, (x0, x0))
            pad_ref[0, nb, PAD:PAD + H, PAD:PAD + W] = mx
            pad_ref[1, nb, PAD:PAD + H, PAD:PAD + W] = sm

    # ---- 7x7 "same" conv: 7 hoisted lane-shifts, sublane-only slices inside,
    #      4 independent accumulators; BN scale already folded into the weights ----
    n_acc = 4
    acc = [jnp.zeros((Nb, H, W), jnp.float32) for _ in range(n_acc)]
    for dx in range(KSIZE):
        cols = pad_ref[:, :, :, dx:dx + W]            # (2, Nb, H+6, W): one lane shift per dx
        a = acc[dx % n_acc]
        for dy in range(KSIZE):
            tap = cols[:, :, dy:dy + H, :]            # (2, Nb, H, W): sublane slice only
            a = a + tap[0] * w_ref[dy * KSIZE + dx]                    # max-plane tap
            a = a + tap[1] * w_ref[KSIZE * KSIZE + dy * KSIZE + dx]    # sum-plane tap
        acc[dx % n_acc] = a
    conv = (acc[0] + acc[1]) + (acc[2] + acc[3])      # (Nb, H, W)

    # ---- folded BN shift + sigmoid ----
    s = jax.nn.sigmoid(conv + shift)                  # (Nb, H, W) f32
    scale_ref[:, 0] = s.astype(scale_ref.dtype)

    # ---- gate the input (re-reads hit VMEM, not HBM) ----
    if unrolled:
        for c in range(C):
            out_ref[:, c] = (x_ref[:, c].astype(jnp.float32) * s).astype(out_ref.dtype)
    else:
        for nb in range(Nb):
            s_nb = s[nb]

            def gate_body(c, _, nb=nb, s_nb=s_nb):
                out_ref[nb, c] = (x_ref[nb, c].astype(jnp.float32) * s_nb).astype(out_ref.dtype)
                return 0

            jax.lax.fori_loop(0, C, gate_body, 0)


@jax.jit
def spatial_gate(x, conv_w, bn_gamma, bn_beta, bn_mean, bn_var, eps=1e-5):
    """x: (N, C, H, W) NCHW. conv_w: (1, 2, 7, 7). BN params: shape (1,). Inference-mode BN."""
    N, C, H, W = x.shape
    Hp, Wp = H + 2 * PAD, W + 2 * PAD

    # Fold BN (inference) and the mean's 1/C into the conv weights:
    #   BN(conv([max, mean])) = conv_{w * bn_scale}([max, sum/C]) + bn_shift
    bn_scale = (bn_gamma / jnp.sqrt(bn_var + eps)).astype(jnp.float32)   # (1,)
    bn_shift = (bn_beta - bn_mean * bn_scale).astype(jnp.float32)        # (1,)
    w = conv_w[0].astype(jnp.float32) * bn_scale.reshape(1, 1, 1)        # (2, 7, 7)
    w = w.at[1].multiply(1.0 / C)                                        # mean -> channel sum
    w_flat = w.reshape(-1)                                               # (98,)

    # Batch elements per grid step: amortize per-step overhead, keep >= 2 grid steps when
    # possible (two TensorCores), stay within a VMEM budget (blocks are double-buffered).
    bytes_per_n = (2 * C * H * W + H * W) * 4          # in + out + scale, f32 upper bound
    budget = 8 * 1024 * 1024
    Nb = 1
    for cand in range(1, min(N, 8) + 1):
        if N % cand != 0:
            continue
        if cand * bytes_per_n * 2 > budget:
            continue
        if cand > 1 and N >= 2 and (N // cand) < 2:
            continue
        Nb = cand
    grid = (N // Nb,)

    out, scale = pl.pallas_call(
        spatial_gate_kernel,
        out_shape=(
            jax.ShapeDtypeStruct((N, C, H, W), x.dtype),
            jax.ShapeDtypeStruct((N, 1, H, W), jnp.float32),
        ),
        grid_spec=pltpu.PrefetchScalarGridSpec(
            num_scalar_prefetch=2,  # w_flat and bn_shift land in SMEM
            grid=grid,
            in_specs=[
                pl.BlockSpec((Nb, C, H, W), lambda n, w_r, s_r: (n, 0, 0, 0)),
            ],
            out_specs=[
                pl.BlockSpec((Nb, C, H, W), lambda n, w_r, s_r: (n, 0, 0, 0)),
                pl.BlockSpec((Nb, 1, H, W), lambda n, w_r, s_r: (n, 0, 0, 0)),
            ],
            scratch_shapes=[pltpu.VMEM((2, Nb, Hp, Wp), jnp.float32)],
        ),
        compiler_params=pltpu.CompilerParams(
            dimension_semantics=("parallel",),
            vmem_limit_bytes=32 * 1024 * 1024,
        ),
    )(w_flat, bn_shift, x)
    return out, scale


def spatial_gate_reference(x, conv_w, bn_gamma, bn_beta, bn_mean, bn_var, eps=1e-5):
    """Pure-JAX reference mirroring the PyTorch forward (BN in inference mode)."""
    mx = jnp.max(x, axis=1, keepdims=True)
    mn = jnp.mean(x, axis=1, keepdims=True)
    pooled = jnp.concatenate([mx, mn], axis=1)                           # (N, 2, H, W)
    conv = jax.lax.conv_general_dilated(
        pooled, conv_w, window_strides=(1, 1), padding=[(PAD, PAD), (PAD, PAD)],
        dimension_numbers=("NCHW", "OIHW", "NCHW"))
    g = bn_gamma.reshape(1, -1, 1, 1)
    b = bn_beta.reshape(1, -1, 1, 1)
    m = bn_mean.reshape(1, -1, 1, 1)
    v = bn_var.reshape(1, -1, 1, 1)
    bn = (conv - m) / jnp.sqrt(v + eps) * g + b
    s = jax.nn.sigmoid(bn)
    return x * s, s


if __name__ == "__main__":
    key = jax.random.PRNGKey(0)
    k_x, k_w, k_g, k_b, k_m, k_v = jax.random.split(key, 6)

    N, C, H, W = 2, 4, 16, 16
    x = jax.random.normal(k_x, (N, C, H, W), dtype=jnp.float32)

    # Deterministic synthetic parameters (shapes per SpatialGate.__init__).
    conv_w = 0.1 * jax.random.normal(k_w, (1, 2, KSIZE, KSIZE), dtype=jnp.float32)
    bn_gamma = 0.5 + jax.random.uniform(k_g, (1,), dtype=jnp.float32)
    bn_beta = 0.1 * jax.random.normal(k_b, (1,), dtype=jnp.float32)
    bn_mean = 0.1 * jax.random.normal(k_m, (1,), dtype=jnp.float32)
    bn_var = 0.5 + jax.random.uniform(k_v, (1,), dtype=jnp.float32)

    out, scale = spatial_gate(x, conv_w, bn_gamma, bn_beta, bn_mean, bn_var)
    jax.block_until_ready((out, scale))

    ref_out, ref_scale = spatial_gate_reference(x, conv_w, bn_gamma, bn_beta, bn_mean, bn_var)
    assert out.shape == (N, C, H, W) and scale.shape == (N, 1, H, W)
    assert jnp.allclose(out, ref_out, atol=5e-5, rtol=5e-5), "gated output mismatch"
    assert jnp.allclose(scale, ref_scale, atol=5e-5, rtol=5e-5), "scale mismatch"

    print("KERNEL_OK")
</pallas_src>

<mosaic_0001>
module attributes {stable_mosaic.version = 11 : i64} {
  func.func @spatial_gate_kernel(%arg0: i32, %arg1: memref<98xf32, #tpu.memory_space<smem>>, %arg2: memref<1xf32, #tpu.memory_space<smem>>, %arg3: memref<1x4x16x16xf32, #tpu.memory_space<vmem>>, %arg4: memref<1x4x16x16xf32, #tpu.memory_space<vmem>>, %arg5: memref<1x1x16x16xf32, #tpu.memory_space<vmem>>, %arg6: memref<2x1x22x22xf32, #tpu.memory_space<vmem>>) attributes {dimension_semantics = [#tpu.dimension_semantics<parallel>], iteration_bounds = array<i64: 2>, scalar_prefetch = 2 : i64, scratch_operands = 1 : i64, tpu.core_type = #tpu.core_type<tc>, window_params = [{transform_indices = @transform_0, window_bounds = array<i64: 1, 4, 16, 16>}, {transform_indices = @transform_1, window_bounds = array<i64: 1, 4, 16, 16>}, {transform_indices = @transform_2, window_bounds = array<i64: 1, 1, 16, 16>}]} {
    %c0 = arith.constant 0 : index
    %0 = memref.load %arg2[%c0] : memref<1xf32, #tpu.memory_space<smem>>
    %cst = arith.constant 0.000000e+00 : f32
    %1 = vector.broadcast %cst : f32 to vector<2x1x22x22xf32>
    %c0_0 = arith.constant 0 : index
    %c0_1 = arith.constant 0 : index
    %c0_2 = arith.constant 0 : index
    %c0_3 = arith.constant 0 : index
    %2 = vector.load %arg6[%c0_0, %c0_1, %c0_2, %c0_3] : memref<2x1x22x22xf32, #tpu.memory_space<vmem>>, vector<2x1x22x22xf32>
    tpu.vector_store %arg6[%c0_0, %c0_1, %c0_2, %c0_3], %1 {strides = array<i32>} : memref<2x1x22x22xf32, #tpu.memory_space<vmem>>, vector<2x1x22x22xf32>,
    %c0_4 = arith.constant 0 : index
    %c0_5 = arith.constant 0 : index
    %c0_6 = arith.constant 0 : index
    %c0_7 = arith.constant 0 : index
    %3 = vector.load %arg3[%c0_4, %c0_5, %c0_6, %c0_7] : memref<1x4x16x16xf32, #tpu.memory_space<vmem>>, vector<1x1x16x16xf32>
    %4 = vector.shape_cast %3 : vector<1x1x16x16xf32> to vector<1x16x16xf32>
    %c0_8 = arith.constant 0 : index
    %c1 = arith.constant 1 : index
    %c0_9 = arith.constant 0 : index
    %c0_10 = arith.constant 0 : index
    %5 = vector.load %arg3[%c0_8, %c1, %c0_9, %c0_10] : memref<1x4x16x16xf32, #tpu.memory_space<vmem>>, vector<1x1x16x16xf32>
    %6 = vector.shape_cast %5 : vector<1x1x16x16xf32> to vector<1x16x16xf32>
    %7 = arith.maximumf %4, %6 : vector<1x16x16xf32>
    %8 = arith.addf %4, %6 : vector<1x16x16xf32>
    %c0_11 = arith.constant 0 : index
    %c2 = arith.constant 2 : index
    %c0_12 = arith.constant 0 : index
    %c0_13 = arith.constant 0 : index
    %9 = vector.load %arg3[%c0_11, %c2, %c0_12, %c0_13] : memref<1x4x16x16xf32, #tpu.memory_space<vmem>>, vector<1x1x16x16xf32>
    %10 = vector.shape_cast %9 : vector<1x1x16x16xf32> to vector<1x16x16xf32>
    %11 = arith.maximumf %7, %10 : vector<1x16x16xf32>
    %12 = arith.addf %8, %10 : vector<1x16x16xf32>
    %c0_14 = arith.constant 0 : index
    %c3 = arith.constant 3 : index
    %c0_15 = arith.constant 0 : index
    %c0_16 = arith.constant 0 : index
    %13 = vector.load %arg3[%c0_14, %c3, %c0_15, %c0_16] : memref<1x4x16x16xf32, #tpu.memory_space<vmem>>, vector<1x1x16x16xf32>
    %14 = vector.shape_cast %13 : vector<1x1x16x16xf32> to vector<1x16x16xf32>
    %15 = arith.maximumf %11, %14 : vector<1x16x16xf32>
    %16 = arith.addf %12, %14 : vector<1x16x16xf32>
    %c0_17 = arith.constant 0 : index
    %c0_18 = arith.constant 0 : index
    %c3_19 = arith.constant 3 : index
    %c3_20 = arith.constant 3 : index
    %17 = vector.load %arg6[%c0_17, %c0_18, %c3_19, %c3_20] : memref<2x1x22x22xf32, #tpu.memory_space<vmem>>, vector<1x1x16x16xf32>
    %18 = vector.shape_cast %17 : vector<1x1x16x16xf32> to vector<1x16x16xf32>
    %19 = vector.shape_cast %15 : vector<1x16x16xf32> to vector<1x1x16x16xf32>
    tpu.vector_store %arg6[%c0_17, %c0_18, %c3_19, %c3_20], %19 {strides = array<i32>} : memref<2x1x22x22xf32, #tpu.memory_space<vmem>>, vector<1x1x16x16xf32>,
    %c1_21 = arith.constant 1 : index
    %c0_22 = arith.constant 0 : index
    %c3_23 = arith.constant 3 : index
    %c3_24 = arith.constant 3 : index
    %20 = vector.load %arg6[%c1_21, %c0_22, %c3_23, %c3_24] : memref<2x1x22x22xf32, #tpu.memory_space<vmem>>, vector<1x1x16x16xf32>
    %21 = vector.shape_cast %20 : vector<1x1x16x16xf32> to vector<1x16x16xf32>
    %22 = vector.shape_cast %16 : vector<1x16x16xf32> to vector<1x1x16x16xf32>
    tpu.vector_store %arg6[%c1_21, %c0_22, %c3_23, %c3_24], %22 {strides = array<i32>} : memref<2x1x22x22xf32, #tpu.memory_space<vmem>>, vector<1x1x16x16xf32>,
    %cst_25 = arith.constant 0.000000e+00 : f32
    %23 = vector.broadcast %cst_25 : f32 to vector<1x16x16xf32>
    %cst_26 = arith.constant 0.000000e+00 : f32
    %24 = vector.broadcast %cst_26 : f32 to vector<1x16x16xf32>
    %cst_27 = arith.constant 0.000000e+00 : f32
    %25 = vector.broadcast %cst_27 : f32 to vector<1x16x16xf32>
    %cst_28 = arith.constant 0.000000e+00 : f32
    %26 = vector.broadcast %cst_28 : f32 to vector<1x16x16xf32>
    %c0_29 = arith.constant 0 : index
    %c0_30 = arith.constant 0 : index
    %c0_31 = arith.constant 0 : index
    %c0_32 = arith.constant 0 : index
    %27 = vector.load %arg6[%c0_29, %c0_30, %c0_31, %c0_32] : memref<2x1x22x22xf32, #tpu.memory_space<vmem>>, vector<2x1x22x16xf32>
    %28 = vector.extract_strided_slice %27 {offsets = [0, 0, 0, 0], sizes = [2, 1, 16, 16], strides = [1, 1, 1, 1]} : vector<2x1x22x16xf32> to vector<2x1x16x16xf32>
    %29 = vector.extract_strided_slice %28 {offsets = [0, 0, 0, 0], sizes = [1, 1, 16, 16], strides = [1, 1, 1, 1]} : vector<2x1x16x16xf32> to vector<1x1x16x16xf32>
    %30 = vector.shape_cast %29 : vector<1x1x16x16xf32> to vector<1x16x16xf32>
    %c0_33 = arith.constant 0 : index
    %31 = memref.load %arg1[%c0_33] : memref<98xf32, #tpu.memory_space<smem>>
    %32 = vector.broadcast %31 : f32 to vector<1x16x16xf32>
    %33 = arith.mulf %30, %32 : vector<1x16x16xf32>
    %34 = arith.addf %23, %33 : vector<1x16x16xf32>
    %35 = vector.extract_strided_slice %28 {offsets = [1, 0, 0, 0], sizes = [1, 1, 16, 16], strides = [1, 1, 1, 1]} : vector<2x1x16x16xf32> to vector<1x1x16x16xf32>
    %36 = vector.shape_cast %35 : vector<1x1x16x16xf32> to vector<1x16x16xf32>
    %c49 = arith.constant 49 : index
    %37 = memref.load %arg1[%c49] : memref<98xf32, #tpu.memory_space<smem>>
    %38 = vector.broadcast %37 : f32 to vector<1x16x16xf32>
    %39 = arith.mulf %36, %38 : vector<1x16x16xf32>
    %40 = arith.addf %34, %39 : vector<1x16x16xf32>
    %41 = vector.extract_strided_slice %27 {offsets = [0, 0, 1, 0], sizes = [2, 1, 16, 16], strides = [1, 1, 1, 1]} : vector<2x1x22x16xf32> to vector<2x1x16x16xf32>
    %42 = vector.extract_strided_slice %41 {offsets = [0, 0, 0, 0], sizes = [1, 1, 16, 16], strides = [1, 1, 1, 1]} : vector<2x1x16x16xf32> to vector<1x1x16x16xf32>
    %43 = vector.shape_cast %42 : vector<1x1x16x16xf32> to vector<1x16x16xf32>
    %c7 = arith.constant 7 : index
    %44 = memref.load %arg1[%c7] : memref<98xf32, #tpu.memory_space<smem>>
    %45 = vector.broadcast %44 : f32 to vector<1x16x16xf32>
    %46 = arith.mulf %43, %45 : vector<1x16x16xf32>
    %47 = arith.addf %40, %46 : vector<1x16x16xf32>
    %48 = vector.extract_strided_slice %41 {offsets = [1, 0, 0, 0], sizes = [1, 1, 16, 16], strides = [1, 1, 1, 1]} : vector<2x1x16x16xf32> to vector<1x1x16x16xf32>
    %49 = vector.shape_cast %48 : vector<1x1x16x16xf32> to vector<1x16x16xf32>
    %c56 = arith.constant 56 : index
    %50 = memref.load %arg1[%c56] : memref<98xf32, #tpu.memory_space<smem>>
    %51 = vector.broadcast %50 : f32 to vector<1x16x16xf32>
    %52 = arith.mulf %49, %51 : vector<1x16x16xf32>
    %53 = arith.addf %47, %52 : vector<1x16x16xf32>
    %54 = vector.extract_strided_slice %27 {offsets = [0, 0, 2, 0], sizes = [2, 1, 16, 16], strides = [1, 1, 1, 1]} : vector<2x1x22x16xf32> to vector<2x1x16x16xf32>
    %55 = vector.extract_strided_slice %54 {offsets = [0, 0, 0, 0], sizes = [1, 1, 16, 16], strides = [1, 1, 1, 1]} : vector<2x1x16x16xf32> to vector<1x1x16x16xf32>
    %56 = vector.shape_cast %55 : vector<1x1x16x16xf32> to vector<1x16x16xf32>
    %c14 = arith.constant 14 : index
    %57 = memref.load %arg1[%c14] : memref<98xf32, #tpu.memory_space<smem>>
    %58 = vector.broadcast %57 : f32 to vector<1x16x16xf32>
    %59 = arith.mulf %56, %58 : vector<1x16x16xf32>
    %60 = arith.addf %53, %59 : vector<1x16x16xf32>
    %61 = vector.extract_strided_slice %54 {offsets = [1, 0, 0, 0], sizes = [1, 1, 16, 16], strides = [1, 1, 1, 1]} : vector<2x1x16x16xf32> to vector<1x1x16x16xf32>
    %62 = vector.shape_cast %61 : vector<1x1x16x16xf32> to vector<1x16x16xf32>
    %c63 = arith.constant 63 : index
    %63 = memref.load %arg1[%c63] : memref<98xf32, #tpu.memory_space<smem>>
    %64 = vector.broadcast %63 : f32 to vector<1x16x16xf32>
    %65 = arith.mulf %62, %64 : vector<1x16x16xf32>
    %66 = arith.addf %60, %65 : vector<1x16x16xf32>
    %67 = vector.extract_strided_slice %27 {offsets = [0, 0, 3, 0], sizes = [2, 1, 16, 16], strides = [1, 1, 1, 1]} : vector<2x1x22x16xf32> to vector<2x1x16x16xf32>
    %68 = vector.extract_strided_slice %67 {offsets = [0, 0, 0, 0], sizes = [1, 1, 16, 16], strides = [1, 1, 1, 1]} : vector<2x1x16x16xf32> to vector<1x1x16x16xf32>
    %69 = vector.shape_cast %68 : vector<1x1x16x16xf32> to vector<1x16x16xf32>
    %c21 = arith.constant 21 : index
    %70 = memref.load %arg1[%c21] : memref<98xf32, #tpu.memory_space<smem>>
    %71 = vector.broadcast %70 : f32 to vector<1x16x16xf32>
    %72 = arith.mulf %69, %71 : vector<1x16x16xf32>
    %73 = arith.addf %66, %72 : vector<1x16x16xf32>
    %74 = vector.extract_strided_slice %67 {offsets = [1, 0, 0, 0], sizes = [1, 1, 16, 16], strides = [1, 1, 1, 1]} : vector<2x1x16x16xf32> to vector<1x1x16x16xf32>
    %75 = vector.shape_cast %74 : vector<1x1x16x16xf32> to vector<1x16x16xf32>
    %c70 = arith.constant 70 : index
    %76 = memref.load %arg1[%c70] : memref<98xf32, #tpu.memory_space<smem>>
    %77 = vector.broadcast %76 : f32 to vector<1x16x16xf32>
    %78 = arith.mulf %75, %77 : vector<1x16x16xf32>
    %79 = arith.addf %73, %78 : vector<1x16x16xf32>
    %80 = vector.extract_strided_slice %27 {offsets = [0, 0, 4, 0], sizes = [2, 1, 16, 16], strides = [1, 1, 1, 1]} : vector<2x1x22x16xf32> to vector<2x1x16x16xf32>
    %81 = vector.extract_strided_slice %80 {offsets = [0, 0, 0, 0], sizes = [1, 1, 16, 16], strides = [1, 1, 1, 1]} : vector<2x1x16x16xf32> to vector<1x1x16x16xf32>
    %82 = vector.shape_cast %81 : vector<1x1x16x16xf32> to vector<1x16x16xf32>
    %c28 = arith.constant 28 : index
    %83 = memref.load %arg1[%c28] : memref<98xf32, #tpu.memory_space<smem>>
    %84 = vector.broadcast %83 : f32 to vector<1x16x16xf32>
    %85 = arith.mulf %82, %84 : vector<1x16x16xf32>
    %86 = arith.addf %79, %85 : vector<1x16x16xf32>
    %87 = vector.extract_strided_slice %80 {offsets = [1, 0, 0, 0], sizes = [1, 1, 16, 16], strides = [1, 1, 1, 1]} : vector<2x1x16x16xf32> to vector<1x1x16x16xf32>
    %88 = vector.shape_cast %87 : vector<1x1x16x16xf32> to vector<1x16x16xf32>
    %c77 = arith.constant 77 : index
    %89 = memref.load %arg1[%c77] : memref<98xf32, #tpu.memory_space<smem>>
    %90 = vector.broadcast %89 : f32 to vector<1x16x16xf32>
    %91 = arith.mulf %88, %90 : vector<1x16x16xf32>
    %92 = arith.addf %86, %91 : vector<1x16x16xf32>
    %93 = vector.extract_strided_slice %27 {offsets = [0, 0, 5, 0], sizes = [2, 1, 16, 16], strides = [1, 1, 1, 1]} : vector<2x1x22x16xf32> to vector<2x1x16x16xf32>
    %94 = vector.extract_strided_slice %93 {offsets = [0, 0, 0, 0], sizes = [1, 1, 16, 16], strides = [1, 1, 1, 1]} : vector<2x1x16x16xf32> to vector<1x1x16x16xf32>
    %95 = vector.shape_cast %94 : vector<1x1x16x16xf32> to vector<1x16x16xf32>
    %c35 = arith.constant 35 : index
    %96 = memref.load %arg1[%c35] : memref<98xf32, #tpu.memory_space<smem>>
    %97 = vector.broadcast %96 : f32 to vector<1x16x16xf32>
    %98 = arith.mulf %95, %97 : vector<1x16x16xf32>
    %99 = arith.addf %92, %98 : vector<1x16x16xf32>
    %100 = vector.extract_strided_slice %93 {offsets = [1, 0, 0, 0], sizes = [1, 1, 16, 16], strides = [1, 1, 1, 1]} : vector<2x1x16x16xf32> to vector<1x1x16x16xf32>
    %101 = vector.shape_cast %100 : vector<1x1x16x16xf32> to vector<1x16x16xf32>
    %c84 = arith.constant 84 : index
    %102 = memref.load %arg1[%c84] : memref<98xf32, #tpu.memory_space<smem>>
    %103 = vector.broadcast %102 : f32 to vector<1x16x16xf32>
    %104 = arith.mulf %101, %103 : vector<1x16x16xf32>
    %105 = arith.addf %99, %104 : vector<1x16x16xf32>
    %106 = vector.extract_strided_slice %27 {offsets = [0, 0, 6, 0], sizes = [2, 1, 16, 16], strides = [1, 1, 1, 1]} : vector<2x1x22x16xf32> to vector<2x1x16x16xf32>
    %107 = vector.extract_strided_slice %106 {offsets = [0, 0, 0, 0], sizes = [1, 1, 16, 16], strides = [1, 1, 1, 1]} : vector<2x1x16x16xf32> to vector<1x1x16x16xf32>
    %108 = vector.shape_cast %107 : vector<1x1x16x16xf32> to vector<1x16x16xf32>
    %c42 = arith.constant 42 : index
    %109 = memref.load %arg1[%c42] : memref<98xf32, #tpu.memory_space<smem>>
    %110 = vector.broadcast %109 : f32 to vector<1x16x16xf32>
    %111 = arith.mulf %108, %110 : vector<1x16x16xf32>
    %112 = arith.addf %105, %111 : vector<1x16x16xf32>
    %113 = vector.extract_strided_slice %106 {offsets = [1, 0, 0, 0], sizes = [1, 1, 16, 16], strides = [1, 1, 1, 1]} : vector<2x1x16x16xf32> to vector<1x1x16x16xf32>
    %114 = vector.shape_cast %113 : vector<1x1x16x16xf32> to vector<1x16x16xf32>
    %c91 = arith.constant 91 : index
    %115 = memref.load %arg1[%c91] : memref<98xf32, #tpu.memory_space<smem>>
    %116 = vector.broadcast %115 : f32 to vector<1x16x16xf32>
    %117 = arith.mulf %114, %116 : vector<1x16x16xf32>
    %118 = arith.addf %112, %117 : vector<1x16x16xf32>
    %c0_34 = arith.constant 0 : index
    %c0_35 = arith.constant 0 : index
    %c0_36 = arith.constant 0 : index
    %c1_37 = arith.constant 1 : index
    %119 = vector.load %arg6[%c0_34, %c0_35, %c0_36, %c1_37] : memref<2x1x22x22xf32, #tpu.memory_space<vmem>>, vector<2x1x22x16xf32>
    %120 = vector.extract_strided_slice %119 {offsets = [0, 0, 0, 0], sizes = [2, 1, 16, 16], strides = [1, 1, 1, 1]} : vector<2x1x22x16xf32> to vector<2x1x16x16xf32>
    %121 = vector.extract_strided_slice %120 {offsets = [0, 0, 0, 0], sizes = [1, 1, 16, 16], strides = [1, 1, 1, 1]} : vector<2x1x16x16xf32> to vector<1x1x16x16xf32>
    %122 = vector.shape_cast %121 : vector<1x1x16x16xf32> to vector<1x16x16xf32>
    %c1_38 = arith.constant 1 : index
    %123 = memref.load %arg1[%c1_38] : memref<98xf32, #tpu.memory_space<smem>>
    %124 = vector.broadcast %123 : f32 to vector<1x16x16xf32>
    %125 = arith.mulf %122, %124 : vector<1x16x16xf32>
    %126 = arith.addf %24, %125 : vector<1x16x16xf32>
    %127 = vector.extract_strided_slice %120 {offsets = [1, 0, 0, 0], sizes = [1, 1, 16, 16], strides = [1, 1, 1, 1]} : vector<2x1x16x16xf32> to vector<1x1x16x16xf32>
    %128 = vector.shape_cast %127 : vector<1x1x16x16xf32> to vector<1x16x16xf32>
    %c50 = arith.constant 50 : index
    %129 = memref.load %arg1[%c50] : memref<98xf32, #tpu.memory_space<smem>>
    %130 = vector.broadcast %129 : f32 to vector<1x16x16xf32>
    %131 = arith.mulf %128, %130 : vector<1x16x16xf32>
    %132 = arith.addf %126, %131 : vector<1x16x16xf32>
    %133 = vector.extract_strided_slice %119 {offsets = [0, 0, 1, 0], sizes = [2, 1, 16, 16], strides = [1, 1, 1, 1]} : vector<2x1x22x16xf32> to vector<2x1x16x16xf32>
    %134 = vector.extract_strided_slice %133 {offsets = [0, 0, 0, 0], sizes = [1, 1, 16, 16], strides = [1, 1, 1, 1]} : vector<2x1x16x16xf32> to vector<1x1x16x16xf32>
    %135 = vector.shape_cast %134 : vector<1x1x16x16xf32> to vector<1x16x16xf32>
    %c8 = arith.constant 8 : index
    %136 = memref.load %arg1[%c8] : memref<98xf32, #tpu.memory_space<smem>>
    %137 = vector.broadcast %136 : f32 to vector<1x16x16xf32>
    %138 = arith.mulf %135, %137 : vector<1x16x16xf32>
    %139 = arith.addf %132, %138 : vector<1x16x16xf32>
    %140 = vector.extract_strided_slice %133 {offsets = [1, 0, 0, 0], sizes = [1, 1, 16, 16], strides = [1, 1, 1, 1]} : vector<2x1x16x16xf32> to vector<1x1x16x16xf32>
    %141 = vector.shape_cast %140 : vector<1x1x16x16xf32> to vector<1x16x16xf32>
    %c57 = arith.constant 57 : index
    %142 = memref.load %arg1[%c57] : memref<98xf32, #tpu.memory_space<smem>>
    %143 = vector.broadcast %142 : f32 to vector<1x16x16xf32>
    %144 = arith.mulf %141, %143 : vector<1x16x16xf32>
    %145 = arith.addf %139, %144 : vector<1x16x16xf32>
    %146 = vector.extract_strided_slice %119 {offsets = [0, 0, 2, 0], sizes = [2, 1, 16, 16], strides = [1, 1, 1, 1]} : vector<2x1x22x16xf32> to vector<2x1x16x16xf32>
    %147 = vector.extract_strided_slice %146 {offsets = [0, 0, 0, 0], sizes = [1, 1, 16, 16], strides = [1, 1, 1, 1]} : vector<2x1x16x16xf32> to vector<1x1x16x16xf32>
    %148 = vector.shape_cast %147 : vector<1x1x16x16xf32> to vector<1x16x16xf32>
    %c15 = arith.constant 15 : index
    %149 = memref.load %arg1[%c15] : memref<98xf32, #tpu.memory_space<smem>>
    %150 = vector.broadcast %149 : f32 to vector<1x16x16xf32>
    %151 = arith.mulf %148, %150 : vector<1x16x16xf32>
    %152 = arith.addf %145, %151 : vector<1x16x16xf32>
    %153 = vector.extract_strided_slice %146 {offsets = [1, 0, 0, 0], sizes = [1, 1, 16, 16], strides = [1, 1, 1, 1]} : vector<2x1x16x16xf32> to vector<1x1x16x16xf32>
    %154 = vector.shape_cast %153 : vector<1x1x16x16xf32> to vector<1x16x16xf32>
    %c64 = arith.constant 64 : index
    %155 = memref.load %arg1[%c64] : memref<98xf32, #tpu.memory_space<smem>>
    %156 = vector.broadcast %155 : f32 to vector<1x16x16xf32>
    %157 = arith.mulf %154, %156 : vector<1x16x16xf32>
    %158 = arith.addf %152, %157 : vector<1x16x16xf32>
    %159 = vector.extract_strided_slice %119 {offsets = [0, 0, 3, 0], sizes = [2, 1, 16, 16], strides = [1, 1, 1, 1]} : vector<2x1x22x16xf32> to vector<2x1x16x16xf32>
    %160 = vector.extract_strided_slice %159 {offsets = [0, 0, 0, 0], sizes = [1, 1, 16, 16], strides = [1, 1, 1, 1]} : vector<2x1x16x16xf32> to vector<1x1x16x16xf32>
    %161 = vector.shape_cast %160 : vector<1x1x16x16xf32> to vector<1x16x16xf32>
    %c22 = arith.constant 22 : index
    %162 = memref.load %arg1[%c22] : memref<98xf32, #tpu.memory_space<smem>>
    %163 = vector.broadcast %162 : f32 to vector<1x16x16xf32>
    %164 = arith.mulf %161, %163 : vector<1x16x16xf32>
    %165 = arith.addf %158, %164 : vector<1x16x16xf32>
    %166 = vector.extract_strided_slice %159 {offsets = [1, 0, 0, 0], sizes = [1, 1, 16, 16], strides = [1, 1, 1, 1]} : vector<2x1x16x16xf32> to vector<1x1x16x16xf32>
    %167 = vector.shape_cast %166 : vector<1x1x16x16xf32> to vector<1x16x16xf32>
    %c71 = arith.constant 71 : index
    %168 = memref.load %arg1[%c71] : memref<98xf32, #tpu.memory_space<smem>>
    %169 = vector.broadcast %168 : f32 to vector<1x16x16xf32>
    %170 = arith.mulf %167, %169 : vector<1x16x16xf32>
    %171 = arith.addf %165, %170 : vector<1x16x16xf32>
    %172 = vector.extract_strided_slice %119 {offsets = [0, 0, 4, 0], sizes = [2, 1, 16, 16], strides = [1, 1, 1, 1]} : vector<2x1x22x16xf32> to vector<2x1x16x16xf32>
    %173 = vector.extract_strided_slice %172 {offsets = [0, 0, 0, 0], sizes = [1, 1, 16, 16], strides = [1, 1, 1, 1]} : vector<2x1x16x16xf32> to vector<1x1x16x16xf32>
    %174 = vector.shape_cast %173 : vector<1x1x16x16xf32> to vector<1x16x16xf32>
    %c29 = arith.constant 29 : index
    %175 = memref.load %arg1[%c29] : memref<98xf32, #tpu.memory_space<smem>>
    %176 = vector.broadcast %175 : f32 to vector<1x16x16xf32>
    %177 = arith.mulf %174, %176 : vector<1x16x16xf32>
    %178 = arith.addf %171, %177 : vector<1x16x16xf32>
    %179 = vector.extract_strided_slice %172 {offsets = [1, 0, 0, 0], sizes = [1, 1, 16, 16], strides = [1, 1, 1, 1]} : vector<2x1x16x16xf32> to vector<1x1x16x16xf32>
    %180 = vector.shape_cast %179 : vector<1x1x16x16xf32> to vector<1x16x16xf32>
    %c78 = arith.constant 78 : index
    %181 = memref.load %arg1[%c78] : memref<98xf32, #tpu.memory_space<smem>>
    %182 = vector.broadcast %181 : f32 to vector<1x16x16xf32>
    %183 = arith.mulf %180, %182 : vector<1x16x16xf32>
    %184 = arith.addf %178, %183 : vector<1x16x16xf32>
    %185 = vector.extract_strided_slice %119 {offsets = [0, 0, 5, 0], sizes = [2, 1, 16, 16], strides = [1, 1, 1, 1]} : vector<2x1x22x16xf32> to vector<2x1x16x16xf32>
    %186 = vector.extract_strided_slice %185 {offsets = [0, 0, 0, 0], sizes = [1, 1, 16, 16], strides = [1, 1, 1, 1]} : vector<2x1x16x16xf32> to vector<1x1x16x16xf32>
    %187 = vector.shape_cast %186 : vector<1x1x16x16xf32> to vector<1x16x16xf32>
    %c36 = arith.constant 36 : index
    %188 = memref.load %arg1[%c36] : memref<98xf32, #tpu.memory_space<smem>>
    %189 = vector.broadcast %188 : f32 to vector<1x16x16xf32>
    %190 = arith.mulf %187, %189 : vector<1x16x16xf32>
    %191 = arith.addf %184, %190 : vector<1x16x16xf32>
    %192 = vector.extract_strided_slice %185 {offsets = [1, 0, 0, 0], sizes = [1, 1, 16, 16], strides = [1, 1, 1, 1]} : vector<2x1x16x16xf32> to vector<1x1x16x16xf32>
    %193 = vector.shape_cast %192 : vector<1x1x16x16xf32> to vector<1x16x16xf32>
    %c85 = arith.constant 85 : index
    %194 = memref.load %arg1[%c85] : memref<98xf32, #tpu.memory_space<smem>>
    %195 = vector.broadcast %194 : f32 to vector<1x16x16xf32>
    %196 = arith.mulf %193, %195 : vector<1x16x16xf32>
    %197 = arith.addf %191, %196 : vector<1x16x16xf32>
    %198 = vector.extract_strided_slice %119 {offsets = [0, 0, 6, 0], sizes = [2, 1, 16, 16], strides = [1, 1, 1, 1]} : vector<2x1x22x16xf32> to vector<2x1x16x16xf32>
    %199 = vector.extract_strided_slice %198 {offsets = [0, 0, 0, 0], sizes = [1, 1, 16, 16], strides = [1, 1, 1, 1]} : vector<2x1x16x16xf32> to vector<1x1x16x16xf32>
    %200 = vector.shape_cast %199 : vector<1x1x16x16xf32> to vector<1x16x16xf32>
    %c43 = arith.constant 43 : index
    %201 = memref.load %arg1[%c43] : memref<98xf32, #tpu.memory_space<smem>>
    %202 = vector.broadcast %201 : f32 to vector<1x16x16xf32>
    %203 = arith.mulf %200, %202 : vector<1x16x16xf32>
    %204 = arith.addf %197, %203 : vector<1x16x16xf32>
    %205 = vector.extract_strided_slice %198 {offsets = [1, 0, 0, 0], sizes = [1, 1, 16, 16], strides = [1, 1, 1, 1]} : vector<2x1x16x16xf32> to vector<1x1x16x16xf32>
    %206 = vector.shape_cast %205 : vector<1x1x16x16xf32> to vector<1x16x16xf32>
    %c92 = arith.constant 92 : index
    %207 = memref.load %arg1[%c92] : memref<98xf32, #tpu.memory_space<smem>>
    %208 = vector.broadcast %207 : f32 to vector<1x16x16xf32>
    %209 = arith.mulf %206, %208 : vector<1x16x16xf32>
    %210 = arith.addf %204, %209 : vector<1x16x16xf32>
    %c0_39 = arith.constant 0 : index
    %c0_40 = arith.constant 0 : index
    %c0_41 = arith.constant 0 : index
    %c2_42 = arith.constant 2 : index
    %211 = vector.load %arg6[%c0_39, %c0_40, %c0_41, %c2_42] : memref<2x1x22x22xf32, #tpu.memory_space<vmem>>, vector<2x1x22x16xf32>
    %212 = vector.extract_strided_slice %211 {offsets = [0, 0, 0, 0], sizes = [2, 1, 16, 16], strides = [1, 1, 1, 1]} : vector<2x1x22x16xf32> to vector<2x1x16x16xf32>
    %213 = vector.extract_strided_slice %212 {offsets = [0, 0, 0, 0], sizes = [1, 1, 16, 16], strides = [1, 1, 1, 1]} : vector<2x1x16x16xf32> to vector<1x1x16x16xf32>
    %214 = vector.shape_cast %213 : vector<1x1x16x16xf32> to vector<1x16x16xf32>
    %c2_43 = arith.constant 2 : index
    %215 = memref.load %arg1[%c2_43] : memref<98xf32, #tpu.memory_space<smem>>
    %216 = vector.broadcast %215 : f32 to vector<1x16x16xf32>
    %217 = arith.mulf %214, %216 : vector<1x16x16xf32>
    %218 = arith.addf %25, %217 : vector<1x16x16xf32>
    %219 = vector.extract_strided_slice %212 {offsets = [1, 0, 0, 0], sizes = [1, 1, 16, 16], strides = [1, 1, 1, 1]} : vector<2x1x16x16xf32> to vector<1x1x16x16xf32>
    %220 = vector.shape_cast %219 : vector<1x1x16x16xf32> to vector<1x16x16xf32>
    %c51 = arith.constant 51 : index
    %221 = memref.load %arg1[%c51] : memref<98xf32, #tpu.memory_space<smem>>
    %222 = vector.broadcast %221 : f32 to vector<1x16x16xf32>
    %223 = arith.mulf %220, %222 : vector<1x16x16xf32>
    %224 = arith.addf %218, %223 : vector<1x16x16xf32>
    %225 = vector.extract_strided_slice %211 {offsets = [0, 0, 1, 0], sizes = [2, 1, 16, 16], strides = [1, 1, 1, 1]} : vector<2x1x22x16xf32> to vector<2x1x16x16xf32>
    %226 = vector.extract_strided_slice %225 {offsets = [0, 0, 0, 0], sizes = [1, 1, 16, 16], strides = [1, 1, 1, 1]} : vector<2x1x16x16xf32> to vector<1x1x16x16xf32>
    %227 = vector.shape_cast %226 : vector<1x1x16x16xf32> to vector<1x16x16xf32>
    %c9 = arith.constant 9 : index
    %228 = memref.load %arg1[%c9] : memref<98xf32, #tpu.memory_space<smem>>
    %229 = vector.broadcast %228 : f32 to vector<1x16x16xf32>
    %230 = arith.mulf %227, %229 : vector<1x16x16xf32>
    %231 = arith.addf %224, %230 : vector<1x16x16xf32>
    %232 = vector.extract_strided_slice %225 {offsets = [1, 0, 0, 0], sizes = [1, 1, 16, 16], strides = [1, 1, 1, 1]} : vector<2x1x16x16xf32> to vector<1x1x16x16xf32>
    %233 = vector.shape_cast %232 : vector<1x1x16x16xf32> to vector<1x16x16xf32>
    %c58 = arith.constant 58 : index
    %234 = memref.load %arg1[%c58] : memref<98xf32, #tpu.memory_space<smem>>
    %235 = vector.broadcast %234 : f32 to vector<1x16x16xf32>
    %236 = arith.mulf %233, %235 : vector<1x16x16xf32>
    %237 = arith.addf %231, %236 : vector<1x16x16xf32>
    %238 = vector.extract_strided_slice %211 {offsets = [0, 0, 2, 0], sizes = [2, 1, 16, 16], strides = [1, 1, 1, 1]} : vector<2x1x22x16xf32> to vector<2x1x16x16xf32>
    %239 = vector.extract_strided_slice %238 {offsets = [0, 0, 0, 0], sizes = [1, 1, 16, 16], strides = [1, 1, 1, 1]} : vector<2x1x16x16xf32> to vector<1x1x16x16xf32>
    %240 = vector.shape_cast %239 : vector<1x1x16x16xf32> to vector<1x16x16xf32>
    %c16 = arith.constant 16 : index
    %241 = memref.load %arg1[%c16] : memref<98xf32, #tpu.memory_space<smem>>
    %242 = vector.broadcast %241 : f32 to vector<1x16x16xf32>
    %243 = arith.mulf %240, %242 : vector<1x16x16xf32>
    %244 = arith.addf %237, %243 : vector<1x16x16xf32>
    %245 = vector.extract_strided_slice %238 {offsets = [1, 0, 0, 0], sizes = [1, 1, 16, 16], strides = [1, 1, 1, 1]} : vector<2x1x16x16xf32> to vector<1x1x16x16xf32>
    %246 = vector.shape_cast %245 : vector<1x1x16x16xf32> to vector<1x16x16xf32>
    %c65 = arith.constant 65 : index
    %247 = memref.load %arg1[%c65] : memref<98xf32, #tpu.memory_space<smem>>
    %248 = vector.broadcast %247 : f32 to vector<1x16x16xf32>
    %249 = arith.mulf %246, %248 : vector<1x16x16xf32>
    %250 = arith.addf %244, %249 : vector<1x16x16xf32>
    %251 = vector.extract_strided_slice %211 {offsets = [0, 0, 3, 0], sizes = [2, 1, 16, 16], strides = [1, 1, 1, 1]} : vector<2x1x22x16xf32> to vector<2x1x16x16xf32>
    %252 = vector.extract_strided_slice %251 {offsets = [0, 0, 0, 0], sizes = [1, 1, 16, 16], strides = [1, 1, 1, 1]} : vector<2x1x16x16xf32> to vector<1x1x16x16xf32>
    %253 = vector.shape_cast %252 : vector<1x1x16x16xf32> to vector<1x16x16xf32>
    %c23 = arith.constant 23 : index
    %254 = memref.load %arg1[%c23] : memref<98xf32, #tpu.memory_space<smem>>
    %255 = vector.broadcast %254 : f32 to vector<1x16x16xf32>
    %256 = arith.mulf %253, %255 : vector<1x16x16xf32>
    %257 = arith.addf %250, %256 : vector<1x16x16xf32>
    %258 = vector.extract_strided_slice %251 {offsets = [1, 0, 0, 0], sizes = [1, 1, 16, 16], strides = [1, 1, 1, 1]} : vector<2x1x16x16xf32> to vector<1x1x16x16xf32>
    %259 = vector.shape_cast %258 : vector<1x1x16x16xf32> to vector<1x16x16xf32>
    %c72 = arith.constant 72 : index
    %260 = memref.load %arg1[%c72] : memref<98xf32, #tpu.memory_space<smem>>
    %261 = vector.broadcast %260 : f32 to vector<1x16x16xf32>
    %262 = arith.mulf %259, %261 : vector<1x16x16xf32>
    %263 = arith.addf %257, %262 : vector<1x16x16xf32>
    %264 = vector.extract_strided_slice %211 {offsets = [0, 0, 4, 0], sizes = [2, 1, 16, 16], strides = [1, 1, 1, 1]} : vector<2x1x22x16xf32> to vector<2x1x16x16xf32>
    %265 = vector.extract_strided_slice %264 {offsets = [0, 0, 0, 0], sizes = [1, 1, 16, 16], strides = [1, 1, 1, 1]} : vector<2x1x16x16xf32> to vector<1x1x16x16xf32>
    %266 = vector.shape_cast %265 : vector<1x1x16x16xf32> to vector<1x16x16xf32>
    %c30 = arith.constant 30 : index
    %267 = memref.load %arg1[%c30] : memref<98xf32, #tpu.memory_space<smem>>
    %268 = vector.broadcast %267 : f32 to vector<1x16x16xf32>
    %269 = arith.mulf %266, %268 : vector<1x16x16xf32>
    %270 = arith.addf %263, %269 : vector<1x16x16xf32>
    %271 = vector.extract_strided_slice %264 {offsets = [1, 0, 0, 0], sizes = [1, 1, 16, 16], strides = [1, 1, 1, 1]} : vector<2x1x16x16xf32> to vector<1x1x16x16xf32>
    %272 = vector.shape_cast %271 : vector<1x1x16x16xf32> to vector<1x16x16xf32>
    %c79 = arith.constant 79 : index
    %273 = memref.load %arg1[%c79] : memref<98xf32, #tpu.memory_space<smem>>
    %274 = vector.broadcast %273 : f32 to vector<1x16x16xf32>
    %275 = arith.mulf %272, %274 : vector<1x16x16xf32>
    %276 = arith.addf %270, %275 : vector<1x16x16xf32>
    %277 = vector.extract_strided_slice %211 {offsets = [0, 0, 5, 0], sizes = [2, 1, 16, 16], strides = [1, 1, 1, 1]} : vector<2x1x22x16xf32> to vector<2x1x16x16xf32>
    %278 = vector.extract_strided_slice %277 {offsets = [0, 0, 0, 0], sizes = [1, 1, 16, 16], strides = [1, 1, 1, 1]} : vector<2x1x16x16xf32> to vector<1x1x16x16xf32>
    %279 = vector.shape_cast %278 : vector<1x1x16x16xf32> to vector<1x16x16xf32>
    %c37 = arith.constant 37 : index
    %280 = memref.load %arg1[%c37] : memref<98xf32, #tpu.memory_space<smem>>
    %281 = vector.broadcast %280 : f32 to vector<1x16x16xf32>
    %282 = arith.mulf %279, %281 : vector<1x16x16xf32>
    %283 = arith.addf %276, %282 : vector<1x16x16xf32>
    %284 = vector.extract_strided_slice %277 {offsets = [1, 0, 0, 0], sizes = [1, 1, 16, 16], strides = [1, 1, 1, 1]} : vector<2x1x16x16xf32> to vector<1x1x16x16xf32>
    %285 = vector.shape_cast %284 : vector<1x1x16x16xf32> to vector<1x16x16xf32>
    %c86 = arith.constant 86 : index
    %286 = memref.load %arg1[%c86] : memref<98xf32, #tpu.memory_space<smem>>
    %287 = vector.broadcast %286 : f32 to vector<1x16x16xf32>
    %288 = arith.mulf %285, %287 : vector<1x16x16xf32>
    %289 = arith.addf %283, %288 : vector<1x16x16xf32>
    %290 = vector.extract_strided_slice %211 {offsets = [0, 0, 6, 0], sizes = [2, 1, 16, 16], strides = [1, 1, 1, 1]} : vector<2x1x22x16xf32> to vector<2x1x16x16xf32>
    %291 = vector.extract_strided_slice %290 {offsets = [0, 0, 0, 0], sizes = [1, 1, 16, 16], strides = [1, 1, 1, 1]} : vector<2x1x16x16xf32> to vector<1x1x16x16xf32>
    %292 = vector.shape_cast %291 : vector<1x1x16x16xf32> to vector<1x16x16xf32>
    %c44 = arith.constant 44 : index
    %293 = memref.load %arg1[%c44] : memref<98xf32, #tpu.memory_space<smem>>
    %294 = vector.broadcast %293 : f32 to vector<1x16x16xf32>
    %295 = arith.mulf %292, %294 : vector<1x16x16xf32>
    %296 = arith.addf %289, %295 : vector<1x16x16xf32>
    %297 = vector.extract_strided_slice %290 {offsets = [1, 0, 0, 0], sizes = [1, 1, 16, 16], strides = [1, 1, 1, 1]} : vector<2x1x16x16xf32> to vector<1x1x16x16xf32>
    %298 = vector.shape_cast %297 : vector<1x1x16x16xf32> to vector<1x16x16xf32>
    %c93 = arith.constant 93 : index
    %299 = memref.load %arg1[%c93] : memref<98xf32, #tpu.memory_space<smem>>
    %300 = vector.broadcast %299 : f32 to vector<1x16x16xf32>
    %301 = arith.mulf %298, %300 : vector<1x16x16xf32>
    %302 = arith.addf %296, %301 : vector<1x16x16xf32>
    %c0_44 = arith.constant 0 : index
    %c0_45 = arith.constant 0 : index
    %c0_46 = arith.constant 0 : index
    %c3_47 = arith.constant 3 : index
    %303 = vector.load %arg6[%c0_44, %c0_45, %c0_46, %c3_47] : memref<2x1x22x22xf32, #tpu.memory_space<vmem>>, vector<2x1x22x16xf32>
    %304 = vector.extract_strided_slice %303 {offsets = [0, 0, 0, 0], sizes = [2, 1, 16, 16], strides = [1, 1, 1, 1]} : vector<2x1x22x16xf32> to vector<2x1x16x16xf32>
    %305 = vector.extract_strided_slice %304 {offsets = [0, 0, 0, 0], sizes = [1, 1, 16, 16], strides = [1, 1, 1, 1]} : vector<2x1x16x16xf32> to vector<1x1x16x16xf32>
    %306 = vector.shape_cast %305 : vector<1x1x16x16xf32> to vector<1x16x16xf32>
    %c3_48 = arith.constant 3 : index
    %307 = memref.load %arg1[%c3_48] : memref<98xf32, #tpu.memory_space<smem>>
    %308 = vector.broadcast %307 : f32 to vector<1x16x16xf32>
    %309 = arith.mulf %306, %308 : vector<1x16x16xf32>
    %310 = arith.addf %26, %309 : vector<1x16x16xf32>
    %311 = vector.extract_strided_slice %304 {offsets = [1, 0, 0, 0], sizes = [1, 1, 16, 16], strides = [1, 1, 1, 1]} : vector<2x1x16x16xf32> to vector<1x1x16x16xf32>
    %312 = vector.shape_cast %311 : vector<1x1x16x16xf32> to vector<1x16x16xf32>
    %c52 = arith.constant 52 : index
    %313 = memref.load %arg1[%c52] : memref<98xf32, #tpu.memory_space<smem>>
    %314 = vector.broadcast %313 : f32 to vector<1x16x16xf32>
    %315 = arith.mulf %312, %314 : vector<1x16x16xf32>
    %316 = arith.addf %310, %315 : vector<1x16x16xf32>
    %317 = vector.extract_strided_slice %303 {offsets = [0, 0, 1, 0], sizes = [2, 1, 16, 16], strides = [1, 1, 1, 1]} : vector<2x1x22x16xf32> to vector<2x1x16x16xf32>
    %318 = vector.extract_strided_slice %317 {offsets = [0, 0, 0, 0], sizes = [1, 1, 16, 16], strides = [1, 1, 1, 1]} : vector<2x1x16x16xf32> to vector<1x1x16x16xf32>
    %319 = vector.shape_cast %318 : vector<1x1x16x16xf32> to vector<1x16x16xf32>
    %c10 = arith.constant 10 : index
    %320 = memref.load %arg1[%c10] : memref<98xf32, #tpu.memory_space<smem>>
    %321 = vector.broadcast %320 : f32 to vector<1x16x16xf32>
    %322 = arith.mulf %319, %321 : vector<1x16x16xf32>
    %323 = arith.addf %316, %322 : vector<1x16x16xf32>
    %324 = vector.extract_strided_slice %317 {offsets = [1, 0, 0, 0], sizes = [1, 1, 16, 16], strides = [1, 1, 1, 1]} : vector<2x1x16x16xf32> to vector<1x1x16x16xf32>
    %325 = vector.shape_cast %324 : vector<1x1x16x16xf32> to vector<1x16x16xf32>
    %c59 = arith.constant 59 : index
    %326 = memref.load %arg1[%c59] : memref<98xf32, #tpu.memory_space<smem>>
    %327 = vector.broadcast %326 : f32 to vector<1x16x16xf32>
    %328 = arith.mulf %325, %327 : vector<1x16x16xf32>
    %329 = arith.addf %323, %328 : vector<1x16x16xf32>
    %330 = vector.extract_strided_slice %303 {offsets = [0, 0, 2, 0], sizes = [2, 1, 16, 16], strides = [1, 1, 1, 1]} : vector<2x1x22x16xf32> to vector<2x1x16x16xf32>
    %331 = vector.extract_strided_slice %330 {offsets = [0, 0, 0, 0], sizes = [1, 1, 16, 16], strides = [1, 1, 1, 1]} : vector<2x1x16x16xf32> to vector<1x1x16x16xf32>
    %332 = vector.shape_cast %331 : vector<1x1x16x16xf32> to vector<1x16x16xf32>
    %c17 = arith.constant 17 : index
    %333 = memref.load %arg1[%c17] : memref<98xf32, #tpu.memory_space<smem>>
    %334 = vector.broadcast %333 : f32 to vector<1x16x16xf32>
    %335 = arith.mulf %332, %334 : vector<1x16x16xf32>
    %336 = arith.addf %329, %335 : vector<1x16x16xf32>
    %337 = vector.extract_strided_slice %330 {offsets = [1, 0, 0, 0], sizes = [1, 1, 16, 16], strides = [1, 1, 1, 1]} : vector<2x1x16x16xf32> to vector<1x1x16x16xf32>
    %338 = vector.shape_cast %337 : vector<1x1x16x16xf32> to vector<1x16x16xf32>
    %c66 = arith.constant 66 : index
    %339 = memref.load %arg1[%c66] : memref<98xf32, #tpu.memory_space<smem>>
    %340 = vector.broadcast %339 : f32 to vector<1x16x16xf32>
    %341 = arith.mulf %338, %340 : vector<1x16x16xf32>
    %342 = arith.addf %336, %341 : vector<1x16x16xf32>
    %343 = vector.extract_strided_slice %303 {offsets = [0, 0, 3, 0], sizes = [2, 1, 16, 16], strides = [1, 1, 1, 1]} : vector<2x1x22x16xf32> to vector<2x1x16x16xf32>
    %344 = vector.extract_strided_slice %343 {offsets = [0, 0, 0, 0], sizes = [1, 1, 16, 16], strides = [1, 1, 1, 1]} : vector<2x1x16x16xf32> to vector<1x1x16x16xf32>
    %345 = vector.shape_cast %344 : vector<1x1x16x16xf32> to vector<1x16x16xf32>
    %c24 = arith.constant 24 : index
    %346 = memref.load %arg1[%c24] : memref<98xf32, #tpu.memory_space<smem>>
    %347 = vector.broadcast %346 : f32 to vector<1x16x16xf32>
    %348 = arith.mulf %345, %347 : vector<1x16x16xf32>
    %349 = arith.addf %342, %348 : vector<1x16x16xf32>
    %350 = vector.extract_strided_slice %343 {offsets = [1, 0, 0, 0], sizes = [1, 1, 16, 16], strides = [1, 1, 1, 1]} : vector<2x1x16x16xf32> to vector<1x1x16x16xf32>
    %351 = vector.shape_cast %350 : vector<1x1x16x16xf32> to vector<1x16x16xf32>
    %c73 = arith.constant 73 : index
    %352 = memref.load %arg1[%c73] : memref<98xf32, #tpu.memory_space<smem>>
    %353 = vector.broadcast %352 : f32 to vector<1x16x16xf32>
    %354 = arith.mulf %351, %353 : vector<1x16x16xf32>
    %355 = arith.addf %349, %354 : vector<1x16x16xf32>
    %356 = vector.extract_strided_slice %303 {offsets = [0, 0, 4, 0], sizes = [2, 1, 16, 16], strides = [1, 1, 1, 1]} : vector<2x1x22x16xf32> to vector<2x1x16x16xf32>
    %357 = vector.extract_strided_slice %356 {offsets = [0, 0, 0, 0], sizes = [1, 1, 16, 16], strides = [1, 1, 1, 1]} : vector<2x1x16x16xf32> to vector<1x1x16x16xf32>
    %358 = vector.shape_cast %357 : vector<1x1x16x16xf32> to vector<1x16x16xf32>
    %c31 = arith.constant 31 : index
    %359 = memref.load %arg1[%c31] : memref<98xf32, #tpu.memory_space<smem>>
    %360 = vector.broadcast %359 : f32 to vector<1x16x16xf32>
    %361 = arith.mulf %358, %360 : vector<1x16x16xf32>
    %362 = arith.addf %355, %361 : vector<1x16x16xf32>
    %363 = vector.extract_strided_slice %356 {offsets = [1, 0, 0, 0], sizes = [1, 1, 16, 16], strides = [1, 1, 1, 1]} : vector<2x1x16x16xf32> to vector<1x1x16x16xf32>
    %364 = vector.shape_cast %363 : vector<1x1x16x16xf32> to vector<1x16x16xf32>
    %c80 = arith.constant 80 : index
    %365 = memref.load %arg1[%c80] : memref<98xf32, #tpu.memory_space<smem>>
    %366 = vector.broadcast %365 : f32 to vector<1x16x16xf32>
    %367 = arith.mulf %364, %366 : vector<1x16x16xf32>
    %368 = arith.addf %362, %367 : vector<1x16x16xf32>
    %369 = vector.extract_strided_slice %303 {offsets = [0, 0, 5, 0], sizes = [2, 1, 16, 16], strides = [1, 1, 1, 1]} : vector<2x1x22x16xf32> to vector<2x1x16x16xf32>
    %370 = vector.extract_strided_slice %369 {offsets = [0, 0, 0, 0], sizes = [1, 1, 16, 16], strides = [1, 1, 1, 1]} : vector<2x1x16x16xf32> to vector<1x1x16x16xf32>
    %371 = vector.shape_cast %370 : vector<1x1x16x16xf32> to vector<1x16x16xf32>
    %c38 = arith.constant 38 : index
    %372 = memref.load %arg1[%c38] : memref<98xf32, #tpu.memory_space<smem>>
    %373 = vector.broadcast %372 : f32 to vector<1x16x16xf32>
    %374 = arith.mulf %371, %373 : vector<1x16x16xf32>
    %375 = arith.addf %368, %374 : vector<1x16x16xf32>
    %376 = vector.extract_strided_slice %369 {offsets = [1, 0, 0, 0], sizes = [1, 1, 16, 16], strides = [1, 1, 1, 1]} : vector<2x1x16x16xf32> to vector<1x1x16x16xf32>
    %377 = vector.shape_cast %376 : vector<1x1x16x16xf32> to vector<1x16x16xf32>
    %c87 = arith.constant 87 : index
    %378 = memref.load %arg1[%c87] : memref<98xf32, #tpu.memory_space<smem>>
    %379 = vector.broadcast %378 : f32 to vector<1x16x16xf32>
    %380 = arith.mulf %377, %379 : vector<1x16x16xf32>
    %381 = arith.addf %375, %380 : vector<1x16x16xf32>
    %382 = vector.extract_strided_slice %303 {offsets = [0, 0, 6, 0], sizes = [2, 1, 16, 16], strides = [1, 1, 1, 1]} : vector<2x1x22x16xf32> to vector<2x1x16x16xf32>
    %383 = vector.extract_strided_slice %382 {offsets = [0, 0, 0, 0], sizes = [1, 1, 16, 16], strides = [1, 1, 1, 1]} : vector<2x1x16x16xf32> to vector<1x1x16x16xf32>
    %384 = vector.shape_cast %383 : vector<1x1x16x16xf32> to vector<1x16x16xf32>
    %c45 = arith.constant 45 : index
    %385 = memref.load %arg1[%c45] : memref<98xf32, #tpu.memory_space<smem>>
    %386 = vector.broadcast %385 : f32 to vector<1x16x16xf32>
    %387 = arith.mulf %384, %386 : vector<1x16x16xf32>
    %388 = arith.addf %381, %387 : vector<1x16x16xf32>
    %389 = vector.extract_strided_slice %382 {offsets = [1, 0, 0, 0], sizes = [1, 1, 16, 16], strides = [1, 1, 1, 1]} : vector<2x1x16x16xf32> to vector<1x1x16x16xf32>
    %390 = vector.shape_cast %389 : vector<1x1x16x16xf32> to vector<1x16x16xf32>
    %c94 = arith.constant 94 : index
    %391 = memref.load %arg1[%c94] : memref<98xf32, #tpu.memory_space<smem>>
    %392 = vector.broadcast %391 : f32 to vector<1x16x16xf32>
    %393 = arith.mulf %390, %392 : vector<1x16x16xf32>
    %394 = arith.addf %388, %393 : vector<1x16x16xf32>
    %c0_49 = arith.constant 0 : index
    %c0_50 = arith.constant 0 : index
    %c0_51 = arith.constant 0 : index
    %c4 = arith.constant 4 : index
    %395 = vector.load %arg6[%c0_49, %c0_50, %c0_51, %c4] : memref<2x1x22x22xf32, #tpu.memory_space<vmem>>, vector<2x1x22x16xf32>
    %396 = vector.extract_strided_slice %395 {offsets = [0, 0, 0, 0], sizes = [2, 1, 16, 16], strides = [1, 1, 1, 1]} : vector<2x1x22x16xf32> to vector<2x1x16x16xf32>
    %397 = vector.extract_strided_slice %396 {offsets = [0, 0, 0, 0], sizes = [1, 1, 16, 16], strides = [1, 1, 1, 1]} : vector<2x1x16x16xf32> to vector<1x1x16x16xf32>
    %398 = vector.shape_cast %397 : vector<1x1x16x16xf32> to vector<1x16x16xf32>
    %c4_52 = arith.constant 4 : index
    %399 = memref.load %arg1[%c4_52] : memref<98xf32, #tpu.memory_space<smem>>
    %400 = vector.broadcast %399 : f32 to vector<1x16x16xf32>
    %401 = arith.mulf %398, %400 : vector<1x16x16xf32>
    %402 = arith.addf %118, %401 : vector<1x16x16xf32>
    %403 = vector.extract_strided_slice %396 {offsets = [1, 0, 0, 0], sizes = [1, 1, 16, 16], strides = [1, 1, 1, 1]} : vector<2x1x16x16xf32> to vector<1x1x16x16xf32>
    %404 = vector.shape_cast %403 : vector<1x1x16x16xf32> to vector<1x16x16xf32>
    %c53 = arith.constant 53 : index
    %405 = memref.load %arg1[%c53] : memref<98xf32, #tpu.memory_space<smem>>
    %406 = vector.broadcast %405 : f32 to vector<1x16x16xf32>
    %407 = arith.mulf %404, %406 : vector<1x16x16xf32>
    %408 = arith.addf %402, %407 : vector<1x16x16xf32>
    %409 = vector.extract_strided_slice %395 {offsets = [0, 0, 1, 0], sizes = [2, 1, 16, 16], strides = [1, 1, 1, 1]} : vector<2x1x22x16xf32> to vector<2x1x16x16xf32>
    %410 = vector.extract_strided_slice %409 {offsets = [0, 0, 0, 0], sizes = [1, 1, 16, 16], strides = [1, 1, 1, 1]} : vector<2x1x16x16xf32> to vector<1x1x16x16xf32>
    %411 = vector.shape_cast %410 : vector<1x1x16x16xf32> to vector<1x16x16xf32>
    %c11 = arith.constant 11 : index
    %412 = memref.load %arg1[%c11] : memref<98xf32, #tpu.memory_space<smem>>
    %413 = vector.broadcast %412 : f32 to vector<1x16x16xf32>
    %414 = arith.mulf %411, %413 : vector<1x16x16xf32>
    %415 = arith.addf %408, %414 : vector<1x16x16xf32>
    %416 = vector.extract_strided_slice %409 {offsets = [1, 0, 0, 0], sizes = [1, 1, 16, 16], strides = [1, 1, 1, 1]} : vector<2x1x16x16xf32> to vector<1x1x16x16xf32>
    %417 = vector.shape_cast %416 : vector<1x1x16x16xf32> to vector<1x16x16xf32>
    %c60 = arith.constant 60 : index
    %418 = memref.load %arg1[%c60] : memref<98xf32, #tpu.memory_space<smem>>
    %419 = vector.broadcast %418 : f32 to vector<1x16x16xf32>
    %420 = arith.mulf %417, %419 : vector<1x16x16xf32>
    %421 = arith.addf %415, %420 : vector<1x16x16xf32>
    %422 = vector.extract_strided_slice %395 {offsets = [0, 0, 2, 0], sizes = [2, 1, 16, 16], strides = [1, 1, 1, 1]} : vector<2x1x22x16xf32> to vector<2x1x16x16xf32>
    %423 = vector.extract_strided_slice %422 {offsets = [0, 0, 0, 0], sizes = [1, 1, 16, 16], strides = [1, 1, 1, 1]} : vector<2x1x16x16xf32> to vector<1x1x16x16xf32>
    %424 = vector.shape_cast %423 : vector<1x1x16x16xf32> to vector<1x16x16xf32>
    %c18 = arith.constant 18 : index
    %425 = memref.load %arg1[%c18] : memref<98xf32, #tpu.memory_space<smem>>
    %426 = vector.broadcast %425 : f32 to vector<1x16x16xf32>
    %427 = arith.mulf %424, %426 : vector<1x16x16xf32>
    %428 = arith.addf %421, %427 : vector<1x16x16xf32>
    %429 = vector.extract_strided_slice %422 {offsets = [1, 0, 0, 0], sizes = [1, 1, 16, 16], strides = [1, 1, 1, 1]} : vector<2x1x16x16xf32> to vector<1x1x16x16xf32>
    %430 = vector.shape_cast %429 : vector<1x1x16x16xf32> to vector<1x16x16xf32>
    %c67 = arith.constant 67 : index
    %431 = memref.load %arg1[%c67] : memref<98xf32, #tpu.memory_space<smem>>
    %432 = vector.broadcast %431 : f32 to vector<1x16x16xf32>
    %433 = arith.mulf %430, %432 : vector<1x16x16xf32>
    %434 = arith.addf %428, %433 : vector<1x16x16xf32>
    %435 = vector.extract_strided_slice %395 {offsets = [0, 0, 3, 0], sizes = [2, 1, 16, 16], strides = [1, 1, 1, 1]} : vector<2x1x22x16xf32> to vector<2x1x16x16xf32>
    %436 = vector.extract_strided_slice %435 {offsets = [0, 0, 0, 0], sizes = [1, 1, 16, 16], strides = [1, 1, 1, 1]} : vector<2x1x16x16xf32> to vector<1x1x16x16xf32>
    %437 = vector.shape_cast %436 : vector<1x1x16x16xf32> to vector<1x16x16xf32>
    %c25 = arith.constant 25 : index
    %438 = memref.load %arg1[%c25] : memref<98xf32, #tpu.memory_space<smem>>
    %439 = vector.broadcast %438 : f32 to vector<1x16x16xf32>
    %440 = arith.mulf %437, %439 : vector<1x16x16xf32>
    %441 = arith.addf %434, %440 : vector<1x16x16xf32>
    %442 = vector.extract_strided_slice %435 {offsets = [1, 0, 0, 0], sizes = [1, 1, 16, 16], strides = [1, 1, 1, 1]} : vector<2x1x16x16xf32> to vector<1x1x16x16xf32>
    %443 = vector.shape_cast %442 : vector<1x1x16x16xf32> to vector<1x16x16xf32>
    %c74 = arith.constant 74 : index
    %444 = memref.load %arg1[%c74] : memref<98xf32, #tpu.memory_space<smem>>
    %445 = vector.broadcast %444 : f32 to vector<1x16x16xf32>
    %446 = arith.mulf %443, %445 : vector<1x16x16xf32>
    %447 = arith.addf %441, %446 : vector<1x16x16xf32>
    %448 = vector.extract_strided_slice %395 {offsets = [0, 0, 4, 0], sizes = [2, 1, 16, 16], strides = [1, 1, 1, 1]} : vector<2x1x22x16xf32> to vector<2x1x16x16xf32>
    %449 = vector.extract_strided_slice %448 {offsets = [0, 0, 0, 0], sizes = [1, 1, 16, 16], strides = [1, 1, 1, 1]} : vector<2x1x16x16xf32> to vector<1x1x16x16xf32>
    %450 = vector.shape_cast %449 : vector<1x1x16x16xf32> to vector<1x16x16xf32>
    %c32 = arith.constant 32 : index
    %451 = memref.load %arg1[%c32] : memref<98xf32, #tpu.memory_space<smem>>
    %452 = vector.broadcast %451 : f32 to vector<1x16x16xf32>
    %453 = arith.mulf %450, %452 : vector<1x16x16xf32>
    %454 = arith.addf %447, %453 : vector<1x16x16xf32>
    %455 = vector.extract_strided_slice %448 {offsets = [1, 0, 0, 0], sizes = [1, 1, 16, 16], strides = [1, 1, 1, 1]} : vector<2x1x16x16xf32> to vector<1x1x16x16xf32>
    %456 = vector.shape_cast %455 : vector<1x1x16x16xf32> to vector<1x16x16xf32>
    %c81 = arith.constant 81 : index
    %457 = memref.load %arg1[%c81] : memref<98xf32, #tpu.memory_space<smem>>
    %458 = vector.broadcast %457 : f32 to vector<1x16x16xf32>
    %459 = arith.mulf %456, %458 : vector<1x16x16xf32>
    %460 = arith.addf %454, %459 : vector<1x16x16xf32>
    %461 = vector.extract_strided_slice %395 {offsets = [0, 0, 5, 0], sizes = [2, 1, 16, 16], strides = [1, 1, 1, 1]} : vector<2x1x22x16xf32> to vector<2x1x16x16xf32>
    %462 = vector.extract_strided_slice %461 {offsets = [0, 0, 0, 0], sizes = [1, 1, 16, 16], strides = [1, 1, 1, 1]} : vector<2x1x16x16xf32> to vector<1x1x16x16xf32>
    %463 = vector.shape_cast %462 : vector<1x1x16x16xf32> to vector<1x16x16xf32>
    %c39 = arith.constant 39 : index
    %464 = memref.load %arg1[%c39] : memref<98xf32, #tpu.memory_space<smem>>
    %465 = vector.broadcast %464 : f32 to vector<1x16x16xf32>
    %466 = arith.mulf %463, %465 : vector<1x16x16xf32>
    %467 = arith.addf %460, %466 : vector<1x16x16xf32>
    %468 = vector.extract_strided_slice %461 {offsets = [1, 0, 0, 0], sizes = [1, 1, 16, 16], strides = [1, 1, 1, 1]} : vector<2x1x16x16xf32> to vector<1x1x16x16xf32>
    %469 = vector.shape_cast %468 : vector<1x1x16x16xf32> to vector<1x16x16xf32>
    %c88 = arith.constant 88 : index
    %470 = memref.load %arg1[%c88] : memref<98xf32, #tpu.memory_space<smem>>
    %471 = vector.broadcast %470 : f32 to vector<1x16x16xf32>
    %472 = arith.mulf %469, %471 : vector<1x16x16xf32>
    %473 = arith.addf %467, %472 : vector<1x16x16xf32>
    %474 = vector.extract_strided_slice %395 {offsets = [0, 0, 6, 0], sizes = [2, 1, 16, 16], strides = [1, 1, 1, 1]} : vector<2x1x22x16xf32> to vector<2x1x16x16xf32>
    %475 = vector.extract_strided_slice %474 {offsets = [0, 0, 0, 0], sizes = [1, 1, 16, 16], strides = [1, 1, 1, 1]} : vector<2x1x16x16xf32> to vector<1x1x16x16xf32>
    %476 = vector.shape_cast %475 : vector<1x1x16x16xf32> to vector<1x16x16xf32>
    %c46 = arith.constant 46 : index
    %477 = memref.load %arg1[%c46] : memref<98xf32, #tpu.memory_space<smem>>
    %478 = vector.broadcast %477 : f32 to vector<1x16x16xf32>
    %479 = arith.mulf %476, %478 : vector<1x16x16xf32>
    %480 = arith.addf %473, %479 : vector<1x16x16xf32>
    %481 = vector.extract_strided_slice %474 {offsets = [1, 0, 0, 0], sizes = [1, 1, 16, 16], strides = [1, 1, 1, 1]} : vector<2x1x16x16xf32> to vector<1x1x16x16xf32>
    %482 = vector.shape_cast %481 : vector<1x1x16x16xf32> to vector<1x16x16xf32>
    %c95 = arith.constant 95 : index
    %483 = memref.load %arg1[%c95] : memref<98xf32, #tpu.memory_space<smem>>
    %484 = vector.broadcast %483 : f32 to vector<1x16x16xf32>
    %485 = arith.mulf %482, %484 : vector<1x16x16xf32>
    %486 = arith.addf %480, %485 : vector<1x16x16xf32>
    %c0_53 = arith.constant 0 : index
    %c0_54 = arith.constant 0 : index
    %c0_55 = arith.constant 0 : index
    %c5 = arith.constant 5 : index
    %487 = vector.load %arg6[%c0_53, %c0_54, %c0_55, %c5] : memref<2x1x22x22xf32, #tpu.memory_space<vmem>>, vector<2x1x22x16xf32>
    %488 = vector.extract_strided_slice %487 {offsets = [0, 0, 0, 0], sizes = [2, 1, 16, 16], strides = [1, 1, 1, 1]} : vector<2x1x22x16xf32> to vector<2x1x16x16xf32>
    %489 = vector.extract_strided_slice %488 {offsets = [0, 0, 0, 0], sizes = [1, 1, 16, 16], strides = [1, 1, 1, 1]} : vector<2x1x16x16xf32> to vector<1x1x16x16xf32>
    %490 = vector.shape_cast %489 : vector<1x1x16x16xf32> to vector<1x16x16xf32>
    %c5_56 = arith.constant 5 : index
    %491 = memref.load %arg1[%c5_56] : memref<98xf32, #tpu.memory_space<smem>>
    %492 = vector.broadcast %491 : f32 to vector<1x16x16xf32>
    %493 = arith.mulf %490, %492 : vector<1x16x16xf32>
    %494 = arith.addf %210, %493 : vector<1x16x16xf32>
    %495 = vector.extract_strided_slice %488 {offsets = [1, 0, 0, 0], sizes = [1, 1, 16, 16], strides = [1, 1, 1, 1]} : vector<2x1x16x16xf32> to vector<1x1x16x16xf32>
    %496 = vector.shape_cast %495 : vector<1x1x16x16xf32> to vector<1x16x16xf32>
    %c54 = arith.constant 54 : index
    %497 = memref.load %arg1[%c54] : memref<98xf32, #tpu.memory_space<smem>>
    %498 = vector.broadcast %497 : f32 to vector<1x16x16xf32>
    %499 = arith.mulf %496, %498 : vector<1x16x16xf32>
    %500 = arith.addf %494, %499 : vector<1x16x16xf32>
    %501 = vector.extract_strided_slice %487 {offsets = [0, 0, 1, 0], sizes = [2, 1, 16, 16], strides = [1, 1, 1, 1]} : vector<2x1x22x16xf32> to vector<2x1x16x16xf32>
    %502 = vector.extract_strided_slice %501 {offsets = [0, 0, 0, 0], sizes = [1, 1, 16, 16], strides = [1, 1, 1, 1]} : vector<2x1x16x16xf32> to vector<1x1x16x16xf32>
    %503 = vector.shape_cast %502 : vector<1x1x16x16xf32> to vector<1x16x16xf32>
    %c12 = arith.constant 12 : index
    %504 = memref.load %arg1[%c12] : memref<98xf32, #tpu.memory_space<smem>>
    %505 = vector.broadcast %504 : f32 to vector<1x16x16xf32>
    %506 = arith.mulf %503, %505 : vector<1x16x16xf32>
    %507 = arith.addf %500, %506 : vector<1x16x16xf32>
    %508 = vector.extract_strided_slice %501 {offsets = [1, 0, 0, 0], sizes = [1, 1, 16, 16], strides = [1, 1, 1, 1]} : vector<2x1x16x16xf32> to vector<1x1x16x16xf32>
    %509 = vector.shape_cast %508 : vector<1x1x16x16xf32> to vector<1x16x16xf32>
    %c61 = arith.constant 61 : index
    %510 = memref.load %arg1[%c61] : memref<98xf32, #tpu.memory_space<smem>>
    %511 = vector.broadcast %510 : f32 to vector<1x16x16xf32>
    %512 = arith.mulf %509, %511 : vector<1x16x16xf32>
    %513 = arith.addf %507, %512 : vector<1x16x16xf32>
    %514 = vector.extract_strided_slice %487 {offsets = [0, 0, 2, 0], sizes = [2, 1, 16, 16], strides = [1, 1, 1, 1]} : vector<2x1x22x16xf32> to vector<2x1x16x16xf32>
    %515 = vector.extract_strided_slice %514 {offsets = [0, 0, 0, 0], sizes = [1, 1, 16, 16], strides = [1, 1, 1, 1]} : vector<2x1x16x16xf32> to vector<1x1x16x16xf32>
    %516 = vector.shape_cast %515 : vector<1x1x16x16xf32> to vector<1x16x16xf32>
    %c19 = arith.constant 19 : index
    %517 = memref.load %arg1[%c19] : memref<98xf32, #tpu.memory_space<smem>>
    %518 = vector.broadcast %517 : f32 to vector<1x16x16xf32>
    %519 = arith.mulf %516, %518 : vector<1x16x16xf32>
    %520 = arith.addf %513, %519 : vector<1x16x16xf32>
    %521 = vector.extract_strided_slice %514 {offsets = [1, 0, 0, 0], sizes = [1, 1, 16, 16], strides = [1, 1, 1, 1]} : vector<2x1x16x16xf32> to vector<1x1x16x16xf32>
    %522 = vector.shape_cast %521 : vector<1x1x16x16xf32> to vector<1x16x16xf32>
    %c68 = arith.constant 68 : index
    %523 = memref.load %arg1[%c68] : memref<98xf32, #tpu.memory_space<smem>>
    %524 = vector.broadcast %523 : f32 to vector<1x16x16xf32>
    %525 = arith.mulf %522, %524 : vector<1x16x16xf32>
    %526 = arith.addf %520, %525 : vector<1x16x16xf32>
    %527 = vector.extract_strided_slice %487 {offsets = [0, 0, 3, 0], sizes = [2, 1, 16, 16], strides = [1, 1, 1, 1]} : vector<2x1x22x16xf32> to vector<2x1x16x16xf32>
    %528 = vector.extract_strided_slice %527 {offsets = [0, 0, 0, 0], sizes = [1, 1, 16, 16], strides = [1, 1, 1, 1]} : vector<2x1x16x16xf32> to vector<1x1x16x16xf32>
    %529 = vector.shape_cast %528 : vector<1x1x16x16xf32> to vector<1x16x16xf32>
    %c26 = arith.constant 26 : index
    %530 = memref.load %arg1[%c26] : memref<98xf32, #tpu.memory_space<smem>>
    %531 = vector.broadcast %530 : f32 to vector<1x16x16xf32>
    %532 = arith.mulf %529, %531 : vector<1x16x16xf32>
    %533 = arith.addf %526, %532 : vector<1x16x16xf32>
    %534 = vector.extract_strided_slice %527 {offsets = [1, 0, 0, 0], sizes = [1, 1, 16, 16], strides = [1, 1, 1, 1]} : vector<2x1x16x16xf32> to vector<1x1x16x16xf32>
    %535 = vector.shape_cast %534 : vector<1x1x16x16xf32> to vector<1x16x16xf32>
    %c75 = arith.constant 75 : index
    %536 = memref.load %arg1[%c75] : memref<98xf32, #tpu.memory_space<smem>>
    %537 = vector.broadcast %536 : f32 to vector<1x16x16xf32>
    %538 = arith.mulf %535, %537 : vector<1x16x16xf32>
    %539 = arith.addf %533, %538 : vector<1x16x16xf32>
    %540 = vector.extract_strided_slice %487 {offsets = [0, 0, 4, 0], sizes = [2, 1, 16, 16], strides = [1, 1, 1, 1]} : vector<2x1x22x16xf32> to vector<2x1x16x16xf32>
    %541 = vector.extract_strided_slice %540 {offsets = [0, 0, 0, 0], sizes = [1, 1, 16, 16], strides = [1, 1, 1, 1]} : vector<2x1x16x16xf32> to vector<1x1x16x16xf32>
    %542 = vector.shape_cast %541 : vector<1x1x16x16xf32> to vector<1x16x16xf32>
    %c33 = arith.constant 33 : index
    %543 = memref.load %arg1[%c33] : memref<98xf32, #tpu.memory_space<smem>>
    %544 = vector.broadcast %543 : f32 to vector<1x16x16xf32>
    %545 = arith.mulf %542, %544 : vector<1x16x16xf32>
    %546 = arith.addf %539, %545 : vector<1x16x16xf32>
    %547 = vector.extract_strided_slice %540 {offsets = [1, 0, 0, 0], sizes = [1, 1, 16, 16], strides = [1, 1, 1, 1]} : vector<2x1x16x16xf32> to vector<1x1x16x16xf32>
    %548 = vector.shape_cast %547 : vector<1x1x16x16xf32> to vector<1x16x16xf32>
    %c82 = arith.constant 82 : index
    %549 = memref.load %arg1[%c82] : memref<98xf32, #tpu.memory_space<smem>>
    %550 = vector.broadcast %549 : f32 to vector<1x16x16xf32>
    %551 = arith.mulf %548, %550 : vector<1x16x16xf32>
    %552 = arith.addf %546, %551 : vector<1x16x16xf32>
    %553 = vector.extract_strided_slice %487 {offsets = [0, 0, 5, 0], sizes = [2, 1, 16, 16], strides = [1, 1, 1, 1]} : vector<2x1x22x16xf32> to vector<2x1x16x16xf32>
    %554 = vector.extract_strided_slice %553 {offsets = [0, 0, 0, 0], sizes = [1, 1, 16, 16], strides = [1, 1, 1, 1]} : vector<2x1x16x16xf32> to vector<1x1x16x16xf32>
    %555 = vector.shape_cast %554 : vector<1x1x16x16xf32> to vector<1x16x16xf32>
    %c40 = arith.constant 40 : index
    %556 = memref.load %arg1[%c40] : memref<98xf32, #tpu.memory_space<smem>>
    %557 = vector.broadcast %556 : f32 to vector<1x16x16xf32>
    %558 = arith.mulf %555, %557 : vector<1x16x16xf32>
    %559 = arith.addf %552, %558 : vector<1x16x16xf32>
    %560 = vector.extract_strided_slice %553 {offsets = [1, 0, 0, 0], sizes = [1, 1, 16, 16], strides = [1, 1, 1, 1]} : vector<2x1x16x16xf32> to vector<1x1x16x16xf32>
    %561 = vector.shape_cast %560 : vector<1x1x16x16xf32> to vector<1x16x16xf32>
    %c89 = arith.constant 89 : index
    %562 = memref.load %arg1[%c89] : memref<98xf32, #tpu.memory_space<smem>>
    %563 = vector.broadcast %562 : f32 to vector<1x16x16xf32>
    %564 = arith.mulf %561, %563 : vector<1x16x16xf32>
    %565 = arith.addf %559, %564 : vector<1x16x16xf32>
    %566 = vector.extract_strided_slice %487 {offsets = [0, 0, 6, 0], sizes = [2, 1, 16, 16], strides = [1, 1, 1, 1]} : vector<2x1x22x16xf32> to vector<2x1x16x16xf32>
    %567 = vector.extract_strided_slice %566 {offsets = [0, 0, 0, 0], sizes = [1, 1, 16, 16], strides = [1, 1, 1, 1]} : vector<2x1x16x16xf32> to vector<1x1x16x16xf32>
    %568 = vector.shape_cast %567 : vector<1x1x16x16xf32> to vector<1x16x16xf32>
    %c47 = arith.constant 47 : index
    %569 = memref.load %arg1[%c47] : memref<98xf32, #tpu.memory_space<smem>>
    %570 = vector.broadcast %569 : f32 to vector<1x16x16xf32>
    %571 = arith.mulf %568, %570 : vector<1x16x16xf32>
    %572 = arith.addf %565, %571 : vector<1x16x16xf32>
    %573 = vector.extract_strided_slice %566 {offsets = [1, 0, 0, 0], sizes = [1, 1, 16, 16], strides = [1, 1, 1, 1]} : vector<2x1x16x16xf32> to vector<1x1x16x16xf32>
    %574 = vector.shape_cast %573 : vector<1x1x16x16xf32> to vector<1x16x16xf32>
    %c96 = arith.constant 96 : index
    %575 = memref.load %arg1[%c96] : memref<98xf32, #tpu.memory_space<smem>>
    %576 = vector.broadcast %575 : f32 to vector<1x16x16xf32>
    %577 = arith.mulf %574, %576 : vector<1x16x16xf32>
    %578 = arith.addf %572, %577 : vector<1x16x16xf32>
    %c0_57 = arith.constant 0 : index
    %c0_58 = arith.constant 0 : index
    %c0_59 = arith.constant 0 : index
    %c6 = arith.constant 6 : index
    %579 = vector.load %arg6[%c0_57, %c0_58, %c0_59, %c6] : memref<2x1x22x22xf32, #tpu.memory_space<vmem>>, vector<2x1x22x16xf32>
    %580 = vector.extract_strided_slice %579 {offsets = [0, 0, 0, 0], sizes = [2, 1, 16, 16], strides = [1, 1, 1, 1]} : vector<2x1x22x16xf32> to vector<2x1x16x16xf32>
    %581 = vector.extract_strided_slice %580 {offsets = [0, 0, 0, 0], sizes = [1, 1, 16, 16], strides = [1, 1, 1, 1]} : vector<2x1x16x16xf32> to vector<1x1x16x16xf32>
    %582 = vector.shape_cast %581 : vector<1x1x16x16xf32> to vector<1x16x16xf32>
    %c6_60 = arith.constant 6 : index
    %583 = memref.load %arg1[%c6_60] : memref<98xf32, #tpu.memory_space<smem>>
    %584 = vector.broadcast %583 : f32 to vector<1x16x16xf32>
    %585 = arith.mulf %582, %584 : vector<1x16x16xf32>
    %586 = arith.addf %302, %585 : vector<1x16x16xf32>
    %587 = vector.extract_strided_slice %580 {offsets = [1, 0, 0, 0], sizes = [1, 1, 16, 16], strides = [1, 1, 1, 1]} : vector<2x1x16x16xf32> to vector<1x1x16x16xf32>
    %588 = vector.shape_cast %587 : vector<1x1x16x16xf32> to vector<1x16x16xf32>
    %c55 = arith.constant 55 : index
    %589 = memref.load %arg1[%c55] : memref<98xf32, #tpu.memory_space<smem>>
    %590 = vector.broadcast %589 : f32 to vector<1x16x16xf32>
    %591 = arith.mulf %588, %590 : vector<1x16x16xf32>
    %592 = arith.addf %586, %591 : vector<1x16x16xf32>
    %593 = vector.extract_strided_slice %579 {offsets = [0, 0, 1, 0], sizes = [2, 1, 16, 16], strides = [1, 1, 1, 1]} : vector<2x1x22x16xf32> to vector<2x1x16x16xf32>
    %594 = vector.extract_strided_slice %593 {offsets = [0, 0, 0, 0], sizes = [1, 1, 16, 16], strides = [1, 1, 1, 1]} : vector<2x1x16x16xf32> to vector<1x1x16x16xf32>
    %595 = vector.shape_cast %594 : vector<1x1x16x16xf32> to vector<1x16x16xf32>
    %c13 = arith.constant 13 : index
    %596 = memref.load %arg1[%c13] : memref<98xf32, #tpu.memory_space<smem>>
    %597 = vector.broadcast %596 : f32 to vector<1x16x16xf32>
    %598 = arith.mulf %595, %597 : vector<1x16x16xf32>
    %599 = arith.addf %592, %598 : vector<1x16x16xf32>
    %600 = vector.extract_strided_slice %593 {offsets = [1, 0, 0, 0], sizes = [1, 1, 16, 16], strides = [1, 1, 1, 1]} : vector<2x1x16x16xf32> to vector<1x1x16x16xf32>
    %601 = vector.shape_cast %600 : vector<1x1x16x16xf32> to vector<1x16x16xf32>
    %c62 = arith.constant 62 : index
    %602 = memref.load %arg1[%c62] : memref<98xf32, #tpu.memory_space<smem>>
    %603 = vector.broadcast %602 : f32 to vector<1x16x16xf32>
    %604 = arith.mulf %601, %603 : vector<1x16x16xf32>
    %605 = arith.addf %599, %604 : vector<1x16x16xf32>
    %606 = vector.extract_strided_slice %579 {offsets = [0, 0, 2, 0], sizes = [2, 1, 16, 16], strides = [1, 1, 1, 1]} : vector<2x1x22x16xf32> to vector<2x1x16x16xf32>
    %607 = vector.extract_strided_slice %606 {offsets = [0, 0, 0, 0], sizes = [1, 1, 16, 16], strides = [1, 1, 1, 1]} : vector<2x1x16x16xf32> to vector<1x1x16x16xf32>
    %608 = vector.shape_cast %607 : vector<1x1x16x16xf32> to vector<1x16x16xf32>
    %c20 = arith.constant 20 : index
    %609 = memref.load %arg1[%c20] : memref<98xf32, #tpu.memory_space<smem>>
    %610 = vector.broadcast %609 : f32 to vector<1x16x16xf32>
    %611 = arith.mulf %608, %610 : vector<1x16x16xf32>
    %612 = arith.addf %605, %611 : vector<1x16x16xf32>
    %613 = vector.extract_strided_slice %606 {offsets = [1, 0, 0, 0], sizes = [1, 1, 16, 16], strides = [1, 1, 1, 1]} : vector<2x1x16x16xf32> to vector<1x1x16x16xf32>
    %614 = vector.shape_cast %613 : vector<1x1x16x16xf32> to vector<1x16x16xf32>
    %c69 = arith.constant 69 : index
    %615 = memref.load %arg1[%c69] : memref<98xf32, #tpu.memory_space<smem>>
    %616 = vector.broadcast %615 : f32 to vector<1x16x16xf32>
    %617 = arith.mulf %614, %616 : vector<1x16x16xf32>
    %618 = arith.addf %612, %617 : vector<1x16x16xf32>
    %619 = vector.extract_strided_slice %579 {offsets = [0, 0, 3, 0], sizes = [2, 1, 16, 16], strides = [1, 1, 1, 1]} : vector<2x1x22x16xf32> to vector<2x1x16x16xf32>
    %620 = vector.extract_strided_slice %619 {offsets = [0, 0, 0, 0], sizes = [1, 1, 16, 16], strides = [1, 1, 1, 1]} : vector<2x1x16x16xf32> to vector<1x1x16x16xf32>
    %621 = vector.shape_cast %620 : vector<1x1x16x16xf32> to vector<1x16x16xf32>
    %c27 = arith.constant 27 : index
    %622 = memref.load %arg1[%c27] : memref<98xf32, #tpu.memory_space<smem>>
    %623 = vector.broadcast %622 : f32 to vector<1x16x16xf32>
    %624 = arith.mulf %621, %623 : vector<1x16x16xf32>
    %625 = arith.addf %618, %624 : vector<1x16x16xf32>
    %626 = vector.extract_strided_slice %619 {offsets = [1, 0, 0, 0], sizes = [1, 1, 16, 16], strides = [1, 1, 1, 1]} : vector<2x1x16x16xf32> to vector<1x1x16x16xf32>
    %627 = vector.shape_cast %626 : vector<1x1x16x16xf32> to vector<1x16x16xf32>
    %c76 = arith.constant 76 : index
    %628 = memref.load %arg1[%c76] : memref<98xf32, #tpu.memory_space<smem>>
    %629 = vector.broadcast %628 : f32 to vector<1x16x16xf32>
    %630 = arith.mulf %627, %629 : vector<1x16x16xf32>
    %631 = arith.addf %625, %630 : vector<1x16x16xf32>
    %632 = vector.extract_strided_slice %579 {offsets = [0, 0, 4, 0], sizes = [2, 1, 16, 16], strides = [1, 1, 1, 1]} : vector<2x1x22x16xf32> to vector<2x1x16x16xf32>
    %633 = vector.extract_strided_slice %632 {offsets = [0, 0, 0, 0], sizes = [1, 1, 16, 16], strides = [1, 1, 1, 1]} : vector<2x1x16x16xf32> to vector<1x1x16x16xf32>
    %634 = vector.shape_cast %633 : vector<1x1x16x16xf32> to vector<1x16x16xf32>
    %c34 = arith.constant 34 : index
    %635 = memref.load %arg1[%c34] : memref<98xf32, #tpu.memory_space<smem>>
    %636 = vector.broadcast %635 : f32 to vector<1x16x16xf32>
    %637 = arith.mulf %634, %636 : vector<1x16x16xf32>
    %638 = arith.addf %631, %637 : vector<1x16x16xf32>
    %639 = vector.extract_strided_slice %632 {offsets = [1, 0, 0, 0], sizes = [1, 1, 16, 16], strides = [1, 1, 1, 1]} : vector<2x1x16x16xf32> to vector<1x1x16x16xf32>
    %640 = vector.shape_cast %639 : vector<1x1x16x16xf32> to vector<1x16x16xf32>
    %c83 = arith.constant 83 : index
    %641 = memref.load %arg1[%c83] : memref<98xf32, #tpu.memory_space<smem>>
    %642 = vector.broadcast %641 : f32 to vector<1x16x16xf32>
    %643 = arith.mulf %640, %642 : vector<1x16x16xf32>
    %644 = arith.addf %638, %643 : vector<1x16x16xf32>
    %645 = vector.extract_strided_slice %579 {offsets = [0, 0, 5, 0], sizes = [2, 1, 16, 16], strides = [1, 1, 1, 1]} : vector<2x1x22x16xf32> to vector<2x1x16x16xf32>
    %646 = vector.extract_strided_slice %645 {offsets = [0, 0, 0, 0], sizes = [1, 1, 16, 16], strides = [1, 1, 1, 1]} : vector<2x1x16x16xf32> to vector<1x1x16x16xf32>
    %647 = vector.shape_cast %646 : vector<1x1x16x16xf32> to vector<1x16x16xf32>
    %c41 = arith.constant 41 : index
    %648 = memref.load %arg1[%c41] : memref<98xf32, #tpu.memory_space<smem>>
    %649 = vector.broadcast %648 : f32 to vector<1x16x16xf32>
    %650 = arith.mulf %647, %649 : vector<1x16x16xf32>
    %651 = arith.addf %644, %650 : vector<1x16x16xf32>
    %652 = vector.extract_strided_slice %645 {offsets = [1, 0, 0, 0], sizes = [1, 1, 16, 16], strides = [1, 1, 1, 1]} : vector<2x1x16x16xf32> to vector<1x1x16x16xf32>
    %653 = vector.shape_cast %652 : vector<1x1x16x16xf32> to vector<1x16x16xf32>
    %c90 = arith.constant 90 : index
    %654 = memref.load %arg1[%c90] : memref<98xf32, #tpu.memory_space<smem>>
    %655 = vector.broadcast %654 : f32 to vector<1x16x16xf32>
    %656 = arith.mulf %653, %655 : vector<1x16x16xf32>
    %657 = arith.addf %651, %656 : vector<1x16x16xf32>
    %658 = vector.extract_strided_slice %579 {offsets = [0, 0, 6, 0], sizes = [2, 1, 16, 16], strides = [1, 1, 1, 1]} : vector<2x1x22x16xf32> to vector<2x1x16x16xf32>
    %659 = vector.extract_strided_slice %658 {offsets = [0, 0, 0, 0], sizes = [1, 1, 16, 16], strides = [1, 1, 1, 1]} : vector<2x1x16x16xf32> to vector<1x1x16x16xf32>
    %660 = vector.shape_cast %659 : vector<1x1x16x16xf32> to vector<1x16x16xf32>
    %c48 = arith.constant 48 : index
    %661 = memref.load %arg1[%c48] : memref<98xf32, #tpu.memory_space<smem>>
    %662 = vector.broadcast %661 : f32 to vector<1x16x16xf32>
    %663 = arith.mulf %660, %662 : vector<1x16x16xf32>
    %664 = arith.addf %657, %663 : vector<1x16x16xf32>
    %665 = vector.extract_strided_slice %658 {offsets = [1, 0, 0, 0], sizes = [1, 1, 16, 16], strides = [1, 1, 1, 1]} : vector<2x1x16x16xf32> to vector<1x1x16x16xf32>
    %666 = vector.shape_cast %665 : vector<1x1x16x16xf32> to vector<1x16x16xf32>
    %c97 = arith.constant 97 : index
    %667 = memref.load %arg1[%c97] : memref<98xf32, #tpu.memory_space<smem>>
    %668 = vector.broadcast %667 : f32 to vector<1x16x16xf32>
    %669 = arith.mulf %666, %668 : vector<1x16x16xf32>
    %670 = arith.addf %664, %669 : vector<1x16x16xf32>
    %671 = arith.addf %486, %578 : vector<1x16x16xf32>
    %672 = arith.addf %670, %394 : vector<1x16x16xf32>
    %673 = arith.addf %671, %672 : vector<1x16x16xf32>
    %674 = vector.broadcast %0 : f32 to vector<1x16x16xf32>
    %675 = arith.addf %673, %674 : vector<1x16x16xf32>
    %676 = arith.negf %675 : vector<1x16x16xf32>
    %677 = math.exp %676 : vector<1x16x16xf32>
    %cst_61 = arith.constant 1.000000e+00 : f32
    %678 = vector.broadcast %cst_61 : f32 to vector<1x16x16xf32>
    %679 = arith.addf %678, %677 : vector<1x16x16xf32>
    %680 = arith.divf %678, %679 : vector<1x16x16xf32>
    %c0_62 = arith.constant 0 : index
    %c0_63 = arith.constant 0 : index
    %c0_64 = arith.constant 0 : index
    %c0_65 = arith.constant 0 : index
    %681 = vector.load %arg5[%c0_62, %c0_63, %c0_64, %c0_65] : memref<1x1x16x16xf32, #tpu.memory_space<vmem>>, vector<1x1x16x16xf32>
    %682 = vector.shape_cast %681 : vector<1x1x16x16xf32> to vector<1x16x16xf32>
    %683 = vector.shape_cast %680 : vector<1x16x16xf32> to vector<1x1x16x16xf32>
    tpu.vector_store %arg5[%c0_62, %c0_63, %c0_64, %c0_65], %683 {strides = array<i32>} : memref<1x1x16x16xf32, #tpu.memory_space<vmem>>, vector<1x1x16x16xf32>,
    %c0_66 = arith.constant 0 : index
    %c0_67 = arith.constant 0 : index
    %c0_68 = arith.constant 0 : index
    %c0_69 = arith.constant 0 : index
    %684 = vector.load %arg3[%c0_66, %c0_67, %c0_68, %c0_69] : memref<1x4x16x16xf32, #tpu.memory_space<vmem>>, vector<1x1x16x16xf32>
    %685 = vector.shape_cast %684 : vector<1x1x16x16xf32> to vector<1x16x16xf32>
    %686 = arith.mulf %685, %680 : vector<1x16x16xf32>
    %c0_70 = arith.constant 0 : index
    %c0_71 = arith.constant 0 : index
    %c0_72 = arith.constant 0 : index
    %c0_73 = arith.constant 0 : index
    %687 = vector.load %arg4[%c0_70, %c0_71, %c0_72, %c0_73] : memref<1x4x16x16xf32, #tpu.memory_space<vmem>>, vector<1x1x16x16xf32>
    %688 = vector.shape_cast %687 : vector<1x1x16x16xf32> to vector<1x16x16xf32>
    %689 = vector.shape_cast %686 : vector<1x16x16xf32> to vector<1x1x16x16xf32>
    tpu.vector_store %arg4[%c0_70, %c0_71, %c0_72, %c0_73], %689 {strides = array<i32>} : memref<1x4x16x16xf32, #tpu.memory_space<vmem>>, vector<1x1x16x16xf32>,
    %c0_74 = arith.constant 0 : index
    %c1_75 = arith.constant 1 : index
    %c0_76 = arith.constant 0 : index
    %c0_77 = arith.constant 0 : index
    %690 = vector.load %arg3[%c0_74, %c1_75, %c0_76, %c0_77] : memref<1x4x16x16xf32, #tpu.memory_space<vmem>>, vector<1x1x16x16xf32>
    %691 = vector.shape_cast %690 : vector<1x1x16x16xf32> to vector<1x16x16xf32>
    %692 = arith.mulf %691, %680 : vector<1x16x16xf32>
    %c0_78 = arith.constant 0 : index
    %c1_79 = arith.constant 1 : index
    %c0_80 = arith.constant 0 : index
    %c0_81 = arith.constant 0 : index
    %693 = vector.load %arg4[%c0_78, %c1_79, %c0_80, %c0_81] : memref<1x4x16x16xf32, #tpu.memory_space<vmem>>, vector<1x1x16x16xf32>
    %694 = vector.shape_cast %693 : vector<1x1x16x16xf32> to vector<1x16x16xf32>
    %695 = vector.shape_cast %692 : vector<1x16x16xf32> to vector<1x1x16x16xf32>
    tpu.vector_store %arg4[%c0_78, %c1_79, %c0_80, %c0_81], %695 {strides = array<i32>} : memref<1x4x16x16xf32, #tpu.memory_space<vmem>>, vector<1x1x16x16xf32>,
    %c0_82 = arith.constant 0 : index
    %c2_83 = arith.constant 2 : index
    %c0_84 = arith.constant 0 : index
    %c0_85 = arith.constant 0 : index
    %696 = vector.load %arg3[%c0_82, %c2_83, %c0_84, %c0_85] : memref<1x4x16x16xf32, #tpu.memory_space<vmem>>, vector<1x1x16x16xf32>
    %697 = vector.shape_cast %696 : vector<1x1x16x16xf32> to vector<1x16x16xf32>
    %698 = arith.mulf %697, %680 : vector<1x16x16xf32>
    %c0_86 = arith.constant 0 : index
    %c2_87 = arith.constant 2 : index
    %c0_88 = arith.constant 0 : index
    %c0_89 = arith.constant 0 : index
    %699 = vector.load %arg4[%c0_86, %c2_87, %c0_88, %c0_89] : memref<1x4x16x16xf32, #tpu.memory_space<vmem>>, vector<1x1x16x16xf32>
    %700 = vector.shape_cast %699 : vector<1x1x16x16xf32> to vector<1x16x16xf32>
    %701 = vector.shape_cast %698 : vector<1x16x16xf32> to vector<1x1x16x16xf32>
    tpu.vector_store %arg4[%c0_86, %c2_87, %c0_88, %c0_89], %701 {strides = array<i32>} : memref<1x4x16x16xf32, #tpu.memory_space<vmem>>, vector<1x1x16x16xf32>,
    %c0_90 = arith.constant 0 : index
    %c3_91 = arith.constant 3 : index
    %c0_92 = arith.constant 0 : index
    %c0_93 = arith.constant 0 : index
    %702 = vector.load %arg3[%c0_90, %c3_91, %c0_92, %c0_93] : memref<1x4x16x16xf32, #tpu.memory_space<vmem>>, vector<1x1x16x16xf32>
    %703 = vector.shape_cast %702 : vector<1x1x16x16xf32> to vector<1x16x16xf32>
    %704 = arith.mulf %703, %680 : vector<1x16x16xf32>
    %c0_94 = arith.constant 0 : index
    %c3_95 = arith.constant 3 : index
    %c0_96 = arith.constant 0 : index
    %c0_97 = arith.constant 0 : index
    %705 = vector.load %arg4[%c0_94, %c3_95, %c0_96, %c0_97] : memref<1x4x16x16xf32, #tpu.memory_space<vmem>>, vector<1x1x16x16xf32>
    %706 = vector.shape_cast %705 : vector<1x1x16x16xf32> to vector<1x16x16xf32>
    %707 = vector.shape_cast %704 : vector<1x16x16xf32> to vector<1x1x16x16xf32>
    tpu.vector_store %arg4[%c0_94, %c3_95, %c0_96, %c0_97], %707 {strides = array<i32>} : memref<1x4x16x16xf32, #tpu.memory_space<vmem>>, vector<1x1x16x16xf32>,
    return
  }
  func.func @transform_0(%arg0: i32, %arg1: memref<98xf32, #tpu.memory_space<smem>>, %arg2: memref<1xf32, #tpu.memory_space<smem>>) -> (i32, i32, i32, i32) {
    %c0_i32 = arith.constant 0 : i32
    %c0_i32_0 = arith.constant 0 : i32
    %c0_i32_1 = arith.constant 0 : i32
    %c0_i32_2 = arith.constant 0 : i32
    return %arg0, %c0_i32, %c0_i32_0, %c0_i32_1 : i32, i32, i32, i32
  }
  func.func @transform_1(%arg0: i32, %arg1: memref<98xf32, #tpu.memory_space<smem>>, %arg2: memref<1xf32, #tpu.memory_space<smem>>) -> (i32, i32, i32, i32) {
    %c0_i32 = arith.constant 0 : i32
    %c0_i32_0 = arith.constant 0 : i32
    %c0_i32_1 = arith.constant 0 : i32
    %c0_i32_2 = arith.constant 0 : i32
    return %arg0, %c0_i32, %c0_i32_0, %c0_i32_1 : i32, i32, i32, i32
  }
  func.func @transform_2(%arg0: i32, %arg1: memref<98xf32, #tpu.memory_space<smem>>, %arg2: memref<1xf32, #tpu.memory_space<smem>>) -> (i32, i32, i32, i32) {
    %c0_i32 = arith.constant 0 : i32
    %c0_i32_0 = arith.constant 0 : i32
    %c0_i32_1 = arith.constant 0 : i32
    %c0_i32_2 = arith.constant 0 : i32
    return %arg0, %c0_i32, %c0_i32_0, %c0_i32_1 : i32, i32, i32, i32
  }
}

</mosaic_0001>

<llo_original>
// kernel: spatial_gate.1
$region0: #{spatial_gate.1}
  #allocation0 [shape = 'u32[]', space=smem, size = 0x4, offset = 0x4, fixed_abs, tag = 'smem constant byte address 0x4 - core index']
  #allocation1 [shape = 'u32[72,128]{1,0:T(1,128)}', space=vmem, size = 0x9000, scoped, tag = 'internal scratch']
  #allocation2 [shape = 'f32[2,1,22,22]{3,2,1,0:T(8,128)}', space=vmem, size = 0x6000, scoped, tag = 'scratch operand']
  #allocation3 [shape = 's32[1]{0}', space=sflag, size = 0x4, scoped, tag = 'scoped memory for spatial_gate.1']
  #allocation4 [shape = 'u8[512]{0}', space=smem, size = 0x200, scoped, tag = 'prefetched SMEM operand 0']
  #allocation5 [shape = 'f32[1]{0:T(128)S(6)}', space=smem, size = 0x200, scoped, tag = 'prefetched SMEM operand 1']
  %s0 = inlined_call_operand.vmem [shape: f32[98], index: 0, kind: input, shape index: {}]
  %s1 = inlined_call_operand.<no memory space> [shape: f32[1], index: 1, kind: input, shape index: {}]
  %s2 = inlined_call_operand.hbm [shape: f32[2,4,16,16], index: 2, kind: input, shape index: {}]
  %s3 = inlined_call_operand.hbm [shape: f32[2,4,16,16], index: 3, kind: output, shape index: {0}]
  %s4 = inlined_call_operand.hbm [shape: f32[2,1,16,16], index: 4, kind: output, shape index: {1}]
  %5 = xla_tuple %s3, %s4
  %s6 = sld [smem:[#allocation0]]
  $region49: #{spatial_gate.1} parent=0
    _
  %s8 = ssub.s32 1, %s6
  %s9 = scalar_select 0, %s8, %s6
  %s11 = sshll.u32 %s0, 4
  %s12 = int_to_ptr.vmem [resolvable:$true] %s11
  %14 = dma.vmem_to_smem %s12, 16, [#allocation4], [#allocation3]
  %15 = sst [smem:[#allocation5]] %s1
  %17 = dma.done [#allocation3], 16
  %18 = sfence
  $region1: #{spatial_gate.1} parent=0
    #allocation6 [shape = 'u8[65536]{0}', space=vmem, size = 0x10000, scoped, tag = 'input window, operand 2']
    #allocation7 [shape = 's32[2]{0}', space=sflag, size = 0x8, scoped, tag = 'scoped memory for spatial_gate.1']
    #allocation8 [shape = 's32[2]{0}', space=sflag, size = 0x8, scoped, tag = 'scoped memory for spatial_gate.1']
    #allocation9 [shape = 'u8[65536]{0}', space=vmem, size = 0x10000, scoped, tag = 'output window, operand 0']
    #allocation10 [shape = 'u8[16384]{0}', space=vmem, size = 0x4000, scoped, tag = 'output window, operand 1']
    #allocation11 [shape = 's32[2]{0}', space=sflag, size = 0x8, scoped, tag = 'scoped memory for spatial_gate.1']
    %19 = vsyncpa [#allocation7], 0
    %s20 = scalar_lea.sflag [#allocation7], 1
    %21 = vsyncpa %s20, 0
    %22 = vsyncpa [#allocation8], 0
    %s23 = scalar_lea.sflag [#allocation8], 1
    %24 = vsyncpa %s23, 0
    %25 = vsyncpa [#allocation11], 0
    %s26 = scalar_lea.sflag [#allocation11], 1
    %27 = vsyncpa %s26, 0
    loop: start=0, step=1, limit=4
    $region2: #{spatial_gate.1} parent=1 // loop_pre_header
      _
    $region3: #{spatial_gate.1} parent=1 // loop_header
      %s29 = sphi 0, %s33
      %p30 = scmp.ge.s32.totalorder %s29, 4
      %s39 = sphi 0, %s41
      %s42 = sphi 0, %s39
      %s43 = sphi 0, %s42
      %s59 = sphi 0, %s43
      %s65 = sphi 0, %s67
      %s68 = sphi 0, %s65
      %s69 = sphi 0, %s68
      %s85 = sphi 0, %s69
      %s91 = sphi 0, %s93
      %s94 = sphi 0, %s91
      %s95 = sphi 0, %s94
      %s111 = sphi 0, %s95
    $region4: #{spatial_gate.1} parent=1 // loop_header_branch
      %32 = sbr.rel (%p30) target = $region8
    $region5: #{spatial_gate.1} parent=1 // loop_body
      %s34 = ssub.s32 %s29, 1
      %s35 = ssub.s32 %s29, 2
      %s36 = sadd.s32 %s29, 1
      %s37 = ssub.s32 %s29, %s36
      %p38 = scmp.eq.s32.totalorder %s37, 0
      %s40 = sadd.s32 %s39, 1
      %s41 = scalar_select %p38, %s39, %s40
      %p44 = pneg %p38
      %p45 = scmp.eq.s32.totalorder %s29, 1
      %p46 = por %p44, %p45
      %p47 = scmp.ne.s32.totalorder %s39, %s42
      %p48 = scmp.eq.s32.totalorder %s29, 0
      %p49 = por %p47, %p48
      %p50 = scmp.ne.s32.totalorder %s39, %s42
      %p51 = scmp.eq.s32.totalorder %s34, 1
      %p52 = por %p50, %p51
      %p53 = scmp.ne.s32.totalorder %s42, %s43
      %p54 = scmp.eq.s32.totalorder %s34, 0
      %p55 = por %p53, %p54
      %p56 = scmp.ne.s32.totalorder %s42, %s43
      %p57 = scmp.eq.s32.totalorder %s35, 1
      %p58 = por %p56, %p57
      %p60 = scmp.ne.s32.totalorder %s43, %s59
      %p61 = scmp.eq.s32.totalorder %s35, 0
      %p62 = por %p60, %p61
      %s63 = ssub.s32 %s29, %s36
      %p64 = scmp.eq.s32.totalorder %s63, 0
      %s66 = sadd.s32 %s65, 1
      %s67 = scalar_select %p64, %s65, %s66
      %p70 = pneg %p64
      %p71 = scmp.eq.s32.totalorder %s29, 1
      %p72 = por %p70, %p71
      %p73 = scmp.ne.s32.totalorder %s65, %s68
      %p74 = scmp.eq.s32.totalorder %s29, 0
      %p75 = por %p73, %p74
      %p76 = scmp.ne.s32.totalorder %s65, %s68
      %p77 = scmp.eq.s32.totalorder %s34, 1
      %p78 = por %p76, %p77
      %p79 = scmp.ne.s32.totalorder %s68, %s69
      %p80 = scmp.eq.s32.totalorder %s34, 0
      %p81 = por %p79, %p80
      %p82 = scmp.ne.s32.totalorder %s68, %s69
      %p83 = scmp.eq.s32.totalorder %s35, 1
      %p84 = por %p82, %p83
      %p86 = scmp.ne.s32.totalorder %s69, %s85
      %p87 = scmp.eq.s32.totalorder %s35, 0
      %p88 = por %p86, %p87
      %s89 = ssub.s32 %s29, %s36
      %p90 = scmp.eq.s32.totalorder %s89, 0
      %s92 = sadd.s32 %s91, 1
      %s93 = scalar_select %p90, %s91, %s92
      %p96 = pneg %p90
      %p97 = scmp.eq.s32.totalorder %s29, 1
      %p98 = por %p96, %p97
      %p99 = scmp.ne.s32.totalorder %s91, %s94
      %p100 = scmp.eq.s32.totalorder %s29, 0
      %p101 = por %p99, %p100
      %p102 = scmp.ne.s32.totalorder %s91, %s94
      %p103 = scmp.eq.s32.totalorder %s34, 1
      %p104 = por %p102, %p103
      %p105 = scmp.ne.s32.totalorder %s94, %s95
      %p106 = scmp.eq.s32.totalorder %s34, 0
      %p107 = por %p105, %p106
      %p108 = scmp.ne.s32.totalorder %s94, %s95
      %p109 = scmp.eq.s32.totalorder %s35, 1
      %p110 = por %p108, %p109
      %p112 = scmp.ne.s32.totalorder %s95, %s111
      %p113 = scmp.eq.s32.totalorder %s35, 0
      %p114 = por %p112, %p113
      %p115 = scmp.le.s32.totalorder 1, %s29
      %p116 = scmp.lt.s32.totalorder %s29, 3
      %p117 = pnand %p115, %p116
      %p118 = pneg %p117
      // Predicated region
      $region9: #{spatial_gate.1} parent=5 // pred_check
        _
      $region10: #{spatial_gate.1} parent=5 // pred_check_branch
        %120 = sbr.rel (%p117) target = $region12
      $region11: #{spatial_gate.1} parent=5 // pred_region
        %s121 = ssub.s32 %s29, 1
      $region12: #{spatial_gate.1} parent=5 // pred_fallthru
        _
      %p122 = scmp.lt.s32.totalorder %s29, 2
      // Predicated region
      $region13: #{spatial_gate.1} parent=5 // pred_check
        %p123 = pneg %p122
      $region14: #{spatial_gate.1} parent=5 // pred_check_branch
        %125 = sbr.rel (%p123) target = $region16
      $region15: #{spatial_gate.1} parent=5 // pred_region
        // Predicated region
        $region17: #{spatial_gate.1} parent=15 // pred_check
          %p126 = pneg %p49
        $region18: #{spatial_gate.1} parent=15 // pred_check_branch
          %128 = sbr.rel (%p126) target = $region20
        $region19: #{spatial_gate.1} parent=15 // pred_region
          %s129 = sand.u32 %s39, 1
          %s130 = scalar_lea.sflag [#allocation7], %s129
          %s131 = sand.u32 %s39, 1
          %s132 = smul.addr %s131, 64
          %s133 = scalar_lea.vmem [#allocation6], %s132
          %135 = vsyncadd %s130, 0
          %s136 = smul.addr %s29, 8
          %s137 = smul.addr %s136, 8
          %s138 = scalar_lea.hbm %s2, %s137
          %s139 = sshll.u32 %s138, 4
          %s140 = int_to_ptr.hbm [resolvable:$true] %s139
          %s141 = sshll.u32 %s133, 4
          %s142 = int_to_ptr.vmem [resolvable:$true] %s141
          %147 = dma.hbm_to_vmem [thread:$0]  %s140, 1024, %s142, %s130, 128, 128, 8
        $region20: #{spatial_gate.1} parent=15 // pred_fallthru
          _
      $region16: #{spatial_gate.1} parent=5 // pred_fallthru
        _
      %p148 = scmp.le.s32.totalorder 1, %s29
      %p149 = scmp.lt.s32.totalorder %s29, 3
      %p150 = pnand %p148, %p149
      %p151 = pneg %p150
      // Predicated region
      $region21: #{spatial_gate.1} parent=5 // pred_check
        _
      $region22: #{spatial_gate.1} parent=5 // pred_check_branch
        %153 = sbr.rel (%p150) target = $region24
      $region23: #{spatial_gate.1} parent=5 // pred_region
        %s154 = ssub.s32 %s29, 1
        %s155 = sand.u32 %s42, 1
        %s156 = scalar_lea.sflag [#allocation7], %s155
        %s157 = sand.u32 %s42, 1
        %s158 = smul.addr %s157, 64
        %s159 = scalar_lea.vmem [#allocation6], %s158
        // Predicated region
        $region25: #{spatial_gate.1} parent=23 // pred_check
          %p160 = pneg %p55
        $region26: #{spatial_gate.1} parent=23 // pred_check_branch
          %162 = sbr.rel (%p160) target = $region28
        $region27: #{spatial_gate.1} parent=23 // pred_region
          %164 = dma.done %s156, 1024
        $region28: #{spatial_gate.1} parent=23 // pred_fallthru
          _
        %s165 = sand.u32 %s42, 1
        %s166 = scalar_lea.sflag [#allocation7], %s165
        %s167 = sand.u32 %s42, 1
        %s168 = smul.addr %s167, 64
        %s169 = scalar_lea.vmem [#allocation6], %s168
        %p170 = pneg %p55
        %p171 = pneg %p52
        %p172 = pneg %p81
        %p173 = pneg %p78
        %s174 = sand.u32 %s68, 1
        %s175 = scalar_lea.sflag [#allocation8], %s174
        %s176 = sand.u32 %s68, 1
        %s177 = smul.addr %s176, 64
        %s178 = scalar_lea.vmem [#allocation9], %s177
        %p179 = pneg %p107
        %p180 = pneg %p104
        %s181 = sand.u32 %s94, 1
        %s182 = scalar_lea.sflag [#allocation11], %s181
        %s183 = sand.u32 %s94, 1
        %s184 = smul.addr %s183, 16
        %s185 = scalar_lea.vmem [#allocation10], %s184
        %s186 = sld [smem:[#allocation5]]
        %vm187 = vcmask 179200
        %188 = vst.msk [vmem:[#allocation2] sm:$0xff] %vm187, 0.0
        %189 = vst.msk [vmem:[#allocation2 + $0x8] sm:$0xff] %vm187, 0.0
        %vm190 = vcmask 177152
        %191 = vst.msk [vmem:[#allocation2 + $0x10] sm:$0x3f] %vm190, 0.0
        %192 = vst.msk [vmem:[#allocation2 + $0x18] sm:$0xff] %vm187, 0.0
        %193 = vst.msk [vmem:[#allocation2 + $0x20] sm:$0xff] %vm187, 0.0
        %194 = vst.msk [vmem:[#allocation2 + $0x28] sm:$0x3f] %vm190, 0.0
        %v195 = vld [vmem:[%s159] sm:$0xff]
        %v196 = vld [vmem:[%s159 + $0x8] sm:$0xff]
        %s197 = scalar_lea.vmem %s159, 16 [#allocation6]
        %v198 = vld [vmem:[%s197] sm:$0xff]
        %v199 = vld [vmem:[%s197 + $0x8] sm:$0xff]
        %v200 = vmax.f32 %v195, %v198
        %v201 = vmax.f32 %v196, %v199
        %v202 = vadd.f32 %v195, %v198
        %v203 = vadd.f32 %v196, %v199
        %s204 = scalar_lea.vmem %s159, 32 [#allocation6]
        %v205 = vld [vmem:[%s204] sm:$0xff]
        %v206 = vld [vmem:[%s204 + $0x8] sm:$0xff]
        %v207 = vmax.f32 %v200, %v205
        %v208 = vmax.f32 %v201, %v206
        %v209 = vadd.f32 %v202, %v205
        %v210 = vadd.f32 %v203, %v206
        %s211 = scalar_lea.vmem %s159, 48 [#allocation6]
        %v212 = vld [vmem:[%s211] sm:$0xff]
        %v213 = vld [vmem:[%s211 + $0x8] sm:$0xff]
        %v214 = vmax.f32 %v207, %v212
        %v215 = vmax.f32 %v208, %v213
        %v216 = vadd.f32 %v209, %v212
        %v217 = vadd.f32 %v210, %v213
        %220 = vrot.lane.b32.xlu0 %v214, 3
        %v221 = vpop.permute.xlu0 %220
        %222 = vrot.lane.b32.xlu0 %v215, 3
        %v223 = vpop.permute.xlu0 %222
        %vm226 = vcmask 154648
        %227 = vst.msk [vmem:[#allocation2 + $0x3] sm:$0xff] %vm226, %v221
        %228 = vst.msk [vmem:[#allocation2 + $0xb] sm:$0xff] %vm226, %v223
        %231 = vrot.lane.b32.xlu0 %v216, 3
        %v232 = vpop.permute.xlu0 %231
        %233 = vrot.lane.b32.xlu0 %v217, 3
        %v234 = vpop.permute.xlu0 %233
        %s237 = scalar_lea.vmem [#allocation2], 24
        %238 = vst.msk [vmem:[%s237 + $0x3] sm:$0xff] %vm226, %v232
        %239 = vst.msk [vmem:[%s237 + $0xb] sm:$0xff] %vm226, %v234
        %v240 = vld [vmem:[#allocation2] sm:$0xff]
        %v241 = vld [vmem:[#allocation2 + $0x8] sm:$0xff]
        %v242 = vld [vmem:[#allocation2 + $0x10] sm:$0x3f]
        %v243 = vld [vmem:[#allocation2 + $0x18] sm:$0xff]
        %v244 = vld [vmem:[#allocation2 + $0x20] sm:$0xff]
        %v245 = vld [vmem:[#allocation2 + $0x28] sm:$0x3f]
        %s246 = sld [smem:[#allocation4]]
        %v247 = vstv %s246
        %v248 = vmul.f32 %v240, %v247
        %v249 = vmul.f32 %v241, %v247
        %v250 = vadd.f32 %v248, 0.0
        %v251 = vadd.f32 %v249, 0.0
        %s252 = sld [smem:[#allocation4 + $0x31]]
        %v253 = vstv %s252
        %v254 = vmul.f32 %v243, %v253
        %v255 = vmul.f32 %v244, %v253
        %v256 = vadd.f32 %v250, %v254
        %v257 = vadd.f32 %v251, %v255
        %s258 = sld [smem:[#allocation4 + $0x7]]
        %v259 = vstv %s258
        %v260 = vmul.f32 %v240, %v259
        %v261 = vmul.f32 %v241, %v259
        %v262 = vmul.f32 %v242, %v259
        %vm266 = vcmask 1046528
        %v267 = vrot.slane %v260, 1
        %v268 = vrot.slane %v261, 1
        %v269 = vsel %vm266, %v267, %v268
        %v270 = vrot.slane %v262, 1
        %v271 = vsel %vm266, %v268, %v270
        %v274 = vadd.f32 %v256, %v269
        %v275 = vadd.f32 %v257, %v271
        %s276 = sld [smem:[#allocation4 + $0x38]]
        %v277 = vstv %s276
        %v278 = vmul.f32 %v243, %v277
        %v279 = vmul.f32 %v244, %v277
        %v280 = vmul.f32 %v245, %v277
        %v284 = vrot.slane %v278, 1
        %v285 = vrot.slane %v279, 1
        %v286 = vsel %vm266, %v284, %v285
        %v287 = vrot.slane %v280, 1
        %v288 = vsel %vm266, %v285, %v287
        %v291 = vadd.f32 %v274, %v286
        %v292 = vadd.f32 %v275, %v288
        %s293 = sld [smem:[#allocation4 + $0xe]]
        %v294 = vstv %s293
        %v295 = vmul.f32 %v240, %v294
        %v296 = vmul.f32 %v241, %v294
        %v297 = vmul.f32 %v242, %v294
        %vm301 = vcmask 1045504
        %v302 = vrot.slane %v295, 2
        %v303 = vrot.slane %v296, 2
        %v304 = vsel %vm301, %v302, %v303
        %v305 = vrot.slane %v297, 2
        %v306 = vsel %vm301, %v303, %v305
        %v309 = vadd.f32 %v291, %v304
        %v310 = vadd.f32 %v292, %v306
        %s311 = sld [smem:[#allocation4 + $0x3f]]
        %v312 = vstv %s311
        %v313 = vmul.f32 %v243, %v312
        %v314 = vmul.f32 %v244, %v312
        %v315 = vmul.f32 %v245, %v312
        %v319 = vrot.slane %v313, 2
        %v320 = vrot.slane %v314, 2
        %v321 = vsel %vm301, %v319, %v320
        %v322 = vrot.slane %v315, 2
        %v323 = vsel %vm301, %v320, %v322
        %v326 = vadd.f32 %v309, %v321
        %v327 = vadd.f32 %v310, %v323
        %s328 = sld [smem:[#allocation4 + $0x15]]
        %v329 = vstv %s328
        %v330 = vmul.f32 %v240, %v329
        %v331 = vmul.f32 %v241, %v329
        %v332 = vmul.f32 %v242, %v329
        %vm336 = vcmask 1044480
        %v337 = vrot.slane %v330, 3
        %v338 = vrot.slane %v331, 3
        %v339 = vsel %vm336, %v337, %v338
        %v340 = vrot.slane %v332, 3
        %v341 = vsel %vm336, %v338, %v340
        %v344 = vadd.f32 %v326, %v339
        %v345 = vadd.f32 %v327, %v341
        %s346 = sld [smem:[#allocation4 + $0x46]]
        %v347 = vstv %s346
        %v348 = vmul.f32 %v243, %v347
        %v349 = vmul.f32 %v244, %v347
        %v350 = vmul.f32 %v245, %v347
        %v354 = vrot.slane %v348, 3
        %v355 = vrot.slane %v349, 3
        %v356 = vsel %vm336, %v354, %v355
        %v357 = vrot.slane %v350, 3
        %v358 = vsel %vm336, %v355, %v357
        %v361 = vadd.f32 %v344, %v356
        %v362 = vadd.f32 %v345, %v358
        %s363 = sld [smem:[#allocation4 + $0x1c]]
        %v364 = vstv %s363
        %v365 = vmul.f32 %v240, %v364
        %v366 = vmul.f32 %v241, %v364
        %v367 = vmul.f32 %v242, %v364
        %vm371 = vcmask 1043456
        %v372 = vrot.slane %v365, 4
        %v373 = vrot.slane %v366, 4
        %v374 = vsel %vm371, %v372, %v373
        %v375 = vrot.slane %v367, 4
        %v376 = vsel %vm371, %v373, %v375
        %v379 = vadd.f32 %v361, %v374
        %v380 = vadd.f32 %v362, %v376
        %s381 = sld [smem:[#allocation4 + $0x4d]]
        %v382 = vstv %s381
        %v383 = vmul.f32 %v243, %v382
        %v384 = vmul.f32 %v244, %v382
        %v385 = vmul.f32 %v245, %v382
        %v389 = vrot.slane %v383, 4
        %v390 = vrot.slane %v384, 4
        %v391 = vsel %vm371, %v389, %v390
        %v392 = vrot.slane %v385, 4
        %v393 = vsel %vm371, %v390, %v392
        %v396 = vadd.f32 %v379, %v391
        %v397 = vadd.f32 %v380, %v393
        %s398 = sld [smem:[#allocation4 + $0x23]]
        %v399 = vstv %s398
        %v400 = vmul.f32 %v240, %v399
        %v401 = vmul.f32 %v241, %v399
        %v402 = vmul.f32 %v242, %v399
        %vm406 = vcmask 1042432
        %v407 = vrot.slane %v400, 5
        %v408 = vrot.slane %v401, 5
        %v409 = vsel %vm406, %v407, %v408
        %v410 = vrot.slane %v402, 5
        %v411 = vsel %vm406, %v408, %v410
        %v414 = vadd.f32 %v396, %v409
        %v415 = vadd.f32 %v397, %v411
        %s416 = sld [smem:[#allocation4 + $0x54]]
        %v417 = vstv %s416
        %v418 = vmul.f32 %v243, %v417
        %v419 = vmul.f32 %v244, %v417
        %v420 = vmul.f32 %v245, %v417
        %v424 = vrot.slane %v418, 5
        %v425 = vrot.slane %v419, 5
        %v426 = vsel %vm406, %v424, %v425
        %v427 = vrot.slane %v420, 5
        %v428 = vsel %vm406, %v425, %v427
        %v431 = vadd.f32 %v414, %v426
        %v432 = vadd.f32 %v415, %v428
        %s433 = sld [smem:[#allocation4 + $0x2a]]
        %v434 = vstv %s433
        %v435 = vmul.f32 %v240, %v434
        %v436 = vmul.f32 %v241, %v434
        %v437 = vmul.f32 %v242, %v434
        %vm441 = vcmask 1041408
        %v442 = vrot.slane %v435, 6
        %v443 = vrot.slane %v436, 6
        %v444 = vsel %vm441, %v442, %v443
        %v445 = vrot.slane %v437, 6
        %v446 = vsel %vm441, %v443, %v445
        %v449 = vadd.f32 %v431, %v444
        %v450 = vadd.f32 %v432, %v446
        %s451 = sld [smem:[#allocation4 + $0x5b]]
        %v452 = vstv %s451
        %v453 = vmul.f32 %v243, %v452
        %v454 = vmul.f32 %v244, %v452
        %v455 = vmul.f32 %v245, %v452
        %v459 = vrot.slane %v453, 6
        %v460 = vrot.slane %v454, 6
        %v461 = vsel %vm441, %v459, %v460
        %v462 = vrot.slane %v455, 6
        %v463 = vsel %vm441, %v460, %v462
        %v466 = vadd.f32 %v449, %v461
        %v467 = vadd.f32 %v450, %v463
        %s468 = sld [smem:[#allocation4 + $0x1]]
        %v469 = vstv %s468
        %v470 = vmul.f32 %v240, %v469
        %v471 = vmul.f32 %v241, %v469
        %v472 = vadd.f32 %v470, 0.0
        %v473 = vadd.f32 %v471, 0.0
        %s474 = sld [smem:[#allocation4 + $0x32]]
        %v475 = vstv %s474
        %v476 = vmul.f32 %v243, %v475
        %v477 = vmul.f32 %v244, %v475
        %v478 = vadd.f32 %v472, %v476
        %v479 = vadd.f32 %v473, %v477
        %s480 = sld [smem:[#allocation4 + $0x8]]
        %v481 = vstv %s480
        %v482 = vmul.f32 %v240, %v481
        %v483 = vmul.f32 %v241, %v481
        %v484 = vmul.f32 %v242, %v481
        %v488 = vrot.slane %v482, 1
        %v489 = vrot.slane %v483, 1
        %v490 = vsel %vm266, %v488, %v489
        %v491 = vrot.slane %v484, 1
        %v492 = vsel %vm266, %v489, %v491
        %v495 = vadd.f32 %v478, %v490
        %v496 = vadd.f32 %v479, %v492
        %s497 = sld [smem:[#allocation4 + $0x39]]
        %v498 = vstv %s497
        %v499 = vmul.f32 %v243, %v498
        %v500 = vmul.f32 %v244, %v498
        %v501 = vmul.f32 %v245, %v498
        %v505 = vrot.slane %v499, 1
        %v506 = vrot.slane %v500, 1
        %v507 = vsel %vm266, %v505, %v506
        %v508 = vrot.slane %v501, 1
        %v509 = vsel %vm266, %v506, %v508
        %v512 = vadd.f32 %v495, %v507
        %v513 = vadd.f32 %v496, %v509
        %s514 = sld [smem:[#allocation4 + $0xf]]
        %v515 = vstv %s514
        %v516 = vmul.f32 %v240, %v515
        %v517 = vmul.f32 %v241, %v515
        %v518 = vmul.f32 %v242, %v515
        %v522 = vrot.slane %v516, 2
        %v523 = vrot.slane %v517, 2
        %v524 = vsel %vm301, %v522, %v523
        %v525 = vrot.slane %v518, 2
        %v526 = vsel %vm301, %v523, %v525
        %v529 = vadd.f32 %v512, %v524
        %v530 = vadd.f32 %v513, %v526
        %s531 = sld [smem:[#allocation4 + $0x40]]
        %v532 = vstv %s531
        %v533 = vmul.f32 %v243, %v532
        %v534 = vmul.f32 %v244, %v532
        %v535 = vmul.f32 %v245, %v532
        %v539 = vrot.slane %v533, 2
        %v540 = vrot.slane %v534, 2
        %v541 = vsel %vm301, %v539, %v540
        %v542 = vrot.slane %v535, 2
        %v543 = vsel %vm301, %v540, %v542
        %v546 = vadd.f32 %v529, %v541
        %v547 = vadd.f32 %v530, %v543
        %s548 = sld [smem:[#allocation4 + $0x16]]
        %v549 = vstv %s548
        %v550 = vmul.f32 %v240, %v549
        %v551 = vmul.f32 %v241, %v549
        %v552 = vmul.f32 %v242, %v549
        %v556 = vrot.slane %v550, 3
        %v557 = vrot.slane %v551, 3
        %v558 = vsel %vm336, %v556, %v557
        %v559 = vrot.slane %v552, 3
        %v560 = vsel %vm336, %v557, %v559
        %v563 = vadd.f32 %v546, %v558
        %v564 = vadd.f32 %v547, %v560
        %s565 = sld [smem:[#allocation4 + $0x47]]
        %v566 = vstv %s565
        %v567 = vmul.f32 %v243, %v566
        %v568 = vmul.f32 %v244, %v566
        %v569 = vmul.f32 %v245, %v566
        %v573 = vrot.slane %v567, 3
        %v574 = vrot.slane %v568, 3
        %v575 = vsel %vm336, %v573, %v574
        %v576 = vrot.slane %v569, 3
        %v577 = vsel %vm336, %v574, %v576
        %v580 = vadd.f32 %v563, %v575
        %v581 = vadd.f32 %v564, %v577
        %s582 = sld [smem:[#allocation4 + $0x1d]]
        %v583 = vstv %s582
        %v584 = vmul.f32 %v240, %v583
        %v585 = vmul.f32 %v241, %v583
        %v586 = vmul.f32 %v242, %v583
        %v590 = vrot.slane %v584, 4
        %v591 = vrot.slane %v585, 4
        %v592 = vsel %vm371, %v590, %v591
        %v593 = vrot.slane %v586, 4
        %v594 = vsel %vm371, %v591, %v593
        %v597 = vadd.f32 %v580, %v592
        %v598 = vadd.f32 %v581, %v594
        %s599 = sld [smem:[#allocation4 + $0x4e]]
        %v600 = vstv %s599
        %v601 = vmul.f32 %v243, %v600
        %v602 = vmul.f32 %v244, %v600
        %v603 = vmul.f32 %v245, %v600
        %v607 = vrot.slane %v601, 4
        %v608 = vrot.slane %v602, 4
        %v609 = vsel %vm371, %v607, %v608
        %v610 = vrot.slane %v603, 4
        %v611 = vsel %vm371, %v608, %v610
        %v614 = vadd.f32 %v597, %v609
        %v615 = vadd.f32 %v598, %v611
        %s616 = sld [smem:[#allocation4 + $0x24]]
        %v617 = vstv %s616
        %v618 = vmul.f32 %v240, %v617
        %v619 = vmul.f32 %v241, %v617
        %v620 = vmul.f32 %v242, %v617
        %v624 = vrot.slane %v618, 5
        %v625 = vrot.slane %v619, 5
        %v626 = vsel %vm406, %v624, %v625
        %v627 = vrot.slane %v620, 5
        %v628 = vsel %vm406, %v625, %v627
        %v631 = vadd.f32 %v614, %v626
        %v632 = vadd.f32 %v615, %v628
        %s633 = sld [smem:[#allocation4 + $0x55]]
        %v634 = vstv %s633
        %v635 = vmul.f32 %v243, %v634
        %v636 = vmul.f32 %v244, %v634
        %v637 = vmul.f32 %v245, %v634
        %v641 = vrot.slane %v635, 5
        %v642 = vrot.slane %v636, 5
        %v643 = vsel %vm406, %v641, %v642
        %v644 = vrot.slane %v637, 5
        %v645 = vsel %vm406, %v642, %v644
        %v648 = vadd.f32 %v631, %v643
        %v649 = vadd.f32 %v632, %v645
        %s650 = sld [smem:[#allocation4 + $0x2b]]
        %v651 = vstv %s650
        %v652 = vmul.f32 %v240, %v651
        %v653 = vmul.f32 %v241, %v651
        %v654 = vmul.f32 %v242, %v651
        %v658 = vrot.slane %v652, 6
        %v659 = vrot.slane %v653, 6
        %v660 = vsel %vm441, %v658, %v659
        %v661 = vrot.slane %v654, 6
        %v662 = vsel %vm441, %v659, %v661
        %v665 = vadd.f32 %v648, %v660
        %v666 = vadd.f32 %v649, %v662
        %s667 = sld [smem:[#allocation4 + $0x5c]]
        %v668 = vstv %s667
        %v669 = vmul.f32 %v243, %v668
        %v670 = vmul.f32 %v244, %v668
        %v671 = vmul.f32 %v245, %v668
        %v675 = vrot.slane %v669, 6
        %v676 = vrot.slane %v670, 6
        %v677 = vsel %vm441, %v675, %v676
        %v678 = vrot.slane %v671, 6
        %v679 = vsel %vm441, %v676, %v678
        %v682 = vadd.f32 %v665, %v677
        %v683 = vadd.f32 %v666, %v679
        %s684 = sld [smem:[#allocation4 + $0x2]]
        %v685 = vstv %s684
        %v686 = vmul.f32 %v240, %v685
        %v687 = vmul.f32 %v241, %v685
        %v688 = vadd.f32 %v686, 0.0
        %v689 = vadd.f32 %v687, 0.0
        %s690 = sld [smem:[#allocation4 + $0x33]]
        %v691 = vstv %s690
        %v692 = vmul.f32 %v243, %v691
        %v693 = vmul.f32 %v244, %v691
        %v694 = vadd.f32 %v688, %v692
        %v695 = vadd.f32 %v689, %v693
        %s696 = sld [smem:[#allocation4 + $0x9]]
        %v697 = vstv %s696
        %v698 = vmul.f32 %v240, %v697
        %v699 = vmul.f32 %v241, %v697
        %v700 = vmul.f32 %v242, %v697
        %v704 = vrot.slane %v698, 1
        %v705 = vrot.slane %v699, 1
        %v706 = vsel %vm266, %v704, %v705
        %v707 = vrot.slane %v700, 1
        %v708 = vsel %vm266, %v705, %v707
        %v711 = vadd.f32 %v694, %v706
        %v712 = vadd.f32 %v695, %v708
        %s713 = sld [smem:[#allocation4 + $0x3a]]
        %v714 = vstv %s713
        %v715 = vmul.f32 %v243, %v714
        %v716 = vmul.f32 %v244, %v714
        %v717 = vmul.f32 %v245, %v714
        %v721 = vrot.slane %v715, 1
        %v722 = vrot.slane %v716, 1
        %v723 = vsel %vm266, %v721, %v722
        %v724 = vrot.slane %v717, 1
        %v725 = vsel %vm266, %v722, %v724
        %v728 = vadd.f32 %v711, %v723
        %v729 = vadd.f32 %v712, %v725
        %s730 = sld [smem:[#allocation4 + $0x10]]
        %v731 = vstv %s730
        %v732 = vmul.f32 %v240, %v731
        %v733 = vmul.f32 %v241, %v731
        %v734 = vmul.f32 %v242, %v731
        %v738 = vrot.slane %v732, 2
        %v739 = vrot.slane %v733, 2
        %v740 = vsel %vm301, %v738, %v739
        %v741 = vrot.slane %v734, 2
        %v742 = vsel %vm301, %v739, %v741
        %v745 = vadd.f32 %v728, %v740
        %v746 = vadd.f32 %v729, %v742
        %s747 = sld [smem:[#allocation4 + $0x41]]
        %v748 = vstv %s747
        %v749 = vmul.f32 %v243, %v748
        %v750 = vmul.f32 %v244, %v748
        %v751 = vmul.f32 %v245, %v748
        %v755 = vrot.slane %v749, 2
        %v756 = vrot.slane %v750, 2
        %v757 = vsel %vm301, %v755, %v756
        %v758 = vrot.slane %v751, 2
        %v759 = vsel %vm301, %v756, %v758
        %v762 = vadd.f32 %v745, %v757
        %v763 = vadd.f32 %v746, %v759
        %s764 = sld [smem:[#allocation4 + $0x17]]
        %v765 = vstv %s764
        %v766 = vmul.f32 %v240, %v765
        %v767 = vmul.f32 %v241, %v765
        %v768 = vmul.f32 %v242, %v765
        %v772 = vrot.slane %v766, 3
        %v773 = vrot.slane %v767, 3
        %v774 = vsel %vm336, %v772, %v773
        %v775 = vrot.slane %v768, 3
        %v776 = vsel %vm336, %v773, %v775
        %v779 = vadd.f32 %v762, %v774
        %v780 = vadd.f32 %v763, %v776
        %s781 = sld [smem:[#allocation4 + $0x48]]
        %v782 = vstv %s781
        %v783 = vmul.f32 %v243, %v782
        %v784 = vmul.f32 %v244, %v782
        %v785 = vmul.f32 %v245, %v782
        %v789 = vrot.slane %v783, 3
        %v790 = vrot.slane %v784, 3
        %v791 = vsel %vm336, %v789, %v790
        %v792 = vrot.slane %v785, 3
        %v793 = vsel %vm336, %v790, %v792
        %v796 = vadd.f32 %v779, %v791
        %v797 = vadd.f32 %v780, %v793
        %s798 = sld [smem:[#allocation4 + $0x1e]]
        %v799 = vstv %s798
        %v800 = vmul.f32 %v240, %v799
        %v801 = vmul.f32 %v241, %v799
        %v802 = vmul.f32 %v242, %v799
        %v806 = vrot.slane %v800, 4
        %v807 = vrot.slane %v801, 4
        %v808 = vsel %vm371, %v806, %v807
        %v809 = vrot.slane %v802, 4
        %v810 = vsel %vm371, %v807, %v809
        %v813 = vadd.f32 %v796, %v808
        %v814 = vadd.f32 %v797, %v810
        %s815 = sld [smem:[#allocation4 + $0x4f]]
        %v816 = vstv %s815
        %v817 = vmul.f32 %v243, %v816
        %v818 = vmul.f32 %v244, %v816
        %v819 = vmul.f32 %v245, %v816
        %v823 = vrot.slane %v817, 4
        %v824 = vrot.slane %v818, 4
        %v825 = vsel %vm371, %v823, %v824
        %v826 = vrot.slane %v819, 4
        %v827 = vsel %vm371, %v824, %v826
        %v830 = vadd.f32 %v813, %v825
        %v831 = vadd.f32 %v814, %v827
        %s832 = sld [smem:[#allocation4 + $0x25]]
        %v833 = vstv %s832
        %v834 = vmul.f32 %v240, %v833
        %v835 = vmul.f32 %v241, %v833
        %v836 = vmul.f32 %v242, %v833
        %v840 = vrot.slane %v834, 5
        %v841 = vrot.slane %v835, 5
        %v842 = vsel %vm406, %v840, %v841
        %v843 = vrot.slane %v836, 5
        %v844 = vsel %vm406, %v841, %v843
        %v847 = vadd.f32 %v830, %v842
        %v848 = vadd.f32 %v831, %v844
        %s849 = sld [smem:[#allocation4 + $0x56]]
        %v850 = vstv %s849
        %v851 = vmul.f32 %v243, %v850
        %v852 = vmul.f32 %v244, %v850
        %v853 = vmul.f32 %v245, %v850
        %v857 = vrot.slane %v851, 5
        %v858 = vrot.slane %v852, 5
        %v859 = vsel %vm406, %v857, %v858
        %v860 = vrot.slane %v853, 5
        %v861 = vsel %vm406, %v858, %v860
        %v864 = vadd.f32 %v847, %v859
        %v865 = vadd.f32 %v848, %v861
        %s866 = sld [smem:[#allocation4 + $0x2c]]
        %v867 = vstv %s866
        %v868 = vmul.f32 %v240, %v867
        %v869 = vmul.f32 %v241, %v867
        %v870 = vmul.f32 %v242, %v867
        %v874 = vrot.slane %v868, 6
        %v875 = vrot.slane %v869, 6
        %v876 = vsel %vm441, %v874, %v875
        %v877 = vrot.slane %v870, 6
        %v878 = vsel %vm441, %v875, %v877
        %v881 = vadd.f32 %v864, %v876
        %v882 = vadd.f32 %v865, %v878
        %s883 = sld [smem:[#allocation4 + $0x5d]]
        %v884 = vstv %s883
        %v885 = vmul.f32 %v243, %v884
        %v886 = vmul.f32 %v244, %v884
        %v887 = vmul.f32 %v245, %v884
        %v891 = vrot.slane %v885, 6
        %v892 = vrot.slane %v886, 6
        %v893 = vsel %vm441, %v891, %v892
        %v894 = vrot.slane %v887, 6
        %v895 = vsel %vm441, %v892, %v894
        %v898 = vadd.f32 %v881, %v893
        %v899 = vadd.f32 %v882, %v895
        %s900 = sld [smem:[#allocation4 + $0x3]]
        %v901 = vstv %s900
        %v902 = vmul.f32 %v240, %v901
        %v903 = vmul.f32 %v241, %v901
        %v904 = vadd.f32 %v902, 0.0
        %v905 = vadd.f32 %v903, 0.0
        %s906 = sld [smem:[#allocation4 + $0x34]]
        %v907 = vstv %s906
        %v908 = vmul.f32 %v243, %v907
        %v909 = vmul.f32 %v244, %v907
        %v910 = vadd.f32 %v904, %v908
        %v911 = vadd.f32 %v905, %v909
        %s912 = sld [smem:[#allocation4 + $0xa]]
        %v913 = vstv %s912
        %v914 = vmul.f32 %v240, %v913
        %v915 = vmul.f32 %v241, %v913
        %v916 = vmul.f32 %v242, %v913
        %v920 = vrot.slane %v914, 1
        %v921 = vrot.slane %v915, 1
        %v922 = vsel %vm266, %v920, %v921
        %v923 = vrot.slane %v916, 1
        %v924 = vsel %vm266, %v921, %v923
        %v927 = vadd.f32 %v910, %v922
        %v928 = vadd.f32 %v911, %v924
        %s929 = sld [smem:[#allocation4 + $0x3b]]
        %v930 = vstv %s929
        %v931 = vmul.f32 %v243, %v930
        %v932 = vmul.f32 %v244, %v930
        %v933 = vmul.f32 %v245, %v930
        %v937 = vrot.slane %v931, 1
        %v938 = vrot.slane %v932, 1
        %v939 = vsel %vm266, %v937, %v938
        %v940 = vrot.slane %v933, 1
        %v941 = vsel %vm266, %v938, %v940
        %v944 = vadd.f32 %v927, %v939
        %v945 = vadd.f32 %v928, %v941
        %s946 = sld [smem:[#allocation4 + $0x11]]
        %v947 = vstv %s946
        %v948 = vmul.f32 %v240, %v947
        %v949 = vmul.f32 %v241, %v947
        %v950 = vmul.f32 %v242, %v947
        %v954 = vrot.slane %v948, 2
        %v955 = vrot.slane %v949, 2
        %v956 = vsel %vm301, %v954, %v955
        %v957 = vrot.slane %v950, 2
        %v958 = vsel %vm301, %v955, %v957
        %v961 = vadd.f32 %v944, %v956
        %v962 = vadd.f32 %v945, %v958
        %s963 = sld [smem:[#allocation4 + $0x42]]
        %v964 = vstv %s963
        %v965 = vmul.f32 %v243, %v964
        %v966 = vmul.f32 %v244, %v964
        %v967 = vmul.f32 %v245, %v964
        %v971 = vrot.slane %v965, 2
        %v972 = vrot.slane %v966, 2
        %v973 = vsel %vm301, %v971, %v972
        %v974 = vrot.slane %v967, 2
        %v975 = vsel %vm301, %v972, %v974
        %v978 = vadd.f32 %v961, %v973
        %v979 = vadd.f32 %v962, %v975
        %s980 = sld [smem:[#allocation4 + $0x18]]
        %v981 = vstv %s980
        %v982 = vmul.f32 %v240, %v981
        %v983 = vmul.f32 %v241, %v981
        %v984 = vmul.f32 %v242, %v981
        %v988 = vrot.slane %v982, 3
        %v989 = vrot.slane %v983, 3
        %v990 = vsel %vm336, %v988, %v989
        %v991 = vrot.slane %v984, 3
        %v992 = vsel %vm336, %v989, %v991
        %v995 = vadd.f32 %v978, %v990
        %v996 = vadd.f32 %v979, %v992
        %s997 = sld [smem:[#allocation4 + $0x49]]
        %v998 = vstv %s997
        %v999 = vmul.f32 %v243, %v998
        %v1000 = vmul.f32 %v244, %v998
        %v1001 = vmul.f32 %v245, %v998
        %v1005 = vrot.slane %v999, 3
        %v1006 = vrot.slane %v1000, 3
        %v1007 = vsel %vm336, %v1005, %v1006
        %v1008 = vrot.slane %v1001, 3
        %v1009 = vsel %vm336, %v1006, %v1008
        %v1012 = vadd.f32 %v995, %v1007
        %v1013 = vadd.f32 %v996, %v1009
        %s1014 = sld [smem:[#allocation4 + $0x1f]]
        %v1015 = vstv %s1014
        %v1016 = vmul.f32 %v240, %v1015
        %v1017 = vmul.f32 %v241, %v1015
        %v1018 = vmul.f32 %v242, %v1015
        %v1022 = vrot.slane %v1016, 4
        %v1023 = vrot.slane %v1017, 4
        %v1024 = vsel %vm371, %v1022, %v1023
        %v1025 = vrot.slane %v1018, 4
        %v1026 = vsel %vm371, %v1023, %v1025
        %v1029 = vadd.f32 %v1012, %v1024
        %v1030 = vadd.f32 %v1013, %v1026
        %s1031 = sld [smem:[#allocation4 + $0x50]]
        %v1032 = vstv %s1031
        %v1033 = vmul.f32 %v243, %v1032
        %v1034 = vmul.f32 %v244, %v1032
        %v1035 = vmul.f32 %v245, %v1032
        %v1039 = vrot.slane %v1033, 4
        %v1040 = vrot.slane %v1034, 4
        %v1041 = vsel %vm371, %v1039, %v1040
        %v1042 = vrot.slane %v1035, 4
        %v1043 = vsel %vm371, %v1040, %v1042
        %v1046 = vadd.f32 %v1029, %v1041
        %v1047 = vadd.f32 %v1030, %v1043
        %s1048 = sld [smem:[#allocation4 + $0x26]]
        %v1049 = vstv %s1048
        %v1050 = vmul.f32 %v240, %v1049
        %v1051 = vmul.f32 %v241, %v1049
        %v1052 = vmul.f32 %v242, %v1049
        %v1056 = vrot.slane %v1050, 5
        %v1057 = vrot.slane %v1051, 5
        %v1058 = vsel %vm406, %v1056, %v1057
        %v1059 = vrot.slane %v1052, 5
        %v1060 = vsel %vm406, %v1057, %v1059
        %v1063 = vadd.f32 %v1046, %v1058
        %v1064 = vadd.f32 %v1047, %v1060
        %s1065 = sld [smem:[#allocation4 + $0x57]]
        %v1066 = vstv %s1065
        %v1067 = vmul.f32 %v243, %v1066
        %v1068 = vmul.f32 %v244, %v1066
        %v1069 = vmul.f32 %v245, %v1066
        %v1073 = vrot.slane %v1067, 5
        %v1074 = vrot.slane %v1068, 5
        %v1075 = vsel %vm406, %v1073, %v1074
        %v1076 = vrot.slane %v1069, 5
        %v1077 = vsel %vm406, %v1074, %v1076
        %v1080 = vadd.f32 %v1063, %v1075
        %v1081 = vadd.f32 %v1064, %v1077
        %s1082 = sld [smem:[#allocation4 + $0x2d]]
        %v1083 = vstv %s1082
        %v1084 = vmul.f32 %v240, %v1083
        %v1085 = vmul.f32 %v241, %v1083
        %v1086 = vmul.f32 %v242, %v1083
        %v1090 = vrot.slane %v1084, 6
        %v1091 = vrot.slane %v1085, 6
        %v1092 = vsel %vm441, %v1090, %v1091
        %v1093 = vrot.slane %v1086, 6
        %v1094 = vsel %vm441, %v1091, %v1093
        %v1097 = vadd.f32 %v1080, %v1092
        %v1098 = vadd.f32 %v1081, %v1094
        %s1099 = sld [smem:[#allocation4 + $0x5e]]
        %v1100 = vstv %s1099
        %v1101 = vmul.f32 %v243, %v1100
        %v1102 = vmul.f32 %v244, %v1100
        %v1103 = vmul.f32 %v245, %v1100
        %v1107 = vrot.slane %v1101, 6
        %v1108 = vrot.slane %v1102, 6
        %v1109 = vsel %vm441, %v1107, %v1108
        %v1110 = vrot.slane %v1103, 6
        %v1111 = vsel %vm441, %v1108, %v1110
        %v1114 = vadd.f32 %v1097, %v1109
        %v1115 = vadd.f32 %v1098, %v1111
        %s1116 = sld [smem:[#allocation4 + $0x4]]
        %v1117 = vstv %s1116
        %v1118 = vmul.f32 %v240, %v1117
        %v1119 = vmul.f32 %v241, %v1117
        %1122 = vrot.lane.b32.xlu0 %v1118, 124
        %v1123 = vpop.permute.xlu0 %1122
        %1124 = vrot.lane.b32.xlu0 %v1119, 124
        %v1125 = vpop.permute.xlu0 %1124
        %v1128 = vadd.f32 %v466, %v1123
        %v1129 = vadd.f32 %v467, %v1125
        %s1130 = sld [smem:[#allocation4 + $0x35]]
        %v1131 = vstv %s1130
        %v1132 = vmul.f32 %v243, %v1131
        %v1133 = vmul.f32 %v244, %v1131
        %1136 = vrot.lane.b32.xlu0 %v1132, 124
        %v1137 = vpop.permute.xlu0 %1136
        %1138 = vrot.lane.b32.xlu0 %v1133, 124
        %v1139 = vpop.permute.xlu0 %1138
        %v1142 = vadd.f32 %v1128, %v1137
        %v1143 = vadd.f32 %v1129, %v1139
        %s1144 = sld [smem:[#allocation4 + $0xb]]
        %v1145 = vstv %s1144
        %v1146 = vmul.f32 %v240, %v1145
        %v1147 = vmul.f32 %v241, %v1145
        %v1148 = vmul.f32 %v242, %v1145
        %v1152 = vrot.slane %v1146, 1
        %v1153 = vrot.slane %v1147, 1
        %v1154 = vsel %vm266, %v1152, %v1153
        %v1155 = vrot.slane %v1148, 1
        %v1156 = vsel %vm266, %v1153, %v1155
        %1157 = vrot.lane.b32.xlu0 %v1154, 124
        %v1158 = vpop.permute.xlu0 %1157
        %1159 = vrot.lane.b32.xlu0 %v1156, 124
        %v1160 = vpop.permute.xlu0 %1159
        %v1163 = vadd.f32 %v1142, %v1158
        %v1164 = vadd.f32 %v1143, %v1160
        %s1165 = sld [smem:[#allocation4 + $0x3c]]
        %v1166 = vstv %s1165
        %v1167 = vmul.f32 %v243, %v1166
        %v1168 = vmul.f32 %v244, %v1166
        %v1169 = vmul.f32 %v245, %v1166
        %v1173 = vrot.slane %v1167, 1
        %v1174 = vrot.slane %v1168, 1
        %v1175 = vsel %vm266, %v1173, %v1174
        %v1176 = vrot.slane %v1169, 1
        %v1177 = vsel %vm266, %v1174, %v1176
        %1178 = vrot.lane.b32.xlu0 %v1175, 124
        %v1179 = vpop.permute.xlu0 %1178
        %1180 = vrot.lane.b32.xlu0 %v1177, 124
        %v1181 = vpop.permute.xlu0 %1180
        %v1184 = vadd.f32 %v1163, %v1179
        %v1185 = vadd.f32 %v1164, %v1181
        %s1186 = sld [smem:[#allocation4 + $0x12]]
        %v1187 = vstv %s1186
        %v1188 = vmul.f32 %v240, %v1187
        %v1189 = vmul.f32 %v241, %v1187
        %v1190 = vmul.f32 %v242, %v1187
        %v1194 = vrot.slane %v1188, 2
        %v1195 = vrot.slane %v1189, 2
        %v1196 = vsel %vm301, %v1194, %v1195
        %v1197 = vrot.slane %v1190, 2
        %v1198 = vsel %vm301, %v1195, %v1197
        %1199 = vrot.lane.b32.xlu0 %v1196, 124
        %v1200 = vpop.permute.xlu0 %1199
        %1201 = vrot.lane.b32.xlu0 %v1198, 124
        %v1202 = vpop.permute.xlu0 %1201
        %v1205 = vadd.f32 %v1184, %v1200
        %v1206 = vadd.f32 %v1185, %v1202
        %s1207 = sld [smem:[#allocation4 + $0x43]]
        %v1208 = vstv %s1207
        %v1209 = vmul.f32 %v243, %v1208
        %v1210 = vmul.f32 %v244, %v1208
        %v1211 = vmul.f32 %v245, %v1208
        %v1215 = vrot.slane %v1209, 2
        %v1216 = vrot.slane %v1210, 2
        %v1217 = vsel %vm301, %v1215, %v1216
        %v1218 = vrot.slane %v1211, 2
        %v1219 = vsel %vm301, %v1216, %v1218
        %1220 = vrot.lane.b32.xlu0 %v1217, 124
        %v1221 = vpop.permute.xlu0 %1220
        %1222 = vrot.lane.b32.xlu0 %v1219, 124
        %v1223 = vpop.permute.xlu0 %1222
        %v1226 = vadd.f32 %v1205, %v1221
        %v1227 = vadd.f32 %v1206, %v1223
        %s1228 = sld [smem:[#allocation4 + $0x19]]
        %v1229 = vstv %s1228
        %v1230 = vmul.f32 %v240, %v1229
        %v1231 = vmul.f32 %v241, %v1229
        %v1232 = vmul.f32 %v242, %v1229
        %v1236 = vrot.slane %v1230, 3
        %v1237 = vrot.slane %v1231, 3
        %v1238 = vsel %vm336, %v1236, %v1237
        %v1239 = vrot.slane %v1232, 3
        %v1240 = vsel %vm336, %v1237, %v1239
        %1241 = vrot.lane.b32.xlu0 %v1238, 124
        %v1242 = vpop.permute.xlu0 %1241
        %1243 = vrot.lane.b32.xlu0 %v1240, 124
        %v1244 = vpop.permute.xlu0 %1243
        %v1247 = vadd.f32 %v1226, %v1242
        %v1248 = vadd.f32 %v1227, %v1244
        %s1249 = sld [smem:[#allocation4 + $0x4a]]
        %v1250 = vstv %s1249
        %v1251 = vmul.f32 %v243, %v1250
        %v1252 = vmul.f32 %v244, %v1250
        %v1253 = vmul.f32 %v245, %v1250
        %v1257 = vrot.slane %v1251, 3
        %v1258 = vrot.slane %v1252, 3
        %v1259 = vsel %vm336, %v1257, %v1258
        %v1260 = vrot.slane %v1253, 3
        %v1261 = vsel %vm336, %v1258, %v1260
        %1262 = vrot.lane.b32.xlu0 %v1259, 124
        %v1263 = vpop.permute.xlu0 %1262
        %1264 = vrot.lane.b32.xlu0 %v1261, 124
        %v1265 = vpop.permute.xlu0 %1264
        %v1268 = vadd.f32 %v1247, %v1263
        %v1269 = vadd.f32 %v1248, %v1265
        %s1270 = sld [smem:[#allocation4 + $0x20]]
        %v1271 = vstv %s1270
        %v1272 = vmul.f32 %v240, %v1271
        %v1273 = vmul.f32 %v241, %v1271
        %v1274 = vmul.f32 %v242, %v1271
        %v1278 = vrot.slane %v1272, 4
        %v1279 = vrot.slane %v1273, 4
        %v1280 = vsel %vm371, %v1278, %v1279
        %v1281 = vrot.slane %v1274, 4
        %v1282 = vsel %vm371, %v1279, %v1281
        %1283 = vrot.lane.b32.xlu0 %v1280, 124
        %v1284 = vpop.permute.xlu0 %1283
        %1285 = vrot.lane.b32.xlu0 %v1282, 124
        %v1286 = vpop.permute.xlu0 %1285
        %v1289 = vadd.f32 %v1268, %v1284
        %v1290 = vadd.f32 %v1269, %v1286
        %s1291 = sld [smem:[#allocation4 + $0x51]]
        %v1292 = vstv %s1291
        %v1293 = vmul.f32 %v243, %v1292
        %v1294 = vmul.f32 %v244, %v1292
        %v1295 = vmul.f32 %v245, %v1292
        %v1299 = vrot.slane %v1293, 4
        %v1300 = vrot.slane %v1294, 4
        %v1301 = vsel %vm371, %v1299, %v1300
        %v1302 = vrot.slane %v1295, 4
        %v1303 = vsel %vm371, %v1300, %v1302
        %1304 = vrot.lane.b32.xlu0 %v1301, 124
        %v1305 = vpop.permute.xlu0 %1304
        %1306 = vrot.lane.b32.xlu0 %v1303, 124
        %v1307 = vpop.permute.xlu0 %1306
        %v1310 = vadd.f32 %v1289, %v1305
        %v1311 = vadd.f32 %v1290, %v1307
        %s1312 = sld [smem:[#allocation4 + $0x27]]
        %v1313 = vstv %s1312
        %v1314 = vmul.f32 %v240, %v1313
        %v1315 = vmul.f32 %v241, %v1313
        %v1316 = vmul.f32 %v242, %v1313
        %v1320 = vrot.slane %v1314, 5
        %v1321 = vrot.slane %v1315, 5
        %v1322 = vsel %vm406, %v1320, %v1321
        %v1323 = vrot.slane %v1316, 5
        %v1324 = vsel %vm406, %v1321, %v1323
        %1325 = vrot.lane.b32.xlu0 %v1322, 124
        %v1326 = vpop.permute.xlu0 %1325
        %1327 = vrot.lane.b32.xlu0 %v1324, 124
        %v1328 = vpop.permute.xlu0 %1327
        %v1331 = vadd.f32 %v1310, %v1326
        %v1332 = vadd.f32 %v1311, %v1328
        %s1333 = sld [smem:[#allocation4 + $0x58]]
        %v1334 = vstv %s1333
        %v1335 = vmul.f32 %v243, %v1334
        %v1336 = vmul.f32 %v244, %v1334
        %v1337 = vmul.f32 %v245, %v1334
        %v1341 = vrot.slane %v1335, 5
        %v1342 = vrot.slane %v1336, 5
        %v1343 = vsel %vm406, %v1341, %v1342
        %v1344 = vrot.slane %v1337, 5
        %v1345 = vsel %vm406, %v1342, %v1344
        %1346 = vrot.lane.b32.xlu0 %v1343, 124
        %v1347 = vpop.permute.xlu0 %1346
        %1348 = vrot.lane.b32.xlu0 %v1345, 124
        %v1349 = vpop.permute.xlu0 %1348
        %v1352 = vadd.f32 %v1331, %v1347
        %v1353 = vadd.f32 %v1332, %v1349
        %s1354 = sld [smem:[#allocation4 + $0x2e]]
        %v1355 = vstv %s1354
        %v1356 = vmul.f32 %v240, %v1355
        %v1357 = vmul.f32 %v241, %v1355
        %v1358 = vmul.f32 %v242, %v1355
        %v1362 = vrot.slane %v1356, 6
        %v1363 = vrot.slane %v1357, 6
        %v1364 = vsel %vm441, %v1362, %v1363
        %v1365 = vrot.slane %v1358, 6
        %v1366 = vsel %vm441, %v1363, %v1365
        %1367 = vrot.lane.b32.xlu0 %v1364, 124
        %v1368 = vpop.permute.xlu0 %1367
        %1369 = vrot.lane.b32.xlu0 %v1366, 124
        %v1370 = vpop.permute.xlu0 %1369
        %v1373 = vadd.f32 %v1352, %v1368
        %v1374 = vadd.f32 %v1353, %v1370
        %s1375 = sld [smem:[#allocation4 + $0x5f]]
        %v1376 = vstv %s1375
        %v1377 = vmul.f32 %v243, %v1376
        %v1378 = vmul.f32 %v244, %v1376
        %v1379 = vmul.f32 %v245, %v1376
        %v1383 = vrot.slane %v1377, 6
        %v1384 = vrot.slane %v1378, 6
        %v1385 = vsel %vm441, %v1383, %v1384
        %v1386 = vrot.slane %v1379, 6
        %v1387 = vsel %vm441, %v1384, %v1386
        %1388 = vrot.lane.b32.xlu0 %v1385, 124
        %v1389 = vpop.permute.xlu0 %1388
        %1390 = vrot.lane.b32.xlu0 %v1387, 124
        %v1391 = vpop.permute.xlu0 %1390
        %v1394 = vadd.f32 %v1373, %v1389
        %v1395 = vadd.f32 %v1374, %v1391
        %s1396 = sld [smem:[#allocation4 + $0x5]]
        %v1397 = vstv %s1396
        %v1398 = vmul.f32 %v240, %v1397
        %v1399 = vmul.f32 %v241, %v1397
        %1402 = vrot.lane.b32.xlu0 %v1398, 124
        %v1403 = vpop.permute.xlu0 %1402
        %1404 = vrot.lane.b32.xlu0 %v1399, 124
        %v1405 = vpop.permute.xlu0 %1404
        %v1408 = vadd.f32 %v682, %v1403
        %v1409 = vadd.f32 %v683, %v1405
        %s1410 = sld [smem:[#allocation4 + $0x36]]
        %v1411 = vstv %s1410
        %v1412 = vmul.f32 %v243, %v1411
        %v1413 = vmul.f32 %v244, %v1411
        %1416 = vrot.lane.b32.xlu0 %v1412, 124
        %v1417 = vpop.permute.xlu0 %1416
        %1418 = vrot.lane.b32.xlu0 %v1413, 124
        %v1419 = vpop.permute.xlu0 %1418
        %v1422 = vadd.f32 %v1408, %v1417
        %v1423 = vadd.f32 %v1409, %v1419
        %s1424 = sld [smem:[#allocation4 + $0xc]]
        %v1425 = vstv %s1424
        %v1426 = vmul.f32 %v240, %v1425
        %v1427 = vmul.f32 %v241, %v1425
        %v1428 = vmul.f32 %v242, %v1425
        %v1432 = vrot.slane %v1426, 1
        %v1433 = vrot.slane %v1427, 1
        %v1434 = vsel %vm266, %v1432, %v1433
        %v1435 = vrot.slane %v1428, 1
        %v1436 = vsel %vm266, %v1433, %v1435
        %1437 = vrot.lane.b32.xlu0 %v1434, 124
        %v1438 = vpop.permute.xlu0 %1437
        %1439 = vrot.lane.b32.xlu0 %v1436, 124
        %v1440 = vpop.permute.xlu0 %1439
        %v1443 = vadd.f32 %v1422, %v1438
        %v1444 = vadd.f32 %v1423, %v1440
        %s1445 = sld [smem:[#allocation4 + $0x3d]]
        %v1446 = vstv %s1445
        %v1447 = vmul.f32 %v243, %v1446
        %v1448 = vmul.f32 %v244, %v1446
        %v1449 = vmul.f32 %v245, %v1446
        %v1453 = vrot.slane %v1447, 1
        %v1454 = vrot.slane %v1448, 1
        %v1455 = vsel %vm266, %v1453, %v1454
        %v1456 = vrot.slane %v1449, 1
        %v1457 = vsel %vm266, %v1454, %v1456
        %1458 = vrot.lane.b32.xlu0 %v1455, 124
        %v1459 = vpop.permute.xlu0 %1458
        %1460 = vrot.lane.b32.xlu0 %v1457, 124
        %v1461 = vpop.permute.xlu0 %1460
        %v1464 = vadd.f32 %v1443, %v1459
        %v1465 = vadd.f32 %v1444, %v1461
        %s1466 = sld [smem:[#allocation4 + $0x13]]
        %v1467 = vstv %s1466
        %v1468 = vmul.f32 %v240, %v1467
        %v1469 = vmul.f32 %v241, %v1467
        %v1470 = vmul.f32 %v242, %v1467
        %v1474 = vrot.slane %v1468, 2
        %v1475 = vrot.slane %v1469, 2
        %v1476 = vsel %vm301, %v1474, %v1475
        %v1477 = vrot.slane %v1470, 2
        %v1478 = vsel %vm301, %v1475, %v1477
        %1479 = vrot.lane.b32.xlu0 %v1476, 124
        %v1480 = vpop.permute.xlu0 %1479
        %1481 = vrot.lane.b32.xlu0 %v1478, 124
        %v1482 = vpop.permute.xlu0 %1481
        %v1485 = vadd.f32 %v1464, %v1480
        %v1486 = vadd.f32 %v1465, %v1482
        %s1487 = sld [smem:[#allocation4 + $0x44]]
        %v1488 = vstv %s1487
        %v1489 = vmul.f32 %v243, %v1488
        %v1490 = vmul.f32 %v244, %v1488
        %v1491 = vmul.f32 %v245, %v1488
        %v1495 = vrot.slane %v1489, 2
        %v1496 = vrot.slane %v1490, 2
        %v1497 = vsel %vm301, %v1495, %v1496
        %v1498 = vrot.slane %v1491, 2
        %v1499 = vsel %vm301, %v1496, %v1498
        %1500 = vrot.lane.b32.xlu0 %v1497, 124
        %v1501 = vpop.permute.xlu0 %1500
        %1502 = vrot.lane.b32.xlu0 %v1499, 124
        %v1503 = vpop.permute.xlu0 %1502
        %v1506 = vadd.f32 %v1485, %v1501
        %v1507 = vadd.f32 %v1486, %v1503
        %s1508 = sld [smem:[#allocation4 + $0x1a]]
        %v1509 = vstv %s1508
        %v1510 = vmul.f32 %v240, %v1509
        %v1511 = vmul.f32 %v241, %v1509
        %v1512 = vmul.f32 %v242, %v1509
        %v1516 = vrot.slane %v1510, 3
        %v1517 = vrot.slane %v1511, 3
        %v1518 = vsel %vm336, %v1516, %v1517
        %v1519 = vrot.slane %v1512, 3
        %v1520 = vsel %vm336, %v1517, %v1519
        %1521 = vrot.lane.b32.xlu0 %v1518, 124
        %v1522 = vpop.permute.xlu0 %1521
        %1523 = vrot.lane.b32.xlu0 %v1520, 124
        %v1524 = vpop.permute.xlu0 %1523
        %v1527 = vadd.f32 %v1506, %v1522
        %v1528 = vadd.f32 %v1507, %v1524
        %s1529 = sld [smem:[#allocation4 + $0x4b]]
        %v1530 = vstv %s1529
        %v1531 = vmul.f32 %v243, %v1530
        %v1532 = vmul.f32 %v244, %v1530
        %v1533 = vmul.f32 %v245, %v1530
        %v1537 = vrot.slane %v1531, 3
        %v1538 = vrot.slane %v1532, 3
        %v1539 = vsel %vm336, %v1537, %v1538
        %v1540 = vrot.slane %v1533, 3
        %v1541 = vsel %vm336, %v1538, %v1540
        %1542 = vrot.lane.b32.xlu0 %v1539, 124
        %v1543 = vpop.permute.xlu0 %1542
        %1544 = vrot.lane.b32.xlu0 %v1541, 124
        %v1545 = vpop.permute.xlu0 %1544
        %v1548 = vadd.f32 %v1527, %v1543
        %v1549 = vadd.f32 %v1528, %v1545
        %s1550 = sld [smem:[#allocation4 + $0x21]]
        %v1551 = vstv %s1550
        %v1552 = vmul.f32 %v240, %v1551
        %v1553 = vmul.f32 %v241, %v1551
        %v1554 = vmul.f32 %v242, %v1551
        %v1558 = vrot.slane %v1552, 4
        %v1559 = vrot.slane %v1553, 4
        %v1560 = vsel %vm371, %v1558, %v1559
        %v1561 = vrot.slane %v1554, 4
        %v1562 = vsel %vm371, %v1559, %v1561
        %1563 = vrot.lane.b32.xlu0 %v1560, 124
        %v1564 = vpop.permute.xlu0 %1563
        %1565 = vrot.lane.b32.xlu0 %v1562, 124
        %v1566 = vpop.permute.xlu0 %1565
        %v1569 = vadd.f32 %v1548, %v1564
        %v1570 = vadd.f32 %v1549, %v1566
        %s1571 = sld [smem:[#allocation4 + $0x52]]
        %v1572 = vstv %s1571
        %v1573 = vmul.f32 %v243, %v1572
        %v1574 = vmul.f32 %v244, %v1572
        %v1575 = vmul.f32 %v245, %v1572
        %v1579 = vrot.slane %v1573, 4
        %v1580 = vrot.slane %v1574, 4
        %v1581 = vsel %vm371, %v1579, %v1580
        %v1582 = vrot.slane %v1575, 4
        %v1583 = vsel %vm371, %v1580, %v1582
        %1584 = vrot.lane.b32.xlu0 %v1581, 124
        %v1585 = vpop.permute.xlu0 %1584
        %1586 = vrot.lane.b32.xlu0 %v1583, 124
        %v1587 = vpop.permute.xlu0 %1586
        %v1590 = vadd.f32 %v1569, %v1585
        %v1591 = vadd.f32 %v1570, %v1587
        %s1592 = sld [smem:[#allocation4 + $0x28]]
        %v1593 = vstv %s1592
        %v1594 = vmul.f32 %v240, %v1593
        %v1595 = vmul.f32 %v241, %v1593
        %v1596 = vmul.f32 %v242, %v1593
        %v1600 = vrot.slane %v1594, 5
        %v1601 = vrot.slane %v1595, 5
        %v1602 = vsel %vm406, %v1600, %v1601
        %v1603 = vrot.slane %v1596, 5
        %v1604 = vsel %vm406, %v1601, %v1603
        %1605 = vrot.lane.b32.xlu0 %v1602, 124
        %v1606 = vpop.permute.xlu0 %1605
        %1607 = vrot.lane.b32.xlu0 %v1604, 124
        %v1608 = vpop.permute.xlu0 %1607
        %v1611 = vadd.f32 %v1590, %v1606
        %v1612 = vadd.f32 %v1591, %v1608
        %s1613 = sld [smem:[#allocation4 + $0x59]]
        %v1614 = vstv %s1613
        %v1615 = vmul.f32 %v243, %v1614
        %v1616 = vmul.f32 %v244, %v1614
        %v1617 = vmul.f32 %v245, %v1614
        %v1621 = vrot.slane %v1615, 5
        %v1622 = vrot.slane %v1616, 5
        %v1623 = vsel %vm406, %v1621, %v1622
        %v1624 = vrot.slane %v1617, 5
        %v1625 = vsel %vm406, %v1622, %v1624
        %1626 = vrot.lane.b32.xlu0 %v1623, 124
        %v1627 = vpop.permute.xlu0 %1626
        %1628 = vrot.lane.b32.xlu0 %v1625, 124
        %v1629 = vpop.permute.xlu0 %1628
        %v1632 = vadd.f32 %v1611, %v1627
        %v1633 = vadd.f32 %v1612, %v1629
        %s1634 = sld [smem:[#allocation4 + $0x2f]]
        %v1635 = vstv %s1634
        %v1636 = vmul.f32 %v240, %v1635
        %v1637 = vmul.f32 %v241, %v1635
        %v1638 = vmul.f32 %v242, %v1635
        %v1642 = vrot.slane %v1636, 6
        %v1643 = vrot.slane %v1637, 6
        %v1644 = vsel %vm441, %v1642, %v1643
        %v1645 = vrot.slane %v1638, 6
        %v1646 = vsel %vm441, %v1643, %v1645
        %1647 = vrot.lane.b32.xlu0 %v1644, 124
        %v1648 = vpop.permute.xlu0 %1647
        %1649 = vrot.lane.b32.xlu0 %v1646, 124
        %v1650 = vpop.permute.xlu0 %1649
        %v1653 = vadd.f32 %v1632, %v1648
        %v1654 = vadd.f32 %v1633, %v1650
        %s1655 = sld [smem:[#allocation4 + $0x60]]
        %v1656 = vstv %s1655
        %v1657 = vmul.f32 %v243, %v1656
        %v1658 = vmul.f32 %v244, %v1656
        %v1659 = vmul.f32 %v245, %v1656
        %v1663 = vrot.slane %v1657, 6
        %v1664 = vrot.slane %v1658, 6
        %v1665 = vsel %vm441, %v1663, %v1664
        %v1666 = vrot.slane %v1659, 6
        %v1667 = vsel %vm441, %v1664, %v1666
        %1668 = vrot.lane.b32.xlu0 %v1665, 124
        %v1669 = vpop.permute.xlu0 %1668
        %1670 = vrot.lane.b32.xlu0 %v1667, 124
        %v1671 = vpop.permute.xlu0 %1670
        %v1674 = vadd.f32 %v1653, %v1669
        %v1675 = vadd.f32 %v1654, %v1671
        %s1676 = sld [smem:[#allocation4 + $0x6]]
        %v1677 = vstv %s1676
        %v1678 = vmul.f32 %v240, %v1677
        %v1679 = vmul.f32 %v241, %v1677
        %1682 = vrot.lane.b32.xlu0 %v1678, 124
        %v1683 = vpop.permute.xlu0 %1682
        %1684 = vrot.lane.b32.xlu0 %v1679, 124
        %v1685 = vpop.permute.xlu0 %1684
        %v1688 = vadd.f32 %v898, %v1683
        %v1689 = vadd.f32 %v899, %v1685
        %s1690 = sld [smem:[#allocation4 + $0x37]]
        %v1691 = vstv %s1690
        %v1692 = vmul.f32 %v243, %v1691
        %v1693 = vmul.f32 %v244, %v1691
        %1696 = vrot.lane.b32.xlu0 %v1692, 124
        %v1697 = vpop.permute.xlu0 %1696
        %1698 = vrot.lane.b32.xlu0 %v1693, 124
        %v1699 = vpop.permute.xlu0 %1698
        %v1702 = vadd.f32 %v1688, %v1697
        %v1703 = vadd.f32 %v1689, %v1699
        %s1704 = sld [smem:[#allocation4 + $0xd]]
        %v1705 = vstv %s1704
        %v1706 = vmul.f32 %v240, %v1705
        %v1707 = vmul.f32 %v241, %v1705
        %v1708 = vmul.f32 %v242, %v1705
        %v1712 = vrot.slane %v1706, 1
        %v1713 = vrot.slane %v1707, 1
        %v1714 = vsel %vm266, %v1712, %v1713
        %v1715 = vrot.slane %v1708, 1
        %v1716 = vsel %vm266, %v1713, %v1715
        %1717 = vrot.lane.b32.xlu0 %v1714, 124
        %v1718 = vpop.permute.xlu0 %1717
        %1719 = vrot.lane.b32.xlu0 %v1716, 124
        %v1720 = vpop.permute.xlu0 %1719
        %v1723 = vadd.f32 %v1702, %v1718
        %v1724 = vadd.f32 %v1703, %v1720
        %s1725 = sld [smem:[#allocation4 + $0x3e]]
        %v1726 = vstv %s1725
        %v1727 = vmul.f32 %v243, %v1726
        %v1728 = vmul.f32 %v244, %v1726
        %v1729 = vmul.f32 %v245, %v1726
        %v1733 = vrot.slane %v1727, 1
        %v1734 = vrot.slane %v1728, 1
        %v1735 = vsel %vm266, %v1733, %v1734
        %v1736 = vrot.slane %v1729, 1
        %v1737 = vsel %vm266, %v1734, %v1736
        %1738 = vrot.lane.b32.xlu0 %v1735, 124
        %v1739 = vpop.permute.xlu0 %1738
        %1740 = vrot.lane.b32.xlu0 %v1737, 124
        %v1741 = vpop.permute.xlu0 %1740
        %v1744 = vadd.f32 %v1723, %v1739
        %v1745 = vadd.f32 %v1724, %v1741
        %s1746 = sld [smem:[#allocation4 + $0x14]]
        %v1747 = vstv %s1746
        %v1748 = vmul.f32 %v240, %v1747
        %v1749 = vmul.f32 %v241, %v1747
        %v1750 = vmul.f32 %v242, %v1747
        %v1754 = vrot.slane %v1748, 2
        %v1755 = vrot.slane %v1749, 2
        %v1756 = vsel %vm301, %v1754, %v1755
        %v1757 = vrot.slane %v1750, 2
        %v1758 = vsel %vm301, %v1755, %v1757
        %1759 = vrot.lane.b32.xlu0 %v1756, 124
        %v1760 = vpop.permute.xlu0 %1759
        %1761 = vrot.lane.b32.xlu0 %v1758, 124
        %v1762 = vpop.permute.xlu0 %1761
        %v1765 = vadd.f32 %v1744, %v1760
        %v1766 = vadd.f32 %v1745, %v1762
        %s1767 = sld [smem:[#allocation4 + $0x45]]
        %v1768 = vstv %s1767
        %v1769 = vmul.f32 %v243, %v1768
        %v1770 = vmul.f32 %v244, %v1768
        %v1771 = vmul.f32 %v245, %v1768
        %v1775 = vrot.slane %v1769, 2
        %v1776 = vrot.slane %v1770, 2
        %v1777 = vsel %vm301, %v1775, %v1776
        %v1778 = vrot.slane %v1771, 2
        %v1779 = vsel %vm301, %v1776, %v1778
        %1780 = vrot.lane.b32.xlu0 %v1777, 124
        %v1781 = vpop.permute.xlu0 %1780
        %1782 = vrot.lane.b32.xlu0 %v1779, 124
        %v1783 = vpop.permute.xlu0 %1782
        %v1786 = vadd.f32 %v1765, %v1781
        %v1787 = vadd.f32 %v1766, %v1783
        %s1788 = sld [smem:[#allocation4 + $0x1b]]
        %v1789 = vstv %s1788
        %v1790 = vmul.f32 %v240, %v1789
        %v1791 = vmul.f32 %v241, %v1789
        %v1792 = vmul.f32 %v242, %v1789
        %v1796 = vrot.slane %v1790, 3
        %v1797 = vrot.slane %v1791, 3
        %v1798 = vsel %vm336, %v1796, %v1797
        %v1799 = vrot.slane %v1792, 3
        %v1800 = vsel %vm336, %v1797, %v1799
        %1801 = vrot.lane.b32.xlu0 %v1798, 124
        %v1802 = vpop.permute.xlu0 %1801
        %1803 = vrot.lane.b32.xlu0 %v1800, 124
        %v1804 = vpop.permute.xlu0 %1803
        %v1807 = vadd.f32 %v1786, %v1802
        %v1808 = vadd.f32 %v1787, %v1804
        %s1809 = sld [smem:[#allocation4 + $0x4c]]
        %v1810 = vstv %s1809
        %v1811 = vmul.f32 %v243, %v1810
        %v1812 = vmul.f32 %v244, %v1810
        %v1813 = vmul.f32 %v245, %v1810
        %v1817 = vrot.slane %v1811, 3
        %v1818 = vrot.slane %v1812, 3
        %v1819 = vsel %vm336, %v1817, %v1818
        %v1820 = vrot.slane %v1813, 3
        %v1821 = vsel %vm336, %v1818, %v1820
        %1822 = vrot.lane.b32.xlu0 %v1819, 124
        %v1823 = vpop.permute.xlu0 %1822
        %1824 = vrot.lane.b32.xlu0 %v1821, 124
        %v1825 = vpop.permute.xlu0 %1824
        %v1828 = vadd.f32 %v1807, %v1823
        %v1829 = vadd.f32 %v1808, %v1825
        %s1830 = sld [smem:[#allocation4 + $0x22]]
        %v1831 = vstv %s1830
        %v1832 = vmul.f32 %v240, %v1831
        %v1833 = vmul.f32 %v241, %v1831
        %v1834 = vmul.f32 %v242, %v1831
        %v1838 = vrot.slane %v1832, 4
        %v1839 = vrot.slane %v1833, 4
        %v1840 = vsel %vm371, %v1838, %v1839
        %v1841 = vrot.slane %v1834, 4
        %v1842 = vsel %vm371, %v1839, %v1841
        %1843 = vrot.lane.b32.xlu0 %v1840, 124
        %v1844 = vpop.permute.xlu0 %1843
        %1845 = vrot.lane.b32.xlu0 %v1842, 124
        %v1846 = vpop.permute.xlu0 %1845
        %v1849 = vadd.f32 %v1828, %v1844
        %v1850 = vadd.f32 %v1829, %v1846
        %s1851 = sld [smem:[#allocation4 + $0x53]]
        %v1852 = vstv %s1851
        %v1853 = vmul.f32 %v243, %v1852
        %v1854 = vmul.f32 %v244, %v1852
        %v1855 = vmul.f32 %v245, %v1852
        %v1859 = vrot.slane %v1853, 4
        %v1860 = vrot.slane %v1854, 4
        %v1861 = vsel %vm371, %v1859, %v1860
        %v1862 = vrot.slane %v1855, 4
        %v1863 = vsel %vm371, %v1860, %v1862
        %1864 = vrot.lane.b32.xlu0 %v1861, 124
        %v1865 = vpop.permute.xlu0 %1864
        %1866 = vrot.lane.b32.xlu0 %v1863, 124
        %v1867 = vpop.permute.xlu0 %1866
        %v1870 = vadd.f32 %v1849, %v1865
        %v1871 = vadd.f32 %v1850, %v1867
        %s1872 = sld [smem:[#allocation4 + $0x29]]
        %v1873 = vstv %s1872
        %v1874 = vmul.f32 %v240, %v1873
        %v1875 = vmul.f32 %v241, %v1873
        %v1876 = vmul.f32 %v242, %v1873
        %v1880 = vrot.slane %v1874, 5
        %v1881 = vrot.slane %v1875, 5
        %v1882 = vsel %vm406, %v1880, %v1881
        %v1883 = vrot.slane %v1876, 5
        %v1884 = vsel %vm406, %v1881, %v1883
        %1885 = vrot.lane.b32.xlu0 %v1882, 124
        %v1886 = vpop.permute.xlu0 %1885
        %1887 = vrot.lane.b32.xlu0 %v1884, 124
        %v1888 = vpop.permute.xlu0 %1887
        %v1891 = vadd.f32 %v1870, %v1886
        %v1892 = vadd.f32 %v1871, %v1888
        %s1893 = sld [smem:[#allocation4 + $0x5a]]
        %v1894 = vstv %s1893
        %v1895 = vmul.f32 %v243, %v1894
        %v1896 = vmul.f32 %v244, %v1894
        %v1897 = vmul.f32 %v245, %v1894
        %v1901 = vrot.slane %v1895, 5
        %v1902 = vrot.slane %v1896, 5
        %v1903 = vsel %vm406, %v1901, %v1902
        %v1904 = vrot.slane %v1897, 5
        %v1905 = vsel %vm406, %v1902, %v1904
        %1906 = vrot.lane.b32.xlu0 %v1903, 124
        %v1907 = vpop.permute.xlu0 %1906
        %1908 = vrot.lane.b32.xlu0 %v1905, 124
        %v1909 = vpop.permute.xlu0 %1908
        %v1912 = vadd.f32 %v1891, %v1907
        %v1913 = vadd.f32 %v1892, %v1909
        %s1914 = sld [smem:[#allocation4 + $0x30]]
        %v1915 = vstv %s1914
        %v1916 = vmul.f32 %v240, %v1915
        %v1917 = vmul.f32 %v241, %v1915
        %v1918 = vmul.f32 %v242, %v1915
        %v1922 = vrot.slane %v1916, 6
        %v1923 = vrot.slane %v1917, 6
        %v1924 = vsel %vm441, %v1922, %v1923
        %v1925 = vrot.slane %v1918, 6
        %v1926 = vsel %vm441, %v1923, %v1925
        %1927 = vrot.lane.b32.xlu0 %v1924, 124
        %v1928 = vpop.permute.xlu0 %1927
        %1929 = vrot.lane.b32.xlu0 %v1926, 124
        %v1930 = vpop.permute.xlu0 %1929
        %v1933 = vadd.f32 %v1912, %v1928
        %v1934 = vadd.f32 %v1913, %v1930
        %s1935 = sld [smem:[#allocation4 + $0x61]]
        %v1936 = vstv %s1935
        %v1937 = vmul.f32 %v243, %v1936
        %v1938 = vmul.f32 %v244, %v1936
        %v1939 = vmul.f32 %v245, %v1936
        %v1943 = vrot.slane %v1937, 6
        %v1944 = vrot.slane %v1938, 6
        %v1945 = vsel %vm441, %v1943, %v1944
        %v1946 = vrot.slane %v1939, 6
        %v1947 = vsel %vm441, %v1944, %v1946
        %1948 = vrot.lane.b32.xlu0 %v1945, 124
        %v1949 = vpop.permute.xlu0 %1948
        %1950 = vrot.lane.b32.xlu0 %v1947, 124
        %v1951 = vpop.permute.xlu0 %1950
        %v1954 = vadd.f32 %v1933, %v1949
        %v1955 = vadd.f32 %v1934, %v1951
        %1958 = vrot.lane.b32.xlu0 %v1674, 127
        %v1959 = vpop.permute.xlu0 %1958
        %1960 = vrot.lane.b32.xlu0 %v1675, 127
        %v1961 = vpop.permute.xlu0 %1960
        %v1964 = vadd.f32 %v1394, %v1959
        %v1965 = vadd.f32 %v1395, %v1961
        %1968 = vrot.lane.b32.xlu0 %v1114, 127
        %v1969 = vpop.permute.xlu0 %1968
        %1970 = vrot.lane.b32.xlu0 %v1115, 127
        %v1971 = vpop.permute.xlu0 %1970
        %v1974 = vadd.f32 %v1954, %v1969
        %v1975 = vadd.f32 %v1955, %v1971
        %1978 = vrot.lane.b32.xlu0 %v1974, 126
        %v1979 = vpop.permute.xlu0 %1978
        %1980 = vrot.lane.b32.xlu0 %v1975, 126
        %v1981 = vpop.permute.xlu0 %1980
        %v1984 = vadd.f32 %v1964, %v1979
        %v1985 = vadd.f32 %v1965, %v1981
        %v1986 = vstv %s186
        %v1987 = vadd.f32 %v1984, %v1986
        %v1988 = vadd.f32 %v1985, %v1986
        %v1989 = vxor.u32 %v1987, 2147483648
        %v1990 = vxor.u32 %v1988, 2147483648
        %v1991 = vmul.f32 %v1989, 1.442695
        %v1992 = vpow.pop %v1991
        %v1993 = vmul.f32 %v1990, 1.442695
        %v1994 = vpow.pop %v1993
        %v1995 = vadd.f32 %v1992, 1.0
        %v1996 = vadd.f32 %v1994, 1.0
        %v1997 = vrcp.pop %v1995
        %v1998 = vmul.f32 %v1995, %v1997
        %v1999 = vsub.f32 1.0, %v1998
        %v2000 = vmul.f32 %v1997, %v1999
        %v2001 = vadd.f32 %v1997, %v2000
        %vm2002 = vweird.f32 %v1995
        %vm2003 = vweird.f32 %v1997
        %vm2004 = vmor %vm2002, %vm2003
        %v2005 = vsel %vm2004, %v1997, %v2001
        %v2006 = vand.u32 2147483647, %v1995
        %vm2007 = vcmp.eq.f32.partialorder %v2006, 8.507059e+37
        %v2008 = vand.u32 %v1995, 2147483648
        %v2009 = vor.u32 1.1754944e-38, %v2008
        %v2010 = vsel %vm2007, %v2009, %v2005
        %v2011 = vmul.f32 1.0, %v2010
        %v2012 = vrcp.pop %v1996
        %v2013 = vmul.f32 %v1996, %v2012
        %v2014 = vsub.f32 1.0, %v2013
        %v2015 = vmul.f32 %v2012, %v2014
        %v2016 = vadd.f32 %v2012, %v2015
        %vm2017 = vweird.f32 %v1996
        %vm2018 = vweird.f32 %v2012
        %vm2019 = vmor %vm2017, %vm2018
        %v2020 = vsel %vm2019, %v2012, %v2016
        %v2021 = vand.u32 2147483647, %v1996
        %vm2022 = vcmp.eq.f32.partialorder %v2021, 8.507059e+37
        %v2023 = vand.u32 %v1996, 2147483648
        %v2024 = vor.u32 1.1754944e-38, %v2023
        %v2025 = vsel %vm2022, %v2024, %v2020
        %v2026 = vmul.f32 1.0, %v2025
        %vm2027 = vcmask 130048
        %2028 = vst.msk [vmem:[%s185] sm:$0xff] %vm2027, %v2011
        %2029 = vst.msk [vmem:[%s185 + $0x8] sm:$0xff] %vm2027, %v2026
        %v2030 = vld [vmem:[%s159] sm:$0xff]
        %v2031 = vld [vmem:[%s159 + $0x8] sm:$0xff]
        %v2032 = vmul.f32 %v2030, %v2011
        %v2033 = vmul.f32 %v2031, %v2026
        %2034 = vst.msk [vmem:[%s178] sm:$0xff] %vm2027, %v2032
        %2035 = vst.msk [vmem:[%s178 + $0x8] sm:$0xff] %vm2027, %v2033
        %v2036 = vld [vmem:[%s197] sm:$0xff]
        %v2037 = vld [vmem:[%s197 + $0x8] sm:$0xff]
        %v2038 = vmul.f32 %v2036, %v2011
        %v2039 = vmul.f32 %v2037, %v2026
        %s2040 = scalar_lea.vmem %s178, 16 [#allocation9]
        %2041 = vst.msk [vmem:[%s2040] sm:$0xff] %vm2027, %v2038
        %2042 = vst.msk [vmem:[%s2040 + $0x8] sm:$0xff] %vm2027, %v2039
        %v2043 = vld [vmem:[%s204] sm:$0xff]
        %v2044 = vld [vmem:[%s204 + $0x8] sm:$0xff]
        %v2045 = vmul.f32 %v2043, %v2011
        %v2046 = vmul.f32 %v2044, %v2026
        %s2047 = scalar_lea.vmem %s178, 32 [#allocation9]
        %2048 = vst.msk [vmem:[%s2047] sm:$0xff] %vm2027, %v2045
        %2049 = vst.msk [vmem:[%s2047 + $0x8] sm:$0xff] %vm2027, %v2046
        %v2050 = vld [vmem:[%s211] sm:$0xff]
        %v2051 = vld [vmem:[%s211 + $0x8] sm:$0xff]
        %v2052 = vmul.f32 %v2050, %v2011
        %v2053 = vmul.f32 %v2051, %v2026
        %s2054 = scalar_lea.vmem %s178, 48 [#allocation9]
        %2055 = vst.msk [vmem:[%s2054] sm:$0xff] %vm2027, %v2052
        %2056 = vst.msk [vmem:[%s2054 + $0x8] sm:$0xff] %vm2027, %v2053
        %s2057 = sand.u32 %s68, 1
        %s2058 = scalar_lea.sflag [#allocation8], %s2057
        %s2059 = sand.u32 %s68, 1
        %s2060 = smul.addr %s2059, 64
        %s2061 = scalar_lea.vmem [#allocation9], %s2060
        %s2062 = sand.u32 %s94, 1
        %s2063 = scalar_lea.sflag [#allocation11], %s2062
        %s2064 = sand.u32 %s94, 1
        %s2065 = smul.addr %s2064, 16
        %s2066 = scalar_lea.vmem [#allocation10], %s2065
        // Predicated region
        $region29: #{spatial_gate.1} parent=23 // pred_check
          %p2067 = pneg %p78
        $region30: #{spatial_gate.1} parent=23 // pred_check_branch
          %2069 = sbr.rel (%p2067) target = $region32
        $region31: #{spatial_gate.1} parent=23 // pred_region
          %2071 = vsyncadd %s2058, 0
          %s2072 = smul.addr %s34, 8
          %s2073 = smul.addr %s2072, 8
          %s2074 = scalar_lea.hbm %s3, %s2073
          %s2075 = sshll.u32 %s2061, 4
          %s2076 = int_to_ptr.vmem [resolvable:$true] %s2075
          %s2077 = sshll.u32 %s2074, 4
          %s2078 = int_to_ptr.hbm [resolvable:$true] %s2077
          %2083 = dma.vmem_to_hbm [thread:$0]  %s2076, 1024, %s2078, %s2058, 128, 128, 8
        $region32: #{spatial_gate.1} parent=23 // pred_fallthru
          _
        // Predicated region
        $region33: #{spatial_gate.1} parent=23 // pred_check
          %p2084 = pneg %p104
        $region34: #{spatial_gate.1} parent=23 // pred_check_branch
          %2086 = sbr.rel (%p2084) target = $region36
        $region35: #{spatial_gate.1} parent=23 // pred_region
          %2088 = vsyncadd %s2063, 0
          %s2089 = smul.addr %s34, 2
          %s2090 = smul.addr %s2089, 8
          %s2091 = scalar_lea.hbm %s4, %s2090
          %s2092 = sshll.u32 %s2066, 4
          %s2093 = int_to_ptr.vmem [resolvable:$true] %s2092
          %s2094 = sshll.u32 %s2091, 4
          %s2095 = int_to_ptr.hbm [resolvable:$true] %s2094
          %2100 = dma.vmem_to_hbm [thread:$0]  %s2093, 256, %s2095, %s2063, 128, 128, 8
        $region36: #{spatial_gate.1} parent=23 // pred_fallthru
          _
      $region24: #{spatial_gate.1} parent=5 // pred_fallthru
        _
      %p2101 = scmp.le.s32.totalorder 2, %s29
      // Predicated region
      $region37: #{spatial_gate.1} parent=5 // pred_check
        %p2102 = pneg %p2101
      $region38: #{spatial_gate.1} parent=5 // pred_check_branch
        %2104 = sbr.rel (%p2102) target = $region40
      $region39: #{spatial_gate.1} parent=5 // pred_region
        %s2105 = ssub.s32 %s29, 2
        // Predicated region
        $region41: #{spatial_gate.1} parent=39 // pred_check
          %p2106 = pneg %p84
        $region42: #{spatial_gate.1} parent=39 // pred_check_branch
          %2108 = sbr.rel (%p2106) target = $region44
        $region43: #{spatial_gate.1} parent=39 // pred_region
          %s2109 = sand.u32 %s69, 1
          %s2110 = scalar_lea.sflag [#allocation8], %s2109
          %s2111 = sand.u32 %s69, 1
          %s2112 = smul.addr %s2111, 64
          %s2113 = scalar_lea.vmem [#allocation9], %s2112
          %2115 = dma.done %s2110, 1024
        $region44: #{spatial_gate.1} parent=39 // pred_fallthru
          _
        // Predicated region
        $region45: #{spatial_gate.1} parent=39 // pred_check
          %p2116 = pneg %p110
        $region46: #{spatial_gate.1} parent=39 // pred_check_branch
          %2118 = sbr.rel (%p2116) target = $region48
        $region47: #{spatial_gate.1} parent=39 // pred_region
          %s2119 = sand.u32 %s95, 1
          %s2120 = scalar_lea.sflag [#allocation11], %s2119
          %s2121 = sand.u32 %s95, 1
          %s2122 = smul.addr %s2121, 16
          %s2123 = scalar_lea.vmem [#allocation10], %s2122
          %2125 = dma.done %s2120, 256
        $region48: #{spatial_gate.1} parent=39 // pred_fallthru
          _
      $region40: #{spatial_gate.1} parent=5 // pred_fallthru
        _
    $region6: #{spatial_gate.1} parent=1 // loop_footer
      %s33 = sadd.s32 1, %s29
    $region7: #{spatial_gate.1} parent=1 // loop_footer_branch
      %28 = sbr.rel target = $region3
    $region8: #{spatial_gate.1} parent=1 // loop_exit
      _
    %2126 = vsyncpa [#allocation7], 1
    %s2127 = scalar_lea.sflag [#allocation7], 1
    %2128 = vsyncpa %s2127, 1
    %2129 = vsyncpa [#allocation8], 1
    %s2130 = scalar_lea.sflag [#allocation8], 1
    %2131 = vsyncpa %s2130, 1
    %2132 = vsyncpa [#allocation11], 1
    %s2133 = scalar_lea.sflag [#allocation11], 1
    %2134 = vsyncpa %s2133, 1

</llo_original>
